<compile_context>
chip_gen: v7x
topology: tpu7x:2x2x1
jax: 0.10.0
libtpu: 0.0.40
codegen_flags: <defaults>
</compile_context>

<pallas_src>
import functools

import jax
import jax.numpy as jnp
from jax import lax
from jax.experimental import pallas as pl
from jax.experimental.pallas import tpu as pltpu


# ----------------------------------------------------------------------------
# Graph preprocessing: dense edge-count matrix + f32 inverse in-degree.
# ----------------------------------------------------------------------------
def build_adjacency(edge_index, n_nodes):
    """Returns (counts[N,N] bf16, inv_deg[N,1] f32).

    counts[i, j] = multiplicity of edge j->i (small integers: exact in bf16).
    Mean aggregation is then (counts @ X) * inv_deg with 1/deg kept in f32, so
    no normalization precision is lost to bf16 (zero in-degree -> zero agg,
    matching PyG).  Built once per static graph and reused across calls.
    """
    src, dst = edge_index[0], edge_index[1]
    counts = jnp.zeros((n_nodes, n_nodes), jnp.float32).at[dst, src].add(1.0)
    deg = jnp.sum(counts, axis=1, keepdims=True)
    inv_deg = jnp.where(deg > 0.0, 1.0 / jnp.maximum(deg, 1.0), 0.0)
    return counts.astype(jnp.bfloat16), inv_deg.astype(jnp.float32)


# ----------------------------------------------------------------------------
# Fused kernel: conv1 + ReLU + conv2 + ReLU + MLP + LayerNorm + head
# ----------------------------------------------------------------------------
def _fused_forward(adj_counts, inv_deg, p1, r1, mx,
                   w2l, b2l, w2r, wmh1, wmh2, bm1, gamma, beta,
                   wm2_t_pad, bm2_pad):
    B, N, H = p1.shape
    OUTP = wm2_t_pad.shape[0]
    f32, bf16 = jnp.float32, jnp.bfloat16

    def kernel(a_ref, invd_ref, p1_ref, r1_ref, mx_ref,
               w2l_ref, b2l_ref, w2r_ref, wmh1_ref, wmh2_ref, bm1_ref,
               gamma_ref, beta_ref, wm2t_ref, bm2_ref, out_ref):
        a = a_ref[...]                       # (N, N) bf16 edge counts
        invd = invd_ref[...]                 # (N, 1) f32  1/in-degree

        # ---- SAGEConv1: projections precomputed, aggregation on the MXU ----
        agg1 = jnp.dot(a, p1_ref[...], preferred_element_type=f32) * invd
        h1 = jnp.maximum(agg1 + r1_ref[...], 0.0).astype(bf16)

        # ---- SAGEConv2 ----
        agg2 = (jnp.dot(a, h1, preferred_element_type=f32) * invd).astype(bf16)
        x2 = (jnp.dot(agg2, w2l_ref[...], preferred_element_type=f32)
              + b2l_ref[...]
              + jnp.dot(h1, w2r_ref[...], preferred_element_type=f32))
        h2 = jnp.maximum(x2, 0.0).astype(bf16)

        # ---- MLP Linear1 over concat([x0, h1, h2]) as split matmuls ----
        m1 = (mx_ref[...]
              + jnp.dot(h1, wmh1_ref[...], preferred_element_type=f32)
              + jnp.dot(h2, wmh2_ref[...], preferred_element_type=f32)
              + bm1_ref[...])
        m1 = jnp.maximum(m1, 0.0)

        # ---- LayerNorm (f32, eps=1e-5, torch default) ----
        mean = jnp.mean(m1, axis=-1, keepdims=True)
        c = m1 - mean
        var = jnp.mean(c * c, axis=-1, keepdims=True)
        ln = (c * lax.rsqrt(var + 1e-5) * gamma_ref[...] + beta_ref[...]).astype(bf16)

        # ---- Head, computed transposed: (OUTP, N) so N is lane-dense ----
        out_t = lax.dot_general(wm2t_ref[...], ln,
                                dimension_numbers=(((1,), (1,)), ((), ())),
                                preferred_element_type=f32)
        out_ref[...] = out_t + bm2_ref[...]

    row = lambda b: (b, 0, 0)
    const = lambda b: (0, 0)

    flops = B * (4 * N * N * H + 8 * N * H * H + 2 * N * H * OUTP)
    bytes_accessed = int(adj_counts.nbytes + inv_deg.nbytes + p1.nbytes
                         + r1.nbytes + mx.nbytes
                         + w2l.nbytes + w2r.nbytes + wmh1.nbytes + wmh2.nbytes
                         + wm2_t_pad.nbytes + b2l.nbytes + bm1.nbytes
                         + gamma.nbytes + beta.nbytes + bm2_pad.nbytes
                         + B * OUTP * N * 4)

    # Per-grid-step footprint (double-buffered batched operands) + resident
    # weights + headroom, clamped to a budget safe on v5e/v6e (128 MiB) and
    # v7x (64 MiB physical, 32 MiB scoped default).
    per_step = N * N * 2 + N * 4 + N * H * (2 + 4 + 4) + OUTP * N * 4
    consts = 4 * H * H * 2 + OUTP * H * 2 + 6 * H * 4 + OUTP * 4
    vmem_limit = int(min(max(4 * per_step + consts + (4 << 20), 16 << 20), 32 << 20))

    return pl.pallas_call(
        kernel,
        out_shape=jax.ShapeDtypeStruct((B, OUTP, N), jnp.float32),
        grid=(B,),
        in_specs=[
            pl.BlockSpec((None, N, N), row),   # adjacency edge counts (bf16)
            pl.BlockSpec((None, N, 1), row),   # 1/deg (f32)
            pl.BlockSpec((None, N, H), row),   # x0 @ W1l            (bf16)
            pl.BlockSpec((None, N, H), row),   # x0 @ W1r + b1l      (f32)
            pl.BlockSpec((None, N, H), row),   # x0 @ Wm1[x0]        (f32)
            pl.BlockSpec((H, H), const),       # W2_l
            pl.BlockSpec((1, H), const),       # b2_l
            pl.BlockSpec((H, H), const),       # W2_r
            pl.BlockSpec((H, H), const),       # Wm1[h1]
            pl.BlockSpec((H, H), const),       # Wm1[h2]
            pl.BlockSpec((1, H), const),       # bm1
            pl.BlockSpec((1, H), const),       # gamma
            pl.BlockSpec((1, H), const),       # beta
            pl.BlockSpec((OUTP, H), const),    # Wm2^T (rows padded to 8)
            pl.BlockSpec((OUTP, 1), const),    # bm2 (padded)
        ],
        out_specs=pl.BlockSpec((None, OUTP, N), row),
        compiler_params=pltpu.CompilerParams(
            dimension_semantics=("parallel",),
            vmem_limit_bytes=vmem_limit),
        cost_estimate=pl.CostEstimate(flops=flops, transcendentals=B * N,
                                      bytes_accessed=bytes_accessed),
    )(adj_counts, inv_deg, p1, r1, mx,
      w2l, b2l, w2r, wmh1, wmh2, bm1, gamma, beta, wm2_t_pad, bm2_pad)


# ----------------------------------------------------------------------------
# Wrapper: batched forward for B graphs in one pallas_call
# ----------------------------------------------------------------------------
@functools.partial(jax.jit, static_argnames=("n_out",))
def sage_graph_conv_net(x0, adj_counts, inv_deg, params, *, n_out):
    """x0: [B,N,n_in] f32; adj_counts: [B,N,N] bf16; inv_deg: [B,N,1] f32.
    Returns [B, N, 2*n_out] f32."""
    B, N, _ = x0.shape
    H = params["w1l"].shape[-1]
    bf16 = jnp.bfloat16
    OUTW = 2 * n_out
    OUTP = max(8, -(-OUTW // 8) * 8)     # pad head rows to the 8-sublane granularity

    # Whole-graph-in-VMEM fusion: A read from HBM once, h1/h2 stay in VMEM.
    assert 2 * N * N * 2 + 12 * N * H * 4 < (28 << 20), \
        "graph too large for the fused whole-graph-in-VMEM path"

    # Prologue (linearity of mean aggregation): fold the lane-sparse n_in-wide
    # projections outside the kernel, so only H-wide operands enter the kernel.
    p1 = jnp.einsum("bnf,fh->bnh", x0, params["w1l"]).astype(bf16)     # -> A @ p1
    r1 = jnp.einsum("bnf,fh->bnh", x0, params["w1r"]) + params["b1l"]  # root term
    mx = jnp.einsum("bnf,fh->bnh", x0, params["wm1_x0"])               # MLP x0 part

    wm2_t_pad = jnp.zeros((OUTP, H), bf16).at[:OUTW, :].set(
        params["wm2"].T.astype(bf16))
    bm2_pad = jnp.zeros((OUTP, 1), jnp.float32).at[:OUTW, 0].set(
        params["bm2"].reshape(-1))

    out_t = _fused_forward(
        adj_counts, inv_deg, p1, r1, mx,
        params["w2l"].astype(bf16), params["b2l"], params["w2r"].astype(bf16),
        params["wm1_h1"].astype(bf16), params["wm1_h2"].astype(bf16),
        params["bm1"], params["gamma"], params["beta"], wm2_t_pad, bm2_pad)

    # [B, OUTP, N] -> [B, N, 2*n_out]
    return jnp.swapaxes(out_t[:, :OUTW, :], -1, -2)


# ----------------------------------------------------------------------------
# Params & pure-JAX reference (mirrors kernel precision: bf16 operands, f32 acc)
# ----------------------------------------------------------------------------
def init_params(key, n_in, n_hidden, n_out):
    ks = jax.random.split(key, 12)

    def w(k, shape, fan_in):
        return jax.random.normal(k, shape, jnp.float32) / jnp.sqrt(jnp.float32(fan_in))

    H = n_hidden
    return {
        # SAGEConv1: lin_l (aggregated, bias) + lin_r (root, no bias)
        "w1l": w(ks[0], (n_in, H), n_in),
        "b1l": 0.01 * jax.random.normal(ks[10], (1, H), jnp.float32),
        "w1r": w(ks[1], (n_in, H), n_in),
        # SAGEConv2
        "w2l": w(ks[2], (H, H), H),
        "b2l": 0.01 * jax.random.normal(ks[11], (1, H), jnp.float32),
        "w2r": w(ks[3], (H, H), H),
        # MLP Linear1 over concat(n_in + 2H), split into three blocks
        "wm1_x0": w(ks[4], (n_in, H), n_in + 2 * H),
        "wm1_h1": w(ks[5], (H, H), n_in + 2 * H),
        "wm1_h2": w(ks[6], (H, H), n_in + 2 * H),
        "bm1": 0.01 * jax.random.normal(ks[7], (1, H), jnp.float32),
        # LayerNorm affine
        "gamma": jnp.ones((1, H), jnp.float32),
        "beta": jnp.zeros((1, H), jnp.float32),
        # MLP Linear2
        "wm2": w(ks[8], (H, 2 * n_out), H),
        "bm2": 0.01 * jax.random.normal(ks[9], (1, 2 * n_out), jnp.float32),
    }


def reference_forward(x0, adj_counts, inv_deg, params):
    bf16, f32 = jnp.bfloat16, jnp.float32

    def mm(a, w_):
        return jnp.einsum("bnh,hk->bnk", a.astype(bf16), w_.astype(bf16),
                          preferred_element_type=f32)

    def agg(x):
        return jnp.einsum("bnm,bmh->bnh", adj_counts.astype(bf16), x.astype(bf16),
                          preferred_element_type=f32) * inv_deg

    p1 = jnp.einsum("bnf,fh->bnh", x0, params["w1l"]).astype(bf16)
    r1 = jnp.einsum("bnf,fh->bnh", x0, params["w1r"]) + params["b1l"]
    mx = jnp.einsum("bnf,fh->bnh", x0, params["wm1_x0"])

    h1 = jnp.maximum(agg(p1) + r1, 0.0).astype(bf16)

    x2 = mm(agg(h1), params["w2l"]) + params["b2l"] + mm(h1, params["w2r"])
    h2 = jnp.maximum(x2, 0.0).astype(bf16)

    m1 = jnp.maximum(mx + mm(h1, params["wm1_h1"]) + mm(h2, params["wm1_h2"])
                     + params["bm1"], 0.0)
    mean = jnp.mean(m1, axis=-1, keepdims=True)
    c = m1 - mean
    var = jnp.mean(c * c, axis=-1, keepdims=True)
    ln = c * lax.rsqrt(var + 1e-5) * params["gamma"] + params["beta"]
    return mm(ln, params["wm2"]) + params["bm2"]


# ----------------------------------------------------------------------------
if __name__ == "__main__":
    n_in, n_hidden, n_out = 3, 128, 1
    B, N = 2, 256                      # 2 graphs in one call; grid=(B,) "parallel"

    key = jax.random.PRNGKey(0)
    k_x, k_e, k_p = jax.random.split(key, 3)

    x0 = jax.random.normal(k_x, (B, N, n_in), jnp.float32)

    # Deterministic graphs: a ring plus random directed extra edges per graph.
    counts_list, invd_list = [], []
    for b in range(B):
        kb = jax.random.fold_in(k_e, b)
        ring_src = jnp.arange(N, dtype=jnp.int32)
        ring_dst = (ring_src + 1) % N
        extra_src = jax.random.randint(jax.random.fold_in(kb, 0), (4 * N,), 0, N, jnp.int32)
        extra_dst = jax.random.randint(jax.random.fold_in(kb, 1), (4 * N,), 0, N, jnp.int32)
        edge_index = jnp.stack([jnp.concatenate([ring_src, extra_src]),
                                jnp.concatenate([ring_dst, extra_dst])], axis=0)
        c, d = build_adjacency(edge_index, N)
        counts_list.append(c)
        invd_list.append(d)
    adj_counts = jnp.stack(counts_list, axis=0)     # [B, N, N] bf16 edge counts
    inv_deg = jnp.stack(invd_list, axis=0)          # [B, N, 1] f32

    params = init_params(k_p, n_in, n_hidden, n_out)

    out = sage_graph_conv_net(x0, adj_counts, inv_deg, params, n_out=n_out)
    out = jax.block_until_ready(out)

    assert out.shape == (B, N, 2 * n_out), out.shape
    assert bool(jnp.all(jnp.isfinite(out)))

    ref = reference_forward(x0, adj_counts, inv_deg, params)
    err = float(jnp.max(jnp.abs(out - ref)))
    assert err < 5e-2, f"kernel vs reference max abs err = {err}"

    print("KERNEL_OK")
</pallas_src>

<mosaic_0001>
module attributes {stable_mosaic.version = 11 : i64} {
  func.func @kernel(%arg0: i32, %arg1: memref<1x256x256xbf16, #tpu.memory_space<vmem>>, %arg2: memref<1x256x1xf32, #tpu.memory_space<vmem>>, %arg3: memref<1x256x128xbf16, #tpu.memory_space<vmem>>, %arg4: memref<1x256x128xf32, #tpu.memory_space<vmem>>, %arg5: memref<1x256x128xf32, #tpu.memory_space<vmem>>, %arg6: memref<128x128xbf16, #tpu.memory_space<vmem>>, %arg7: memref<1x128xf32, #tpu.memory_space<vmem>>, %arg8: memref<128x128xbf16, #tpu.memory_space<vmem>>, %arg9: memref<128x128xbf16, #tpu.memory_space<vmem>>, %arg10: memref<128x128xbf16, #tpu.memory_space<vmem>>, %arg11: memref<1x128xf32, #tpu.memory_space<vmem>>, %arg12: memref<1x128xf32, #tpu.memory_space<vmem>>, %arg13: memref<1x128xf32, #tpu.memory_space<vmem>>, %arg14: memref<8x128xbf16, #tpu.memory_space<vmem>>, %arg15: memref<8x1xf32, #tpu.memory_space<vmem>>, %arg16: memref<1x8x256xf32, #tpu.memory_space<vmem>>) attributes {dimension_semantics = [#tpu.dimension_semantics<parallel>], iteration_bounds = array<i64: 2>, scalar_prefetch = 0 : i64, scratch_operands = 0 : i64, tpu.core_type = #tpu.core_type<tc>, window_params = [{transform_indices = @transform_0, window_bounds = array<i64: 1, 256, 256>}, {transform_indices = @transform_1, window_bounds = array<i64: 1, 256, 1>}, {transform_indices = @transform_2, window_bounds = array<i64: 1, 256, 128>}, {transform_indices = @transform_3, window_bounds = array<i64: 1, 256, 128>}, {transform_indices = @transform_4, window_bounds = array<i64: 1, 256, 128>}, {pipeline_mode = #tpu.pipeline_mode<synchronous>, transform_indices = @transform_5, window_bounds = array<i64: 128, 128>}, {pipeline_mode = #tpu.pipeline_mode<synchronous>, transform_indices = @transform_6, window_bounds = array<i64: 1, 128>}, {pipeline_mode = #tpu.pipeline_mode<synchronous>, transform_indices = @transform_7, window_bounds = array<i64: 128, 128>}, {pipeline_mode = #tpu.pipeline_mode<synchronous>, transform_indices = @transform_8, window_bounds = array<i64: 128, 128>}, {pipeline_mode = #tpu.pipeline_mode<synchronous>, transform_indices = @transform_9, window_bounds = array<i64: 128, 128>}, {pipeline_mode = #tpu.pipeline_mode<synchronous>, transform_indices = @transform_10, window_bounds = array<i64: 1, 128>}, {pipeline_mode = #tpu.pipeline_mode<synchronous>, transform_indices = @transform_11, window_bounds = array<i64: 1, 128>}, {pipeline_mode = #tpu.pipeline_mode<synchronous>, transform_indices = @transform_12, window_bounds = array<i64: 1, 128>}, {pipeline_mode = #tpu.pipeline_mode<synchronous>, transform_indices = @transform_13, window_bounds = array<i64: 8, 128>}, {pipeline_mode = #tpu.pipeline_mode<synchronous>, transform_indices = @transform_14, window_bounds = array<i64: 8, 1>}, {transform_indices = @transform_15, window_bounds = array<i64: 1, 8, 256>}]} {
    %c0 = arith.constant 0 : index
    %c0_0 = arith.constant 0 : index
    %c0_1 = arith.constant 0 : index
    %0 = vector.load %arg1[%c0, %c0_0, %c0_1] : memref<1x256x256xbf16, #tpu.memory_space<vmem>>, vector<1x256x256xbf16>
    %1 = vector.shape_cast %0 : vector<1x256x256xbf16> to vector<256x256xbf16>
    %c0_2 = arith.constant 0 : index
    %c0_3 = arith.constant 0 : index
    %c0_4 = arith.constant 0 : index
    %2 = vector.load %arg2[%c0_2, %c0_3, %c0_4] : memref<1x256x1xf32, #tpu.memory_space<vmem>>, vector<1x256x1xf32>
    %3 = vector.shape_cast %2 : vector<1x256x1xf32> to vector<256x1xf32>
    %c0_5 = arith.constant 0 : index
    %c0_6 = arith.constant 0 : index
    %c0_7 = arith.constant 0 : index
    %4 = vector.load %arg3[%c0_5, %c0_6, %c0_7] : memref<1x256x128xbf16, #tpu.memory_space<vmem>>, vector<1x256x128xbf16>
    %5 = vector.shape_cast %4 : vector<1x256x128xbf16> to vector<256x128xbf16>
    %cst = arith.constant dense<0.000000e+00> : vector<256x128xf32>
    %6 = tpu.matmul %1, %5, %cst {dimension_numbers = #tpu.dot_dimension_numbers<[1], [0], [0], [1], [0, 0, 1, 1], [], []>} : vector<256x256xbf16>, vector<256x128xbf16>, vector<256x128xf32> -> vector<256x128xf32>
    %7 = vector.broadcast %3 : vector<256x1xf32> to vector<256x128xf32>
    %8 = arith.mulf %6, %7 : vector<256x128xf32>
    %c0_8 = arith.constant 0 : index
    %c0_9 = arith.constant 0 : index
    %c0_10 = arith.constant 0 : index
    %9 = vector.load %arg4[%c0_8, %c0_9, %c0_10] : memref<1x256x128xf32, #tpu.memory_space<vmem>>, vector<1x256x128xf32>
    %10 = vector.shape_cast %9 : vector<1x256x128xf32> to vector<256x128xf32>
    %11 = arith.addf %8, %10 : vector<256x128xf32>
    %cst_11 = arith.constant 0.000000e+00 : f32
    %12 = vector.broadcast %cst_11 : f32 to vector<256x128xf32>
    %13 = arith.maximumf %11, %12 : vector<256x128xf32>
    %14 = arith.truncf %13 : vector<256x128xf32> to vector<256x128xbf16>
    %cst_12 = arith.constant dense<0.000000e+00> : vector<256x128xf32>
    %15 = tpu.matmul %1, %14, %cst_12 {dimension_numbers = #tpu.dot_dimension_numbers<[1], [0], [0], [1], [0, 0, 1, 1], [], []>} : vector<256x256xbf16>, vector<256x128xbf16>, vector<256x128xf32> -> vector<256x128xf32>
    %16 = vector.broadcast %3 : vector<256x1xf32> to vector<256x128xf32>
    %17 = arith.mulf %15, %16 : vector<256x128xf32>
    %18 = arith.truncf %17 : vector<256x128xf32> to vector<256x128xbf16>
    %c0_13 = arith.constant 0 : index
    %c0_14 = arith.constant 0 : index
    %19 = vector.load %arg6[%c0_13, %c0_14] : memref<128x128xbf16, #tpu.memory_space<vmem>>, vector<128x128xbf16>
    %cst_15 = arith.constant dense<0.000000e+00> : vector<256x128xf32>
    %20 = tpu.matmul %18, %19, %cst_15 {dimension_numbers = #tpu.dot_dimension_numbers<[1], [0], [0], [1], [0, 0, 1, 1], [], []>} : vector<256x128xbf16>, vector<128x128xbf16>, vector<256x128xf32> -> vector<256x128xf32>
    %c0_16 = arith.constant 0 : index
    %c0_17 = arith.constant 0 : index
    %21 = vector.load %arg7[%c0_16, %c0_17] : memref<1x128xf32, #tpu.memory_space<vmem>>, vector<1x128xf32>
    %22 = vector.broadcast %21 : vector<1x128xf32> to vector<256x128xf32>
    %23 = arith.addf %20, %22 : vector<256x128xf32>
    %c0_18 = arith.constant 0 : index
    %c0_19 = arith.constant 0 : index
    %24 = vector.load %arg8[%c0_18, %c0_19] : memref<128x128xbf16, #tpu.memory_space<vmem>>, vector<128x128xbf16>
    %cst_20 = arith.constant dense<0.000000e+00> : vector<256x128xf32>
    %25 = tpu.matmul %14, %24, %cst_20 {dimension_numbers = #tpu.dot_dimension_numbers<[1], [0], [0], [1], [0, 0, 1, 1], [], []>} : vector<256x128xbf16>, vector<128x128xbf16>, vector<256x128xf32> -> vector<256x128xf32>
    %26 = arith.addf %23, %25 : vector<256x128xf32>
    %cst_21 = arith.constant 0.000000e+00 : f32
    %27 = vector.broadcast %cst_21 : f32 to vector<256x128xf32>
    %28 = arith.maximumf %26, %27 : vector<256x128xf32>
    %29 = arith.truncf %28 : vector<256x128xf32> to vector<256x128xbf16>
    %c0_22 = arith.constant 0 : index
    %c0_23 = arith.constant 0 : index
    %c0_24 = arith.constant 0 : index
    %30 = vector.load %arg5[%c0_22, %c0_23, %c0_24] : memref<1x256x128xf32, #tpu.memory_space<vmem>>, vector<1x256x128xf32>
    %31 = vector.shape_cast %30 : vector<1x256x128xf32> to vector<256x128xf32>
    %c0_25 = arith.constant 0 : index
    %c0_26 = arith.constant 0 : index
    %32 = vector.load %arg9[%c0_25, %c0_26] : memref<128x128xbf16, #tpu.memory_space<vmem>>, vector<128x128xbf16>
    %cst_27 = arith.constant dense<0.000000e+00> : vector<256x128xf32>
    %33 = tpu.matmul %14, %32, %cst_27 {dimension_numbers = #tpu.dot_dimension_numbers<[1], [0], [0], [1], [0, 0, 1, 1], [], []>} : vector<256x128xbf16>, vector<128x128xbf16>, vector<256x128xf32> -> vector<256x128xf32>
    %34 = arith.addf %31, %33 : vector<256x128xf32>
    %c0_28 = arith.constant 0 : index
    %c0_29 = arith.constant 0 : index
    %35 = vector.load %arg10[%c0_28, %c0_29] : memref<128x128xbf16, #tpu.memory_space<vmem>>, vector<128x128xbf16>
    %cst_30 = arith.constant dense<0.000000e+00> : vector<256x128xf32>
    %36 = tpu.matmul %29, %35, %cst_30 {dimension_numbers = #tpu.dot_dimension_numbers<[1], [0], [0], [1], [0, 0, 1, 1], [], []>} : vector<256x128xbf16>, vector<128x128xbf16>, vector<256x128xf32> -> vector<256x128xf32>
    %37 = arith.addf %34, %36 : vector<256x128xf32>
    %c0_31 = arith.constant 0 : index
    %c0_32 = arith.constant 0 : index
    %38 = vector.load %arg11[%c0_31, %c0_32] : memref<1x128xf32, #tpu.memory_space<vmem>>, vector<1x128xf32>
    %39 = vector.broadcast %38 : vector<1x128xf32> to vector<256x128xf32>
    %40 = arith.addf %37, %39 : vector<256x128xf32>
    %cst_33 = arith.constant 0.000000e+00 : f32
    %41 = vector.broadcast %cst_33 : f32 to vector<256x128xf32>
    %42 = arith.maximumf %40, %41 : vector<256x128xf32>
    %cst_34 = arith.constant dense<0.000000e+00> : vector<256xf32>
    %43 = vector.multi_reduction <add>, %42, %cst_34 [1] : vector<256x128xf32> to vector<256xf32>
    %44 = vector.shape_cast %43 : vector<256xf32> to vector<256x1xf32>
    %cst_35 = arith.constant 1.280000e+02 : f32
    %45 = vector.broadcast %cst_35 : f32 to vector<256x1xf32>
    %46 = arith.divf %44, %45 : vector<256x1xf32>
    %47 = vector.broadcast %46 : vector<256x1xf32> to vector<256x128xf32>
    %48 = arith.subf %42, %47 : vector<256x128xf32>
    %49 = arith.mulf %48, %48 : vector<256x128xf32>
    %cst_36 = arith.constant dense<0.000000e+00> : vector<256xf32>
    %50 = vector.multi_reduction <add>, %49, %cst_36 [1] : vector<256x128xf32> to vector<256xf32>
    %51 = vector.shape_cast %50 : vector<256xf32> to vector<256x1xf32>
    %cst_37 = arith.constant 1.280000e+02 : f32
    %52 = vector.broadcast %cst_37 : f32 to vector<256x1xf32>
    %53 = arith.divf %51, %52 : vector<256x1xf32>
    %cst_38 = arith.constant 9.99999974E-6 : f32
    %54 = vector.broadcast %cst_38 : f32 to vector<256x1xf32>
    %55 = arith.addf %53, %54 : vector<256x1xf32>
    %56 = math.rsqrt %55 : vector<256x1xf32>
    %57 = vector.broadcast %56 : vector<256x1xf32> to vector<256x128xf32>
    %58 = arith.mulf %48, %57 : vector<256x128xf32>
    %c0_39 = arith.constant 0 : index
    %c0_40 = arith.constant 0 : index
    %59 = vector.load %arg12[%c0_39, %c0_40] : memref<1x128xf32, #tpu.memory_space<vmem>>, vector<1x128xf32>
    %60 = vector.broadcast %59 : vector<1x128xf32> to vector<256x128xf32>
    %61 = arith.mulf %58, %60 : vector<256x128xf32>
    %c0_41 = arith.constant 0 : index
    %c0_42 = arith.constant 0 : index
    %62 = vector.load %arg13[%c0_41, %c0_42] : memref<1x128xf32, #tpu.memory_space<vmem>>, vector<1x128xf32>
    %63 = vector.broadcast %62 : vector<1x128xf32> to vector<256x128xf32>
    %64 = arith.addf %61, %63 : vector<256x128xf32>
    %65 = arith.truncf %64 : vector<256x128xf32> to vector<256x128xbf16>
    %c0_43 = arith.constant 0 : index
    %c0_44 = arith.constant 0 : index
    %66 = vector.load %arg14[%c0_43, %c0_44] : memref<8x128xbf16, #tpu.memory_space<vmem>>, vector<8x128xbf16>
    %cst_45 = arith.constant dense<0.000000e+00> : vector<8x256xf32>
    %67 = tpu.matmul %66, %65, %cst_45 {dimension_numbers = #tpu.dot_dimension_numbers<[1], [1], [0], [0], [0, 0, 1, 0], [], []>} : vector<8x128xbf16>, vector<256x128xbf16>, vector<8x256xf32> -> vector<8x256xf32>
    %c0_46 = arith.constant 0 : index
    %c0_47 = arith.constant 0 : index
    %68 = vector.load %arg15[%c0_46, %c0_47] : memref<8x1xf32, #tpu.memory_space<vmem>>, vector<8x1xf32>
    %69 = vector.broadcast %68 : vector<8x1xf32> to vector<8x256xf32>
    %70 = arith.addf %67, %69 : vector<8x256xf32>
    %c0_48 = arith.constant 0 : index
    %c0_49 = arith.constant 0 : index
    %c0_50 = arith.constant 0 : index
    %71 = vector.load %arg16[%c0_48, %c0_49, %c0_50] : memref<1x8x256xf32, #tpu.memory_space<vmem>>, vector<1x8x256xf32>
    %72 = vector.shape_cast %71 : vector<1x8x256xf32> to vector<8x256xf32>
    %73 = vector.shape_cast %70 : vector<8x256xf32> to vector<1x8x256xf32>
    tpu.vector_store %arg16[%c0_48, %c0_49, %c0_50], %73 {strides = array<i32>} : memref<1x8x256xf32, #tpu.memory_space<vmem>>, vector<1x8x256xf32>,
    return
  }
  func.func @transform_0(%arg0: i32) -> (i32, i32, i32) {
    %c0_i32 = arith.constant 0 : i32
    %c0_i32_0 = arith.constant 0 : i32
    %c0_i32_1 = arith.constant 0 : i32
    return %arg0, %c0_i32, %c0_i32_0 : i32, i32, i32
  }
  func.func @transform_1(%arg0: i32) -> (i32, i32, i32) {
    %c0_i32 = arith.constant 0 : i32
    %c0_i32_0 = arith.constant 0 : i32
    %c0_i32_1 = arith.constant 0 : i32
    return %arg0, %c0_i32, %c0_i32_0 : i32, i32, i32
  }
  func.func @transform_2(%arg0: i32) -> (i32, i32, i32) {
    %c0_i32 = arith.constant 0 : i32
    %c0_i32_0 = arith.constant 0 : i32
    %c0_i32_1 = arith.constant 0 : i32
    return %arg0, %c0_i32, %c0_i32_0 : i32, i32, i32
  }
  func.func @transform_3(%arg0: i32) -> (i32, i32, i32) {
    %c0_i32 = arith.constant 0 : i32
    %c0_i32_0 = arith.constant 0 : i32
    %c0_i32_1 = arith.constant 0 : i32
    return %arg0, %c0_i32, %c0_i32_0 : i32, i32, i32
  }
  func.func @transform_4(%arg0: i32) -> (i32, i32, i32) {
    %c0_i32 = arith.constant 0 : i32
    %c0_i32_0 = arith.constant 0 : i32
    %c0_i32_1 = arith.constant 0 : i32
    return %arg0, %c0_i32, %c0_i32_0 : i32, i32, i32
  }
  func.func @transform_5(%arg0: i32) -> (i32, i32) {
    %c0_i32 = arith.constant 0 : i32
    %c0_i32_0 = arith.constant 0 : i32
    %c0_i32_1 = arith.constant 0 : i32
    return %c0_i32, %c0_i32_0 : i32, i32
  }
  func.func @transform_6(%arg0: i32) -> (i32, i32) {
    %c0_i32 = arith.constant 0 : i32
    %c0_i32_0 = arith.constant 0 : i32
    %c0_i32_1 = arith.constant 0 : i32
    return %c0_i32, %c0_i32_0 : i32, i32
  }
  func.func @transform_7(%arg0: i32) -> (i32, i32) {
    %c0_i32 = arith.constant 0 : i32
    %c0_i32_0 = arith.constant 0 : i32
    %c0_i32_1 = arith.constant 0 : i32
    return %c0_i32, %c0_i32_0 : i32, i32
  }
  func.func @transform_8(%arg0: i32) -> (i32, i32) {
    %c0_i32 = arith.constant 0 : i32
    %c0_i32_0 = arith.constant 0 : i32
    %c0_i32_1 = arith.constant 0 : i32
    return %c0_i32, %c0_i32_0 : i32, i32
  }
  func.func @transform_9(%arg0: i32) -> (i32, i32) {
    %c0_i32 = arith.constant 0 : i32
    %c0_i32_0 = arith.constant 0 : i32
    %c0_i32_1 = arith.constant 0 : i32
    return %c0_i32, %c0_i32_0 : i32, i32
  }
  func.func @transform_10(%arg0: i32) -> (i32, i32) {
    %c0_i32 = arith.constant 0 : i32
    %c0_i32_0 = arith.constant 0 : i32
    %c0_i32_1 = arith.constant 0 : i32
    return %c0_i32, %c0_i32_0 : i32, i32
  }
  func.func @transform_11(%arg0: i32) -> (i32, i32) {
    %c0_i32 = arith.constant 0 : i32
    %c0_i32_0 = arith.constant 0 : i32
    %c0_i32_1 = arith.constant 0 : i32
    return %c0_i32, %c0_i32_0 : i32, i32
  }
  func.func @transform_12(%arg0: i32) -> (i32, i32) {
    %c0_i32 = arith.constant 0 : i32
    %c0_i32_0 = arith.constant 0 : i32
    %c0_i32_1 = arith.constant 0 : i32
    return %c0_i32, %c0_i32_0 : i32, i32
  }
  func.func @transform_13(%arg0: i32) -> (i32, i32) {
    %c0_i32 = arith.constant 0 : i32
    %c0_i32_0 = arith.constant 0 : i32
    %c0_i32_1 = arith.constant 0 : i32
    return %c0_i32, %c0_i32_0 : i32, i32
  }
  func.func @transform_14(%arg0: i32) -> (i32, i32) {
    %c0_i32 = arith.constant 0 : i32
    %c0_i32_0 = arith.constant 0 : i32
    %c0_i32_1 = arith.constant 0 : i32
    return %c0_i32, %c0_i32_0 : i32, i32
  }
  func.func @transform_15(%arg0: i32) -> (i32, i32, i32) {
    %c0_i32 = arith.constant 0 : i32
    %c0_i32_0 = arith.constant 0 : i32
    %c0_i32_1 = arith.constant 0 : i32
    return %arg0, %c0_i32, %c0_i32_0 : i32, i32, i32
  }
}

</mosaic_0001>

<llo_original>
// kernel: sage_graph_conv_net.1
$region0: #{sage_graph_conv_net.1}
  #allocation0 [shape = 'u32[]', space=smem, size = 0x4, offset = 0x4, fixed_abs, tag = 'smem constant byte address 0x4 - core index']
  #allocation1 [shape = 'u32[144,128]{1,0:T(1,128)}', space=vmem, size = 0x12000, scoped, tag = 'internal scratch']
  %s0 = inlined_call_operand.vmem [shape: bf16[2,256,256], index: 0, kind: input, shape index: {}]
  %s1 = inlined_call_operand.vmem [shape: f32[2,256,1], index: 1, kind: input, shape index: {}]
  %s2 = inlined_call_operand.vmem [shape: bf16[2,256,128], index: 2, kind: input, shape index: {}]
  %s3 = inlined_call_operand.vmem [shape: f32[2,256,128], index: 3, kind: input, shape index: {}]
  %s4 = inlined_call_operand.vmem [shape: f32[2,256,128], index: 4, kind: input, shape index: {}]
  %s5 = inlined_call_operand.vmem [shape: bf16[128,128], index: 5, kind: input, shape index: {}]
  %s6 = inlined_call_operand.vmem [shape: f32[1,128], index: 6, kind: input, shape index: {}]
  %s7 = inlined_call_operand.vmem [shape: bf16[128,128], index: 7, kind: input, shape index: {}]
  %s8 = inlined_call_operand.vmem [shape: bf16[128,128], index: 8, kind: input, shape index: {}]
  %s9 = inlined_call_operand.vmem [shape: bf16[128,128], index: 9, kind: input, shape index: {}]
  %s10 = inlined_call_operand.vmem [shape: f32[1,128], index: 10, kind: input, shape index: {}]
  %s11 = inlined_call_operand.vmem [shape: f32[1,128], index: 11, kind: input, shape index: {}]
  %s12 = inlined_call_operand.vmem [shape: f32[1,128], index: 12, kind: input, shape index: {}]
  %s13 = inlined_call_operand.vmem [shape: bf16[8,128], index: 13, kind: input, shape index: {}]
  %s14 = inlined_call_operand.vmem [shape: f32[8,1], index: 14, kind: input, shape index: {}]
  %s15 = inlined_call_operand.vmem [shape: f32[2,8,256], index: 15, kind: output, shape index: {}]
  %s16 = sld [smem:[#allocation0]]
  $region93: #{sage_graph_conv_net.1} parent=0
    _
  %s18 = ssub.s32 1, %s16
  %s19 = scalar_select 0, %s18, %s16
  loop: start=0, step=1, limit=4
  $region2: #{sage_graph_conv_net.1} parent=0 // loop_pre_header
    _
  $region3: #{sage_graph_conv_net.1} parent=0 // loop_header
    %s21 = sphi 0, %s25
    %p22 = scmp.ge.s32.totalorder %s21, 4
    %s31 = sphi 0, %s33
    %s34 = sphi 0, %s31
    %s35 = sphi 0, %s34
    %s51 = sphi 0, %s35
    %s57 = sphi 0, %s59
    %s60 = sphi 0, %s57
    %s61 = sphi 0, %s60
    %s77 = sphi 0, %s61
    %s83 = sphi 0, %s85
    %s86 = sphi 0, %s83
    %s87 = sphi 0, %s86
    %s103 = sphi 0, %s87
    %s109 = sphi 0, %s111
    %s112 = sphi 0, %s109
    %s113 = sphi 0, %s112
    %s129 = sphi 0, %s113
    %s135 = sphi 0, %s137
    %s138 = sphi 0, %s135
    %s139 = sphi 0, %s138
    %s155 = sphi 0, %s139
    %s159 = sphi 0, %s159
    %s161 = sphi 0, %s159
    %s162 = sphi 0, %s161
    %s176 = sphi 0, %s162
    %s180 = sphi 0, %s180
    %s182 = sphi 0, %s180
    %s183 = sphi 0, %s182
    %s197 = sphi 0, %s183
    %s201 = sphi 0, %s201
    %s203 = sphi 0, %s201
    %s204 = sphi 0, %s203
    %s218 = sphi 0, %s204
    %s222 = sphi 0, %s222
    %s224 = sphi 0, %s222
    %s225 = sphi 0, %s224
    %s239 = sphi 0, %s225
    %s243 = sphi 0, %s243
    %s245 = sphi 0, %s243
    %s246 = sphi 0, %s245
    %s260 = sphi 0, %s246
    %s264 = sphi 0, %s264
    %s266 = sphi 0, %s264
    %s267 = sphi 0, %s266
    %s281 = sphi 0, %s267
    %s285 = sphi 0, %s285
    %s287 = sphi 0, %s285
    %s288 = sphi 0, %s287
    %s302 = sphi 0, %s288
    %s306 = sphi 0, %s306
    %s308 = sphi 0, %s306
    %s309 = sphi 0, %s308
    %s323 = sphi 0, %s309
    %s327 = sphi 0, %s327
    %s329 = sphi 0, %s327
    %s330 = sphi 0, %s329
    %s344 = sphi 0, %s330
    %s348 = sphi 0, %s348
    %s350 = sphi 0, %s348
    %s351 = sphi 0, %s350
    %s365 = sphi 0, %s351
    %s371 = sphi 0, %s373
    %s374 = sphi 0, %s371
    %s375 = sphi 0, %s374
    %s391 = sphi 0, %s375
  $region4: #{sage_graph_conv_net.1} parent=0 // loop_header_branch
    %24 = sbr.rel (%p22) target = $region8
  $region5: #{sage_graph_conv_net.1} parent=0 // loop_body
    %s26 = ssub.s32 %s21, 1
    %s27 = ssub.s32 %s21, 2
    %s28 = sadd.s32 %s21, 1
    %s29 = ssub.s32 %s21, %s28
    %p30 = scmp.eq.s32.totalorder %s29, 0
    %s32 = sadd.s32 %s31, 1
    %s33 = scalar_select %p30, %s31, %s32
    %p36 = pneg %p30
    %p37 = scmp.eq.s32.totalorder %s21, 1
    %p38 = por %p36, %p37
    %p39 = scmp.ne.s32.totalorder %s31, %s34
    %p40 = scmp.eq.s32.totalorder %s21, 0
    %p41 = por %p39, %p40
    %p42 = scmp.ne.s32.totalorder %s31, %s34
    %p43 = scmp.eq.s32.totalorder %s26, 1
    %p44 = por %p42, %p43
    %p45 = scmp.ne.s32.totalorder %s34, %s35
    %p46 = scmp.eq.s32.totalorder %s26, 0
    %p47 = por %p45, %p46
    %p48 = scmp.ne.s32.totalorder %s34, %s35
    %p49 = scmp.eq.s32.totalorder %s27, 1
    %p50 = por %p48, %p49
    %p52 = scmp.ne.s32.totalorder %s35, %s51
    %p53 = scmp.eq.s32.totalorder %s27, 0
    %p54 = por %p52, %p53
    %s55 = ssub.s32 %s21, %s28
    %p56 = scmp.eq.s32.totalorder %s55, 0
    %s58 = sadd.s32 %s57, 1
    %s59 = scalar_select %p56, %s57, %s58
    %p62 = pneg %p56
    %p63 = scmp.eq.s32.totalorder %s21, 1
    %p64 = por %p62, %p63
    %p65 = scmp.ne.s32.totalorder %s57, %s60
    %p66 = scmp.eq.s32.totalorder %s21, 0
    %p67 = por %p65, %p66
    %p68 = scmp.ne.s32.totalorder %s57, %s60
    %p69 = scmp.eq.s32.totalorder %s26, 1
    %p70 = por %p68, %p69
    %p71 = scmp.ne.s32.totalorder %s60, %s61
    %p72 = scmp.eq.s32.totalorder %s26, 0
    %p73 = por %p71, %p72
    %p74 = scmp.ne.s32.totalorder %s60, %s61
    %p75 = scmp.eq.s32.totalorder %s27, 1
    %p76 = por %p74, %p75
    %p78 = scmp.ne.s32.totalorder %s61, %s77
    %p79 = scmp.eq.s32.totalorder %s27, 0
    %p80 = por %p78, %p79
    %s81 = ssub.s32 %s21, %s28
    %p82 = scmp.eq.s32.totalorder %s81, 0
    %s84 = sadd.s32 %s83, 1
    %s85 = scalar_select %p82, %s83, %s84
    %p88 = pneg %p82
    %p89 = scmp.eq.s32.totalorder %s21, 1
    %p90 = por %p88, %p89
    %p91 = scmp.ne.s32.totalorder %s83, %s86
    %p92 = scmp.eq.s32.totalorder %s21, 0
    %p93 = por %p91, %p92
    %p94 = scmp.ne.s32.totalorder %s83, %s86
    %p95 = scmp.eq.s32.totalorder %s26, 1
    %p96 = por %p94, %p95
    %p97 = scmp.ne.s32.totalorder %s86, %s87
    %p98 = scmp.eq.s32.totalorder %s26, 0
    %p99 = por %p97, %p98
    %p100 = scmp.ne.s32.totalorder %s86, %s87
    %p101 = scmp.eq.s32.totalorder %s27, 1
    %p102 = por %p100, %p101
    %p104 = scmp.ne.s32.totalorder %s87, %s103
    %p105 = scmp.eq.s32.totalorder %s27, 0
    %p106 = por %p104, %p105
    %s107 = ssub.s32 %s21, %s28
    %p108 = scmp.eq.s32.totalorder %s107, 0
    %s110 = sadd.s32 %s109, 1
    %s111 = scalar_select %p108, %s109, %s110
    %p114 = pneg %p108
    %p115 = scmp.eq.s32.totalorder %s21, 1
    %p116 = por %p114, %p115
    %p117 = scmp.ne.s32.totalorder %s109, %s112
    %p118 = scmp.eq.s32.totalorder %s21, 0
    %p119 = por %p117, %p118
    %p120 = scmp.ne.s32.totalorder %s109, %s112
    %p121 = scmp.eq.s32.totalorder %s26, 1
    %p122 = por %p120, %p121
    %p123 = scmp.ne.s32.totalorder %s112, %s113
    %p124 = scmp.eq.s32.totalorder %s26, 0
    %p125 = por %p123, %p124
    %p126 = scmp.ne.s32.totalorder %s112, %s113
    %p127 = scmp.eq.s32.totalorder %s27, 1
    %p128 = por %p126, %p127
    %p130 = scmp.ne.s32.totalorder %s113, %s129
    %p131 = scmp.eq.s32.totalorder %s27, 0
    %p132 = por %p130, %p131
    %s133 = ssub.s32 %s21, %s28
    %p134 = scmp.eq.s32.totalorder %s133, 0
    %s136 = sadd.s32 %s135, 1
    %s137 = scalar_select %p134, %s135, %s136
    %p140 = pneg %p134
    %p141 = scmp.eq.s32.totalorder %s21, 1
    %p142 = por %p140, %p141
    %p143 = scmp.ne.s32.totalorder %s135, %s138
    %p144 = scmp.eq.s32.totalorder %s21, 0
    %p145 = por %p143, %p144
    %p146 = scmp.ne.s32.totalorder %s135, %s138
    %p147 = scmp.eq.s32.totalorder %s26, 1
    %p148 = por %p146, %p147
    %p149 = scmp.ne.s32.totalorder %s138, %s139
    %p150 = scmp.eq.s32.totalorder %s26, 0
    %p151 = por %p149, %p150
    %p152 = scmp.ne.s32.totalorder %s138, %s139
    %p153 = scmp.eq.s32.totalorder %s27, 1
    %p154 = por %p152, %p153
    %p156 = scmp.ne.s32.totalorder %s139, %s155
    %p157 = scmp.eq.s32.totalorder %s27, 0
    %p158 = por %p156, %p157
    %s160 = sadd.s32 %s159, 1
    %p163 = scmp.eq.s32.totalorder %s21, 1
    %p164 = scmp.ne.s32.totalorder %s159, %s161
    %p165 = scmp.eq.s32.totalorder %s21, 0
    %p166 = por %p164, %p165
    %p167 = scmp.ne.s32.totalorder %s159, %s161
    %p168 = scmp.eq.s32.totalorder %s26, 1
    %p169 = por %p167, %p168
    %p170 = scmp.ne.s32.totalorder %s161, %s162
    %p171 = scmp.eq.s32.totalorder %s26, 0
    %p172 = por %p170, %p171
    %p173 = scmp.ne.s32.totalorder %s161, %s162
    %p174 = scmp.eq.s32.totalorder %s27, 1
    %p175 = por %p173, %p174
    %p177 = scmp.ne.s32.totalorder %s162, %s176
    %p178 = scmp.eq.s32.totalorder %s27, 0
    %p179 = por %p177, %p178
    %s181 = sadd.s32 %s180, 1
    %p184 = scmp.eq.s32.totalorder %s21, 1
    %p185 = scmp.ne.s32.totalorder %s180, %s182
    %p186 = scmp.eq.s32.totalorder %s21, 0
    %p187 = por %p185, %p186
    %p188 = scmp.ne.s32.totalorder %s180, %s182
    %p189 = scmp.eq.s32.totalorder %s26, 1
    %p190 = por %p188, %p189
    %p191 = scmp.ne.s32.totalorder %s182, %s183
    %p192 = scmp.eq.s32.totalorder %s26, 0
    %p193 = por %p191, %p192
    %p194 = scmp.ne.s32.totalorder %s182, %s183
    %p195 = scmp.eq.s32.totalorder %s27, 1
    %p196 = por %p194, %p195
    %p198 = scmp.ne.s32.totalorder %s183, %s197
    %p199 = scmp.eq.s32.totalorder %s27, 0
    %p200 = por %p198, %p199
    %s202 = sadd.s32 %s201, 1
    %p205 = scmp.eq.s32.totalorder %s21, 1
    %p206 = scmp.ne.s32.totalorder %s201, %s203
    %p207 = scmp.eq.s32.totalorder %s21, 0
    %p208 = por %p206, %p207
    %p209 = scmp.ne.s32.totalorder %s201, %s203
    %p210 = scmp.eq.s32.totalorder %s26, 1
    %p211 = por %p209, %p210
    %p212 = scmp.ne.s32.totalorder %s203, %s204
    %p213 = scmp.eq.s32.totalorder %s26, 0
    %p214 = por %p212, %p213
    %p215 = scmp.ne.s32.totalorder %s203, %s204
    %p216 = scmp.eq.s32.totalorder %s27, 1
    %p217 = por %p215, %p216
    %p219 = scmp.ne.s32.totalorder %s204, %s218
    %p220 = scmp.eq.s32.totalorder %s27, 0
    %p221 = por %p219, %p220
    %s223 = sadd.s32 %s222, 1
    %p226 = scmp.eq.s32.totalorder %s21, 1
    %p227 = scmp.ne.s32.totalorder %s222, %s224
    %p228 = scmp.eq.s32.totalorder %s21, 0
    %p229 = por %p227, %p228
    %p230 = scmp.ne.s32.totalorder %s222, %s224
    %p231 = scmp.eq.s32.totalorder %s26, 1
    %p232 = por %p230, %p231
    %p233 = scmp.ne.s32.totalorder %s224, %s225
    %p234 = scmp.eq.s32.totalorder %s26, 0
    %p235 = por %p233, %p234
    %p236 = scmp.ne.s32.totalorder %s224, %s225
    %p237 = scmp.eq.s32.totalorder %s27, 1
    %p238 = por %p236, %p237
    %p240 = scmp.ne.s32.totalorder %s225, %s239
    %p241 = scmp.eq.s32.totalorder %s27, 0
    %p242 = por %p240, %p241
    %s244 = sadd.s32 %s243, 1
    %p247 = scmp.eq.s32.totalorder %s21, 1
    %p248 = scmp.ne.s32.totalorder %s243, %s245
    %p249 = scmp.eq.s32.totalorder %s21, 0
    %p250 = por %p248, %p249
    %p251 = scmp.ne.s32.totalorder %s243, %s245
    %p252 = scmp.eq.s32.totalorder %s26, 1
    %p253 = por %p251, %p252
    %p254 = scmp.ne.s32.totalorder %s245, %s246
    %p255 = scmp.eq.s32.totalorder %s26, 0
    %p256 = por %p254, %p255
    %p257 = scmp.ne.s32.totalorder %s245, %s246
    %p258 = scmp.eq.s32.totalorder %s27, 1
    %p259 = por %p257, %p258
    %p261 = scmp.ne.s32.totalorder %s246, %s260
    %p262 = scmp.eq.s32.totalorder %s27, 0
    %p263 = por %p261, %p262
    %s265 = sadd.s32 %s264, 1
    %p268 = scmp.eq.s32.totalorder %s21, 1
    %p269 = scmp.ne.s32.totalorder %s264, %s266
    %p270 = scmp.eq.s32.totalorder %s21, 0
    %p271 = por %p269, %p270
    %p272 = scmp.ne.s32.totalorder %s264, %s266
    %p273 = scmp.eq.s32.totalorder %s26, 1
    %p274 = por %p272, %p273
    %p275 = scmp.ne.s32.totalorder %s266, %s267
    %p276 = scmp.eq.s32.totalorder %s26, 0
    %p277 = por %p275, %p276
    %p278 = scmp.ne.s32.totalorder %s266, %s267
    %p279 = scmp.eq.s32.totalorder %s27, 1
    %p280 = por %p278, %p279
    %p282 = scmp.ne.s32.totalorder %s267, %s281
    %p283 = scmp.eq.s32.totalorder %s27, 0
    %p284 = por %p282, %p283
    %s286 = sadd.s32 %s285, 1
    %p289 = scmp.eq.s32.totalorder %s21, 1
    %p290 = scmp.ne.s32.totalorder %s285, %s287
    %p291 = scmp.eq.s32.totalorder %s21, 0
    %p292 = por %p290, %p291
    %p293 = scmp.ne.s32.totalorder %s285, %s287
    %p294 = scmp.eq.s32.totalorder %s26, 1
    %p295 = por %p293, %p294
    %p296 = scmp.ne.s32.totalorder %s287, %s288
    %p297 = scmp.eq.s32.totalorder %s26, 0
    %p298 = por %p296, %p297
    %p299 = scmp.ne.s32.totalorder %s287, %s288
    %p300 = scmp.eq.s32.totalorder %s27, 1
    %p301 = por %p299, %p300
    %p303 = scmp.ne.s32.totalorder %s288, %s302
    %p304 = scmp.eq.s32.totalorder %s27, 0
    %p305 = por %p303, %p304
    %s307 = sadd.s32 %s306, 1
    %p310 = scmp.eq.s32.totalorder %s21, 1
    %p311 = scmp.ne.s32.totalorder %s306, %s308
    %p312 = scmp.eq.s32.totalorder %s21, 0
    %p313 = por %p311, %p312
    %p314 = scmp.ne.s32.totalorder %s306, %s308
    %p315 = scmp.eq.s32.totalorder %s26, 1
    %p316 = por %p314, %p315
    %p317 = scmp.ne.s32.totalorder %s308, %s309
    %p318 = scmp.eq.s32.totalorder %s26, 0
    %p319 = por %p317, %p318
    %p320 = scmp.ne.s32.totalorder %s308, %s309
    %p321 = scmp.eq.s32.totalorder %s27, 1
    %p322 = por %p320, %p321
    %p324 = scmp.ne.s32.totalorder %s309, %s323
    %p325 = scmp.eq.s32.totalorder %s27, 0
    %p326 = por %p324, %p325
    %s328 = sadd.s32 %s327, 1
    %p331 = scmp.eq.s32.totalorder %s21, 1
    %p332 = scmp.ne.s32.totalorder %s327, %s329
    %p333 = scmp.eq.s32.totalorder %s21, 0
    %p334 = por %p332, %p333
    %p335 = scmp.ne.s32.totalorder %s327, %s329
    %p336 = scmp.eq.s32.totalorder %s26, 1
    %p337 = por %p335, %p336
    %p338 = scmp.ne.s32.totalorder %s329, %s330
    %p339 = scmp.eq.s32.totalorder %s26, 0
    %p340 = por %p338, %p339
    %p341 = scmp.ne.s32.totalorder %s329, %s330
    %p342 = scmp.eq.s32.totalorder %s27, 1
    %p343 = por %p341, %p342
    %p345 = scmp.ne.s32.totalorder %s330, %s344
    %p346 = scmp.eq.s32.totalorder %s27, 0
    %p347 = por %p345, %p346
    %s349 = sadd.s32 %s348, 1
    %p352 = scmp.eq.s32.totalorder %s21, 1
    %p353 = scmp.ne.s32.totalorder %s348, %s350
    %p354 = scmp.eq.s32.totalorder %s21, 0
    %p355 = por %p353, %p354
    %p356 = scmp.ne.s32.totalorder %s348, %s350
    %p357 = scmp.eq.s32.totalorder %s26, 1
    %p358 = por %p356, %p357
    %p359 = scmp.ne.s32.totalorder %s350, %s351
    %p360 = scmp.eq.s32.totalorder %s26, 0
    %p361 = por %p359, %p360
    %p362 = scmp.ne.s32.totalorder %s350, %s351
    %p363 = scmp.eq.s32.totalorder %s27, 1
    %p364 = por %p362, %p363
    %p366 = scmp.ne.s32.totalorder %s351, %s365
    %p367 = scmp.eq.s32.totalorder %s27, 0
    %p368 = por %p366, %p367
    %s369 = ssub.s32 %s21, %s28
    %p370 = scmp.eq.s32.totalorder %s369, 0
    %s372 = sadd.s32 %s371, 1
    %s373 = scalar_select %p370, %s371, %s372
    %p376 = pneg %p370
    %p377 = scmp.eq.s32.totalorder %s21, 1
    %p378 = por %p376, %p377
    %p379 = scmp.ne.s32.totalorder %s371, %s374
    %p380 = scmp.eq.s32.totalorder %s21, 0
    %p381 = por %p379, %p380
    %p382 = scmp.ne.s32.totalorder %s371, %s374
    %p383 = scmp.eq.s32.totalorder %s26, 1
    %p384 = por %p382, %p383
    %p385 = scmp.ne.s32.totalorder %s374, %s375
    %p386 = scmp.eq.s32.totalorder %s26, 0
    %p387 = por %p385, %p386
    %p388 = scmp.ne.s32.totalorder %s374, %s375
    %p389 = scmp.eq.s32.totalorder %s27, 1
    %p390 = por %p388, %p389
    %p392 = scmp.ne.s32.totalorder %s375, %s391
    %p393 = scmp.eq.s32.totalorder %s27, 0
    %p394 = por %p392, %p393
    %p395 = scmp.le.s32.totalorder 1, %s21
    %p396 = scmp.lt.s32.totalorder %s21, 3
    %p397 = pnand %p395, %p396
    %p398 = pneg %p397
    // Predicated region
    $region9: #{sage_graph_conv_net.1} parent=5 // pred_check
      _
    $region10: #{sage_graph_conv_net.1} parent=5 // pred_check_branch
      %400 = sbr.rel (%p397) target = $region12
    $region11: #{sage_graph_conv_net.1} parent=5 // pred_region
      %s401 = ssub.s32 %s21, 1
      // Predicated region
      $region13: #{sage_graph_conv_net.1} parent=11 // pred_check
        %p402 = pneg %p172
      $region14: #{sage_graph_conv_net.1} parent=11 // pred_check_branch
        %404 = sbr.rel (%p402) target = $region16
      $region15: #{sage_graph_conv_net.1} parent=11 // pred_region
        _
      $region16: #{sage_graph_conv_net.1} parent=11 // pred_fallthru
        _
      // Predicated region
      $region17: #{sage_graph_conv_net.1} parent=11 // pred_check
        %p405 = pneg %p193
      $region18: #{sage_graph_conv_net.1} parent=11 // pred_check_branch
        %407 = sbr.rel (%p405) target = $region20
      $region19: #{sage_graph_conv_net.1} parent=11 // pred_region
        _
      $region20: #{sage_graph_conv_net.1} parent=11 // pred_fallthru
        _
      // Predicated region
      $region21: #{sage_graph_conv_net.1} parent=11 // pred_check
        %p408 = pneg %p214
      $region22: #{sage_graph_conv_net.1} parent=11 // pred_check_branch
        %410 = sbr.rel (%p408) target = $region24
      $region23: #{sage_graph_conv_net.1} parent=11 // pred_region
        _
      $region24: #{sage_graph_conv_net.1} parent=11 // pred_fallthru
        _
      // Predicated region
      $region25: #{sage_graph_conv_net.1} parent=11 // pred_check
        %p411 = pneg %p235
      $region26: #{sage_graph_conv_net.1} parent=11 // pred_check_branch
        %413 = sbr.rel (%p411) target = $region28
      $region27: #{sage_graph_conv_net.1} parent=11 // pred_region
        _
      $region28: #{sage_graph_conv_net.1} parent=11 // pred_fallthru
        _
      // Predicated region
      $region29: #{sage_graph_conv_net.1} parent=11 // pred_check
        %p414 = pneg %p256
      $region30: #{sage_graph_conv_net.1} parent=11 // pred_check_branch
        %416 = sbr.rel (%p414) target = $region32
      $region31: #{sage_graph_conv_net.1} parent=11 // pred_region
        _
      $region32: #{sage_graph_conv_net.1} parent=11 // pred_fallthru
        _
      // Predicated region
      $region33: #{sage_graph_conv_net.1} parent=11 // pred_check
        %p417 = pneg %p277
      $region34: #{sage_graph_conv_net.1} parent=11 // pred_check_branch
        %419 = sbr.rel (%p417) target = $region36
      $region35: #{sage_graph_conv_net.1} parent=11 // pred_region
        _
      $region36: #{sage_graph_conv_net.1} parent=11 // pred_fallthru
        _
      // Predicated region
      $region37: #{sage_graph_conv_net.1} parent=11 // pred_check
        %p420 = pneg %p298
      $region38: #{sage_graph_conv_net.1} parent=11 // pred_check_branch
        %422 = sbr.rel (%p420) target = $region40
      $region39: #{sage_graph_conv_net.1} parent=11 // pred_region
        _
      $region40: #{sage_graph_conv_net.1} parent=11 // pred_fallthru
        _
      // Predicated region
      $region41: #{sage_graph_conv_net.1} parent=11 // pred_check
        %p423 = pneg %p319
      $region42: #{sage_graph_conv_net.1} parent=11 // pred_check_branch
        %425 = sbr.rel (%p423) target = $region44
      $region43: #{sage_graph_conv_net.1} parent=11 // pred_region
        _
      $region44: #{sage_graph_conv_net.1} parent=11 // pred_fallthru
        _
      // Predicated region
      $region45: #{sage_graph_conv_net.1} parent=11 // pred_check
        %p426 = pneg %p340
      $region46: #{sage_graph_conv_net.1} parent=11 // pred_check_branch
        %428 = sbr.rel (%p426) target = $region48
      $region47: #{sage_graph_conv_net.1} parent=11 // pred_region
        _
      $region48: #{sage_graph_conv_net.1} parent=11 // pred_fallthru
        _
      // Predicated region
      $region49: #{sage_graph_conv_net.1} parent=11 // pred_check
        %p429 = pneg %p361
      $region50: #{sage_graph_conv_net.1} parent=11 // pred_check_branch
        %431 = sbr.rel (%p429) target = $region52
      $region51: #{sage_graph_conv_net.1} parent=11 // pred_region
        _
      $region52: #{sage_graph_conv_net.1} parent=11 // pred_fallthru
        _
    $region12: #{sage_graph_conv_net.1} parent=5 // pred_fallthru
      _
    %p432 = scmp.lt.s32.totalorder %s21, 2
    // Predicated region
    $region53: #{sage_graph_conv_net.1} parent=5 // pred_check
      %p433 = pneg %p432
    $region54: #{sage_graph_conv_net.1} parent=5 // pred_check_branch
      %435 = sbr.rel (%p433) target = $region56
    $region55: #{sage_graph_conv_net.1} parent=5 // pred_region
      // Predicated region
      $region57: #{sage_graph_conv_net.1} parent=55 // pred_check
        %p436 = pneg %p41
      $region58: #{sage_graph_conv_net.1} parent=55 // pred_check_branch
        %438 = sbr.rel (%p436) target = $region60
      $region59: #{sage_graph_conv_net.1} parent=55 // pred_region
        %p439 = scmp.lt.s32.totalorder %s21, 1
        %s440 = scalar_select %p439, %s21, 1
        %s441 = smul.addr %s440, 64
        %s442 = smul.addr %s441, 4
        %s443 = scalar_lea.vmem %s0, %s442
      $region60: #{sage_graph_conv_net.1} parent=55 // pred_fallthru
        _
      // Predicated region
      $region61: #{sage_graph_conv_net.1} parent=55 // pred_check
        %p444 = pneg %p67
      $region62: #{sage_graph_conv_net.1} parent=55 // pred_check_branch
        %446 = sbr.rel (%p444) target = $region64
      $region63: #{sage_graph_conv_net.1} parent=55 // pred_region
        %p447 = scmp.lt.s32.totalorder %s21, 1
        %s448 = scalar_select %p447, %s21, 1
        %s449 = smul.addr %s448, 32
        %s450 = smul.addr %s449, 8
        %s451 = scalar_lea.vmem %s1, %s450
      $region64: #{sage_graph_conv_net.1} parent=55 // pred_fallthru
        _
      // Predicated region
      $region65: #{sage_graph_conv_net.1} parent=55 // pred_check
        %p452 = pneg %p93
      $region66: #{sage_graph_conv_net.1} parent=55 // pred_check_branch
        %454 = sbr.rel (%p452) target = $region68
      $region67: #{sage_graph_conv_net.1} parent=55 // pred_region
        %p455 = scmp.lt.s32.totalorder %s21, 1
        %s456 = scalar_select %p455, %s21, 1
        %s457 = smul.addr %s456, 32
        %s458 = smul.addr %s457, 4
        %s459 = scalar_lea.vmem %s2, %s458
      $region68: #{sage_graph_conv_net.1} parent=55 // pred_fallthru
        _
      // Predicated region
      $region69: #{sage_graph_conv_net.1} parent=55 // pred_check
        %p460 = pneg %p119
      $region70: #{sage_graph_conv_net.1} parent=55 // pred_check_branch
        %462 = sbr.rel (%p460) target = $region72
      $region71: #{sage_graph_conv_net.1} parent=55 // pred_region
        %p463 = scmp.lt.s32.totalorder %s21, 1
        %s464 = scalar_select %p463, %s21, 1
        %s465 = smul.addr %s464, 32
        %s466 = smul.addr %s465, 8
        %s467 = scalar_lea.vmem %s3, %s466
      $region72: #{sage_graph_conv_net.1} parent=55 // pred_fallthru
        _
      // Predicated region
      $region73: #{sage_graph_conv_net.1} parent=55 // pred_check
        %p468 = pneg %p145
      $region74: #{sage_graph_conv_net.1} parent=55 // pred_check_branch
        %470 = sbr.rel (%p468) target = $region76
      $region75: #{sage_graph_conv_net.1} parent=55 // pred_region
        %p471 = scmp.lt.s32.totalorder %s21, 1
        %s472 = scalar_select %p471, %s21, 1
        %s473 = smul.addr %s472, 32
        %s474 = smul.addr %s473, 8
        %s475 = scalar_lea.vmem %s4, %s474
      $region76: #{sage_graph_conv_net.1} parent=55 // pred_fallthru
        _
    $region56: #{sage_graph_conv_net.1} parent=5 // pred_fallthru
      _
    %p476 = scmp.le.s32.totalorder 1, %s21
    %p477 = scmp.lt.s32.totalorder %s21, 3
    %p478 = pnand %p476, %p477
    %p479 = pneg %p478
    // Predicated region
    $region77: #{sage_graph_conv_net.1} parent=5 // pred_check
      _
    $region78: #{sage_graph_conv_net.1} parent=5 // pred_check_branch
      %481 = sbr.rel (%p478) target = $region80
    $region79: #{sage_graph_conv_net.1} parent=5 // pred_region
      %s482 = ssub.s32 %s21, 1
      %p483 = scmp.lt.s32.totalorder %s26, 1
      %s484 = scalar_select %p483, %s26, 1
      %s485 = smul.addr %s484, 64
      %s486 = smul.addr %s485, 4
      %s487 = scalar_lea.vmem %s0, %s486
      %p488 = pneg %p47
      %p489 = pneg %p44
      %p490 = scmp.lt.s32.totalorder %s26, 1
      %s491 = scalar_select %p490, %s26, 1
      %s492 = smul.addr %s491, 32
      %s493 = smul.addr %s492, 8
      %s494 = scalar_lea.vmem %s1, %s493
      %p495 = pneg %p73
      %p496 = pneg %p70
      %p497 = scmp.lt.s32.totalorder %s26, 1
      %s498 = scalar_select %p497, %s26, 1
      %s499 = smul.addr %s498, 32
      %s500 = smul.addr %s499, 4
      %s501 = scalar_lea.vmem %s2, %s500
      %p502 = pneg %p99
      %p503 = pneg %p96
      %p504 = scmp.lt.s32.totalorder %s26, 1
      %s505 = scalar_select %p504, %s26, 1
      %s506 = smul.addr %s505, 32
      %s507 = smul.addr %s506, 8
      %s508 = scalar_lea.vmem %s3, %s507
      %p509 = pneg %p125
      %p510 = pneg %p122
      %p511 = scmp.lt.s32.totalorder %s26, 1
      %s512 = scalar_select %p511, %s26, 1
      %s513 = smul.addr %s512, 32
      %s514 = smul.addr %s513, 8
      %s515 = scalar_lea.vmem %s4, %s514
      %p516 = pneg %p151
      %p517 = pneg %p148
      %p518 = pneg %p172
      %p519 = pneg %p169
      %p520 = pneg %p193
      %p521 = pneg %p190
      %p522 = pneg %p214
      %p523 = pneg %p211
      %p524 = pneg %p235
      %p525 = pneg %p232
      %p526 = pneg %p256
      %p527 = pneg %p253
      %p528 = pneg %p277
      %p529 = pneg %p274
      %p530 = pneg %p298
      %p531 = pneg %p295
      %p532 = pneg %p319
      %p533 = pneg %p316
      %p534 = pneg %p340
      %p535 = pneg %p337
      %p536 = pneg %p361
      %p537 = pneg %p358
      %p538 = pneg %p387
      %p539 = pneg %p384
      %p540 = scmp.lt.s32.totalorder %s26, 1
      %s541 = scalar_select %p540, %s26, 1
      %s542 = smul.addr %s541, 2
      %s543 = smul.addr %s542, 8
      %s544 = scalar_lea.vmem %s15, %s543
      %p545 = scmp.lt.s32.totalorder %s26, 1
      %s546 = scalar_select %p545, %s26, 1
      %s547 = smul.addr %s546, 64
      %s548 = smul.addr %s547, 4
      %s549 = scalar_lea.vmem %s0, %s548
      %p550 = scmp.lt.s32.totalorder %s26, 1
      %s551 = scalar_select %p550, %s26, 1
      %s552 = smul.addr %s551, 32
      %s553 = smul.addr %s552, 8
      %s554 = scalar_lea.vmem %s1, %s553
      %p555 = scmp.lt.s32.totalorder %s26, 1
      %s556 = scalar_select %p555, %s26, 1
      %s557 = smul.addr %s556, 32
      %s558 = smul.addr %s557, 4
      %s559 = scalar_lea.vmem %s2, %s558
      %p560 = scmp.lt.s32.totalorder %s26, 1
      %s561 = scalar_select %p560, %s26, 1
      %s562 = smul.addr %s561, 32
      %s563 = smul.addr %s562, 8
      %s564 = scalar_lea.vmem %s3, %s563
      %p565 = scmp.lt.s32.totalorder %s26, 1
      %s566 = scalar_select %p565, %s26, 1
      %s567 = smul.addr %s566, 32
      %s568 = smul.addr %s567, 8
      %s569 = scalar_lea.vmem %s4, %s568
      %p570 = scmp.lt.s32.totalorder %s26, 1
      %s571 = scalar_select %p570, %s26, 1
      %s572 = smul.addr %s571, 2
      %s573 = smul.addr %s572, 8
      %s574 = scalar_lea.vmem %s15, %s573
      %v576 = vld [vmem:[%s549] sm:$0xff]
      %v577 = vld [vmem:[%s549 + $0x8] sm:$0xff]
      %v578 = vld [vmem:[%s549 + $0x10] sm:$0xff]
      %v579 = vld [vmem:[%s549 + $0x18] sm:$0xff]
      %v580 = vld [vmem:[%s549 + $0x20] sm:$0xff]
      %v581 = vld [vmem:[%s549 + $0x28] sm:$0xff]
      %v582 = vld [vmem:[%s549 + $0x30] sm:$0xff]
      %v583 = vld [vmem:[%s549 + $0x38] sm:$0xff]
      %v584 = vld [vmem:[%s549 + $0x40] sm:$0xff]
      %v585 = vld [vmem:[%s549 + $0x48] sm:$0xff]
      %v586 = vld [vmem:[%s549 + $0x50] sm:$0xff]
      %v587 = vld [vmem:[%s549 + $0x58] sm:$0xff]
      %v588 = vld [vmem:[%s549 + $0x60] sm:$0xff]
      %v589 = vld [vmem:[%s549 + $0x68] sm:$0xff]
      %v590 = vld [vmem:[%s549 + $0x70] sm:$0xff]
      %v591 = vld [vmem:[%s549 + $0x78] sm:$0xff]
      %v592 = vld [vmem:[%s549 + $0x80] sm:$0xff]
      %v593 = vld [vmem:[%s549 + $0x88] sm:$0xff]
      %v594 = vld [vmem:[%s549 + $0x90] sm:$0xff]
      %v595 = vld [vmem:[%s549 + $0x98] sm:$0xff]
      %v596 = vld [vmem:[%s549 + $0xa0] sm:$0xff]
      %v597 = vld [vmem:[%s549 + $0xa8] sm:$0xff]
      %v598 = vld [vmem:[%s549 + $0xb0] sm:$0xff]
      %v599 = vld [vmem:[%s549 + $0xb8] sm:$0xff]
      %v600 = vld [vmem:[%s549 + $0xc0] sm:$0xff]
      %v601 = vld [vmem:[%s549 + $0xc8] sm:$0xff]
      %v602 = vld [vmem:[%s549 + $0xd0] sm:$0xff]
      %v603 = vld [vmem:[%s549 + $0xd8] sm:$0xff]
      %v604 = vld [vmem:[%s549 + $0xe0] sm:$0xff]
      %v605 = vld [vmem:[%s549 + $0xe8] sm:$0xff]
      %v606 = vld [vmem:[%s549 + $0xf0] sm:$0xff]
      %v607 = vld [vmem:[%s549 + $0xf8] sm:$0xff]
      %v608 = vld [vmem:[%s554] sm:$0xff]
      %v609 = vld [vmem:[%s554 + $0x8] sm:$0xff]
      %v610 = vld [vmem:[%s554 + $0x10] sm:$0xff]
      %v611 = vld [vmem:[%s554 + $0x18] sm:$0xff]
      %v612 = vld [vmem:[%s554 + $0x20] sm:$0xff]
      %v613 = vld [vmem:[%s554 + $0x28] sm:$0xff]
      %v614 = vld [vmem:[%s554 + $0x30] sm:$0xff]
      %v615 = vld [vmem:[%s554 + $0x38] sm:$0xff]
      %v616 = vld [vmem:[%s554 + $0x40] sm:$0xff]
      %v617 = vld [vmem:[%s554 + $0x48] sm:$0xff]
      %v618 = vld [vmem:[%s554 + $0x50] sm:$0xff]
      %v619 = vld [vmem:[%s554 + $0x58] sm:$0xff]
      %v620 = vld [vmem:[%s554 + $0x60] sm:$0xff]
      %v621 = vld [vmem:[%s554 + $0x68] sm:$0xff]
      %v622 = vld [vmem:[%s554 + $0x70] sm:$0xff]
      %v623 = vld [vmem:[%s554 + $0x78] sm:$0xff]
      %v624 = vld [vmem:[%s554 + $0x80] sm:$0xff]
      %v625 = vld [vmem:[%s554 + $0x88] sm:$0xff]
      %v626 = vld [vmem:[%s554 + $0x90] sm:$0xff]
      %v627 = vld [vmem:[%s554 + $0x98] sm:$0xff]
      %v628 = vld [vmem:[%s554 + $0xa0] sm:$0xff]
      %v629 = vld [vmem:[%s554 + $0xa8] sm:$0xff]
      %v630 = vld [vmem:[%s554 + $0xb0] sm:$0xff]
      %v631 = vld [vmem:[%s554 + $0xb8] sm:$0xff]
      %v632 = vld [vmem:[%s554 + $0xc0] sm:$0xff]
      %v633 = vld [vmem:[%s554 + $0xc8] sm:$0xff]
      %v634 = vld [vmem:[%s554 + $0xd0] sm:$0xff]
      %v635 = vld [vmem:[%s554 + $0xd8] sm:$0xff]
      %v636 = vld [vmem:[%s554 + $0xe0] sm:$0xff]
      %v637 = vld [vmem:[%s554 + $0xe8] sm:$0xff]
      %v638 = vld [vmem:[%s554 + $0xf0] sm:$0xff]
      %v639 = vld [vmem:[%s554 + $0xf8] sm:$0xff]
      %v640 = vld [vmem:[%s559] sm:$0xf]
      %v641 = vld [vmem:[%s559 + $0x4] sm:$0xf]
      %v642 = vld [vmem:[%s559 + $0x8] sm:$0xf]
      %v643 = vld [vmem:[%s559 + $0xc] sm:$0xf]
      %v644 = vld [vmem:[%s559 + $0x10] sm:$0xf]
      %v645 = vld [vmem:[%s559 + $0x14] sm:$0xf]
      %v646 = vld [vmem:[%s559 + $0x18] sm:$0xf]
      %v647 = vld [vmem:[%s559 + $0x1c] sm:$0xf]
      %v648 = vld [vmem:[%s559 + $0x20] sm:$0xf]
      %v649 = vld [vmem:[%s559 + $0x24] sm:$0xf]
      %v650 = vld [vmem:[%s559 + $0x28] sm:$0xf]
      %v651 = vld [vmem:[%s559 + $0x2c] sm:$0xf]
      %v652 = vld [vmem:[%s559 + $0x30] sm:$0xf]
      %v653 = vld [vmem:[%s559 + $0x34] sm:$0xf]
      %v654 = vld [vmem:[%s559 + $0x38] sm:$0xf]
      %v655 = vld [vmem:[%s559 + $0x3c] sm:$0xf]
      %v656 = vld [vmem:[%s559 + $0x40] sm:$0xf]
      %v657 = vld [vmem:[%s559 + $0x44] sm:$0xf]
      %v658 = vld [vmem:[%s559 + $0x48] sm:$0xf]
      %v659 = vld [vmem:[%s559 + $0x4c] sm:$0xf]
      %v660 = vld [vmem:[%s559 + $0x50] sm:$0xf]
      %v661 = vld [vmem:[%s559 + $0x54] sm:$0xf]
      %v662 = vld [vmem:[%s559 + $0x58] sm:$0xf]
      %v663 = vld [vmem:[%s559 + $0x5c] sm:$0xf]
      %v664 = vld [vmem:[%s559 + $0x60] sm:$0xf]
      %v665 = vld [vmem:[%s559 + $0x64] sm:$0xf]
      %v666 = vld [vmem:[%s559 + $0x68] sm:$0xf]
      %v667 = vld [vmem:[%s559 + $0x6c] sm:$0xf]
      %v668 = vld [vmem:[%s559 + $0x70] sm:$0xf]
      %v669 = vld [vmem:[%s559 + $0x74] sm:$0xf]
      %v670 = vld [vmem:[%s559 + $0x78] sm:$0xf]
      %v671 = vld [vmem:[%s559 + $0x7c] sm:$0xf]
      %v704 = vunpack.c.l.b16 %v576
      %v705 = vunpack.c.h.b16 %v576
      %v706 = vunpack.c.l.b16 %v577
      %v707 = vunpack.c.h.b16 %v577
      %v708 = vunpack.c.l.b16 %v578
      %v709 = vunpack.c.h.b16 %v578
      %v710 = vunpack.c.l.b16 %v579
      %v711 = vunpack.c.h.b16 %v579
      %v712 = vunpack.c.l.b16 %v580
      %v713 = vunpack.c.h.b16 %v580
      %v714 = vunpack.c.l.b16 %v581
      %v715 = vunpack.c.h.b16 %v581
      %v716 = vunpack.c.l.b16 %v582
      %v717 = vunpack.c.h.b16 %v582
      %v718 = vunpack.c.l.b16 %v583
      %v719 = vunpack.c.h.b16 %v583
      %v720 = vunpack.c.l.b16 %v584
      %v721 = vunpack.c.h.b16 %v584
      %v722 = vunpack.c.l.b16 %v585
      %v723 = vunpack.c.h.b16 %v585
      %v724 = vunpack.c.l.b16 %v586
      %v725 = vunpack.c.h.b16 %v586
      %v726 = vunpack.c.l.b16 %v587
      %v727 = vunpack.c.h.b16 %v587
      %v728 = vunpack.c.l.b16 %v588
      %v729 = vunpack.c.h.b16 %v588
      %v730 = vunpack.c.l.b16 %v589
      %v731 = vunpack.c.h.b16 %v589
      %v732 = vunpack.c.l.b16 %v590
      %v733 = vunpack.c.h.b16 %v590
      %v734 = vunpack.c.l.b16 %v591
      %v735 = vunpack.c.h.b16 %v591
      %v736 = vunpack.c.l.b16 %v592
      %v737 = vunpack.c.h.b16 %v592
      %v738 = vunpack.c.l.b16 %v593
      %v739 = vunpack.c.h.b16 %v593
      %v740 = vunpack.c.l.b16 %v594
      %v741 = vunpack.c.h.b16 %v594
      %v742 = vunpack.c.l.b16 %v595
      %v743 = vunpack.c.h.b16 %v595
      %v744 = vunpack.c.l.b16 %v596
      %v745 = vunpack.c.h.b16 %v596
      %v746 = vunpack.c.l.b16 %v597
      %v747 = vunpack.c.h.b16 %v597
      %v748 = vunpack.c.l.b16 %v598
      %v749 = vunpack.c.h.b16 %v598
      %v750 = vunpack.c.l.b16 %v599
      %v751 = vunpack.c.h.b16 %v599
      %v752 = vunpack.c.l.b16 %v600
      %v753 = vunpack.c.h.b16 %v600
      %v754 = vunpack.c.l.b16 %v601
      %v755 = vunpack.c.h.b16 %v601
      %v756 = vunpack.c.l.b16 %v602
      %v757 = vunpack.c.h.b16 %v602
      %v758 = vunpack.c.l.b16 %v603
      %v759 = vunpack.c.h.b16 %v603
      %v760 = vunpack.c.l.b16 %v604
      %v761 = vunpack.c.h.b16 %v604
      %v762 = vunpack.c.l.b16 %v605
      %v763 = vunpack.c.h.b16 %v605
      %v764 = vunpack.c.l.b16 %v606
      %v765 = vunpack.c.h.b16 %v606
      %v766 = vunpack.c.l.b16 %v607
      %v767 = vunpack.c.h.b16 %v607
      %v768 = vpack.c.b16 %v706, %v704
      %v769 = vpack.c.b16 %v707, %v705
      %v770 = vpack.c.b16 %v710, %v708
      %v771 = vpack.c.b16 %v711, %v709
      %v772 = vpack.c.b16 %v714, %v712
      %v773 = vpack.c.b16 %v715, %v713
      %v774 = vpack.c.b16 %v718, %v716
      %v775 = vpack.c.b16 %v719, %v717
      %v776 = vpack.c.b16 %v722, %v720
      %v777 = vpack.c.b16 %v723, %v721
      %v778 = vpack.c.b16 %v726, %v724
      %v779 = vpack.c.b16 %v727, %v725
      %v780 = vpack.c.b16 %v730, %v728
      %v781 = vpack.c.b16 %v731, %v729
      %v782 = vpack.c.b16 %v734, %v732
      %v783 = vpack.c.b16 %v735, %v733
      %v784 = vpack.c.b16 %v738, %v736
      %v785 = vpack.c.b16 %v739, %v737
      %v786 = vpack.c.b16 %v742, %v740
      %v787 = vpack.c.b16 %v743, %v741
      %v788 = vpack.c.b16 %v746, %v744
      %v789 = vpack.c.b16 %v747, %v745
      %v790 = vpack.c.b16 %v750, %v748
      %v791 = vpack.c.b16 %v751, %v749
      %v792 = vpack.c.b16 %v754, %v752
      %v793 = vpack.c.b16 %v755, %v753
      %v794 = vpack.c.b16 %v758, %v756
      %v795 = vpack.c.b16 %v759, %v757
      %v796 = vpack.c.b16 %v762, %v760
      %v797 = vpack.c.b16 %v763, %v761
      %v798 = vpack.c.b16 %v766, %v764
      %v799 = vpack.c.b16 %v767, %v765
      %v864 = vunpack.c.l.b16 %v640
      %v865 = vunpack.c.l.b16 %v641
      %v866 = vunpack.c.l.b16 %v642
      %v867 = vunpack.c.l.b16 %v643
      %v868 = vunpack.c.l.b16 %v644
      %v869 = vunpack.c.l.b16 %v645
      %v870 = vunpack.c.l.b16 %v646
      %v871 = vunpack.c.l.b16 %v647
      %v872 = vunpack.c.l.b16 %v648
      %v873 = vunpack.c.l.b16 %v649
      %v874 = vunpack.c.l.b16 %v650
      %v875 = vunpack.c.l.b16 %v651
      %v876 = vunpack.c.l.b16 %v652
      %v877 = vunpack.c.l.b16 %v653
      %v878 = vunpack.c.l.b16 %v654
      %v879 = vunpack.c.l.b16 %v655
      %v880 = vunpack.c.l.b16 %v656
      %v881 = vunpack.c.l.b16 %v657
      %v882 = vunpack.c.l.b16 %v658
      %v883 = vunpack.c.l.b16 %v659
      %v884 = vunpack.c.l.b16 %v660
      %v885 = vunpack.c.l.b16 %v661
      %v886 = vunpack.c.l.b16 %v662
      %v887 = vunpack.c.l.b16 %v663
      %v888 = vunpack.c.l.b16 %v664
      %v889 = vunpack.c.l.b16 %v665
      %v890 = vunpack.c.l.b16 %v666
      %v891 = vunpack.c.l.b16 %v667
      %v892 = vunpack.c.l.b16 %v668
      %v893 = vunpack.c.l.b16 %v669
      %v894 = vunpack.c.l.b16 %v670
      %v895 = vunpack.c.l.b16 %v671
      %v896 = vpack.c.b16 %v865, %v864
      %v897 = vpack.c.b16 %v867, %v866
      %v898 = vpack.c.b16 %v869, %v868
      %v899 = vpack.c.b16 %v871, %v870
      %v900 = vpack.c.b16 %v873, %v872
      %v901 = vpack.c.b16 %v875, %v874
      %v902 = vpack.c.b16 %v877, %v876
      %v903 = vpack.c.b16 %v879, %v878
      %v904 = vpack.c.b16 %v881, %v880
      %v905 = vpack.c.b16 %v883, %v882
      %v906 = vpack.c.b16 %v885, %v884
      %v907 = vpack.c.b16 %v887, %v886
      %v908 = vpack.c.b16 %v889, %v888
      %v909 = vpack.c.b16 %v891, %v890
      %v910 = vpack.c.b16 %v893, %v892
      %v911 = vpack.c.b16 %v895, %v894
      %928 = vmatprep.subr.bf16.mxu0 0
      %929 = vmatpush1.bf16.msra.mxu0 %v896
      %930 = vmatprep.subr.bf16.mxu0 0
      %931 = vmatpush1.bf16.msra.mxu0 %v897
      %932 = vmatprep.subr.bf16.mxu0 0
      %933 = vmatpush1.bf16.msra.mxu0 %v898
      %934 = vmatprep.subr.bf16.mxu0 0
      %935 = vmatpush1.bf16.msra.mxu0 %v899
      %936 = vmatprep.subr.bf16.mxu0 0
      %937 = vmatpush1.bf16.msra.mxu0 %v900
      %938 = vmatprep.subr.bf16.mxu0 0
      %939 = vmatpush1.bf16.msra.mxu0 %v901
      %940 = vmatprep.subr.bf16.mxu0 0
      %941 = vmatpush1.bf16.msra.mxu0 %v902
      %942 = vmatprep.subr.bf16.mxu0 0
      %943 = vmatpush1.bf16.msra.mxu0 %v903
      %944 = vmatprep.subr.bf16.mxu0 0
      %945 = vmatpush1.bf16.msra.mxu0 %v904
      %946 = vmatprep.subr.bf16.mxu0 0
      %947 = vmatpush1.bf16.msra.mxu0 %v905
      %948 = vmatprep.subr.bf16.mxu0 0
      %949 = vmatpush1.bf16.msra.mxu0 %v906
      %950 = vmatprep.subr.bf16.mxu0 0
      %951 = vmatpush1.bf16.msra.mxu0 %v907
      %952 = vmatprep.subr.bf16.mxu0 0
      %953 = vmatpush1.bf16.msra.mxu0 %v908
      %954 = vmatprep.subr.bf16.mxu0 0
      %955 = vmatpush1.bf16.msra.mxu0 %v909
      %956 = vmatprep.subr.bf16.mxu0 0
      %957 = vmatpush1.bf16.msra.mxu0 %v910
      %958 = vmatprep.subr.bf16.mxu0 0
      %959 = vmatpush1.bf16.msra.mxu0 %v911
      %960 = vmatprep.mubr.bf16.mxu0 %v769
      %961 = vmatmul.mubr.bf16.gmra.mrb[0].mxu0 %v768
      %v962 = vpop.f32.mrb[0].mxu0
      %v963 = vadd.f32 0.0, %v962
      %v964 = vpop.f32.mrb[0].mxu0
      %v965 = vpop.f32.mrb[0].mxu0
      %v966 = vadd.f32 0.0, %v965
      %v967 = vpop.f32.mrb[0].mxu0
      %968 = vmatprep.mubr.bf16.mxu0 %v771
      %969 = vmatmul.mubr.bf16.gmra.mrb[0].mxu0 %v770
      %v970 = vpop.f32.mrb[0].mxu0
      %v971 = vadd.f32 0.0, %v970
      %v972 = vpop.f32.mrb[0].mxu0
      %v973 = vpop.f32.mrb[0].mxu0
      %v974 = vadd.f32 0.0, %v973
      %v975 = vpop.f32.mrb[0].mxu0
      %976 = vmatprep.mubr.bf16.mxu0 %v773
      %977 = vmatmul.mubr.bf16.gmra.mrb[0].mxu0 %v772
      %v978 = vpop.f32.mrb[0].mxu0
      %v979 = vadd.f32 0.0, %v978
      %v980 = vpop.f32.mrb[0].mxu0
      %v981 = vpop.f32.mrb[0].mxu0
      %v982 = vadd.f32 0.0, %v981
      %v983 = vpop.f32.mrb[0].mxu0
      %984 = vmatprep.mubr.bf16.mxu0 %v775
      %985 = vmatmul.mubr.bf16.gmra.mrb[0].mxu0 %v774
      %v986 = vpop.f32.mrb[0].mxu0
      %v987 = vadd.f32 0.0, %v986
      %v988 = vpop.f32.mrb[0].mxu0
      %v989 = vpop.f32.mrb[0].mxu0
      %v990 = vadd.f32 0.0, %v989
      %v991 = vpop.f32.mrb[0].mxu0
      %992 = vmatprep.mubr.bf16.mxu0 %v777
      %993 = vmatmul.mubr.bf16.gmra.mrb[0].mxu0 %v776
      %v994 = vpop.f32.mrb[0].mxu0
      %v995 = vadd.f32 0.0, %v994
      %v996 = vpop.f32.mrb[0].mxu0
      %v997 = vpop.f32.mrb[0].mxu0
      %v998 = vadd.f32 0.0, %v997
      %v999 = vpop.f32.mrb[0].mxu0
      %1000 = vmatprep.mubr.bf16.mxu0 %v779
      %1001 = vmatmul.mubr.bf16.gmra.mrb[0].mxu0 %v778
      %v1002 = vpop.f32.mrb[0].mxu0
      %v1003 = vadd.f32 0.0, %v1002
      %v1004 = vpop.f32.mrb[0].mxu0
      %v1005 = vpop.f32.mrb[0].mxu0
      %v1006 = vadd.f32 0.0, %v1005
      %v1007 = vpop.f32.mrb[0].mxu0
      %1008 = vmatprep.mubr.bf16.mxu0 %v781
      %1009 = vmatmul.mubr.bf16.gmra.mrb[0].mxu0 %v780
      %v1010 = vpop.f32.mrb[0].mxu0
      %v1011 = vadd.f32 0.0, %v1010
      %v1012 = vpop.f32.mrb[0].mxu0
      %v1013 = vpop.f32.mrb[0].mxu0
      %v1014 = vadd.f32 0.0, %v1013
      %v1015 = vpop.f32.mrb[0].mxu0
      %1016 = vmatprep.mubr.bf16.mxu0 %v783
      %1017 = vmatmul.mubr.bf16.gmra.mrb[0].mxu0 %v782
      %v1018 = vpop.f32.mrb[0].mxu0
      %v1019 = vadd.f32 0.0, %v1018
      %v1020 = vpop.f32.mrb[0].mxu0
      %v1021 = vpop.f32.mrb[0].mxu0
      %v1022 = vadd.f32 0.0, %v1021
      %v1023 = vpop.f32.mrb[0].mxu0
      %1024 = vmatprep.mubr.bf16.mxu0 %v785
      %1025 = vmatmul.mubr.bf16.gmra.mrb[0].mxu0 %v784
      %v1026 = vpop.f32.mrb[0].mxu0
      %v1027 = vadd.f32 0.0, %v1026
      %v1028 = vpop.f32.mrb[0].mxu0
      %v1029 = vpop.f32.mrb[0].mxu0
      %v1030 = vadd.f32 0.0, %v1029
      %v1031 = vpop.f32.mrb[0].mxu0
      %1032 = vmatprep.mubr.bf16.mxu0 %v787
      %1033 = vmatmul.mubr.bf16.gmra.mrb[0].mxu0 %v786
      %v1034 = vpop.f32.mrb[0].mxu0
      %v1035 = vadd.f32 0.0, %v1034
      %v1036 = vpop.f32.mrb[0].mxu0
      %v1037 = vpop.f32.mrb[0].mxu0
      %v1038 = vadd.f32 0.0, %v1037
      %v1039 = vpop.f32.mrb[0].mxu0
      %1040 = vmatprep.mubr.bf16.mxu0 %v789
      %1041 = vmatmul.mubr.bf16.gmra.mrb[0].mxu0 %v788
      %v1042 = vpop.f32.mrb[0].mxu0
      %v1043 = vadd.f32 0.0, %v1042
      %v1044 = vpop.f32.mrb[0].mxu0
      %v1045 = vpop.f32.mrb[0].mxu0
      %v1046 = vadd.f32 0.0, %v1045
      %v1047 = vpop.f32.mrb[0].mxu0
      %1048 = vmatprep.mubr.bf16.mxu0 %v791
      %1049 = vmatmul.mubr.bf16.gmra.mrb[0].mxu0 %v790
      %v1050 = vpop.f32.mrb[0].mxu0
      %v1051 = vadd.f32 0.0, %v1050
      %v1052 = vpop.f32.mrb[0].mxu0
      %v1053 = vpop.f32.mrb[0].mxu0
      %v1054 = vadd.f32 0.0, %v1053
      %v1055 = vpop.f32.mrb[0].mxu0
      %1056 = vmatprep.mubr.bf16.mxu0 %v793
      %1057 = vmatmul.mubr.bf16.gmra.mrb[0].mxu0 %v792
      %v1058 = vpop.f32.mrb[0].mxu0
      %v1059 = vadd.f32 0.0, %v1058
      %v1060 = vpop.f32.mrb[0].mxu0
      %v1061 = vpop.f32.mrb[0].mxu0
      %v1062 = vadd.f32 0.0, %v1061
      %v1063 = vpop.f32.mrb[0].mxu0
      %1064 = vmatprep.mubr.bf16.mxu0 %v795
      %1065 = vmatmul.mubr.bf16.gmra.mrb[0].mxu0 %v794
      %v1066 = vpop.f32.mrb[0].mxu0
      %v1067 = vadd.f32 0.0, %v1066
      %v1068 = vpop.f32.mrb[0].mxu0
      %v1069 = vpop.f32.mrb[0].mxu0
      %v1070 = vadd.f32 0.0, %v1069
      %v1071 = vpop.f32.mrb[0].mxu0
      %1072 = vmatprep.mubr.bf16.mxu0 %v797
      %1073 = vmatmul.mubr.bf16.gmra.mrb[0].mxu0 %v796
      %v1074 = vpop.f32.mrb[0].mxu0
      %v1075 = vadd.f32 0.0, %v1074
      %v1076 = vpop.f32.mrb[0].mxu0
      %v1077 = vpop.f32.mrb[0].mxu0
      %v1078 = vadd.f32 0.0, %v1077
      %v1079 = vpop.f32.mrb[0].mxu0
      %1080 = vmatprep.mubr.bf16.mxu0 %v799
      %1081 = vmatmul.mubr.bf16.gmra.mrb[0].mxu0 %v798
      %v1082 = vpop.f32.mrb[0].mxu0
      %v1083 = vadd.f32 0.0, %v1082
      %v1084 = vpop.f32.mrb[0].mxu0
      %v1085 = vpop.f32.mrb[0].mxu0
      %v1086 = vadd.f32 0.0, %v1085
      %v1087 = vpop.f32.mrb[0].mxu0
      %1088 = vdwg.mxu0
      %1090 = vset.pattern.permute.xlu0 0
      %1091 = vperm.xlu0 %1090, %v608
      %v1092 = vpop.permute.xlu0 %1091
      %1095 = vset.pattern.permute.xlu0 0
      %1096 = vperm.xlu0 %1095, %v609
      %v1097 = vpop.permute.xlu0 %1096
      %1100 = vset.pattern.permute.xlu0 0
      %1101 = vperm.xlu0 %1100, %v610
      %v1102 = vpop.permute.xlu0 %1101
      %1105 = vset.pattern.permute.xlu0 0
      %1106 = vperm.xlu0 %1105, %v611
      %v1107 = vpop.permute.xlu0 %1106
      %1110 = vset.pattern.permute.xlu0 0
      %1111 = vperm.xlu0 %1110, %v612
      %v1112 = vpop.permute.xlu0 %1111
      %1115 = vset.pattern.permute.xlu0 0
      %1116 = vperm.xlu0 %1115, %v613
      %v1117 = vpop.permute.xlu0 %1116
      %1120 = vset.pattern.permute.xlu0 0
      %1121 = vperm.xlu0 %1120, %v614
      %v1122 = vpop.permute.xlu0 %1121
      %1125 = vset.pattern.permute.xlu0 0
      %1126 = vperm.xlu0 %1125, %v615
      %v1127 = vpop.permute.xlu0 %1126
      %1130 = vset.pattern.permute.xlu0 0
      %1131 = vperm.xlu0 %1130, %v616
      %v1132 = vpop.permute.xlu0 %1131
      %1135 = vset.pattern.permute.xlu0 0
      %1136 = vperm.xlu0 %1135, %v617
      %v1137 = vpop.permute.xlu0 %1136
      %1140 = vset.pattern.permute.xlu0 0
      %1141 = vperm.xlu0 %1140, %v618
      %v1142 = vpop.permute.xlu0 %1141
      %1145 = vset.pattern.permute.xlu0 0
      %1146 = vperm.xlu0 %1145, %v619
      %v1147 = vpop.permute.xlu0 %1146
      %1150 = vset.pattern.permute.xlu0 0
      %1151 = vperm.xlu0 %1150, %v620
      %v1152 = vpop.permute.xlu0 %1151
      %1155 = vset.pattern.permute.xlu0 0
      %1156 = vperm.xlu0 %1155, %v621
      %v1157 = vpop.permute.xlu0 %1156
      %1160 = vset.pattern.permute.xlu0 0
      %1161 = vperm.xlu0 %1160, %v622
      %v1162 = vpop.permute.xlu0 %1161
      %1165 = vset.pattern.permute.xlu0 0
      %1166 = vperm.xlu0 %1165, %v623
      %v1167 = vpop.permute.xlu0 %1166
      %1170 = vset.pattern.permute.xlu0 0
      %1171 = vperm.xlu0 %1170, %v624
      %v1172 = vpop.permute.xlu0 %1171
      %1175 = vset.pattern.permute.xlu0 0
      %1176 = vperm.xlu0 %1175, %v625
      %v1177 = vpop.permute.xlu0 %1176
      %1180 = vset.pattern.permute.xlu0 0
      %1181 = vperm.xlu0 %1180, %v626
      %v1182 = vpop.permute.xlu0 %1181
      %1185 = vset.pattern.permute.xlu0 0
      %1186 = vperm.xlu0 %1185, %v627
      %v1187 = vpop.permute.xlu0 %1186
      %1190 = vset.pattern.permute.xlu0 0
      %1191 = vperm.xlu0 %1190, %v628
      %v1192 = vpop.permute.xlu0 %1191
      %1195 = vset.pattern.permute.xlu0 0
      %1196 = vperm.xlu0 %1195, %v629
      %v1197 = vpop.permute.xlu0 %1196
      %1200 = vset.pattern.permute.xlu0 0
      %1201 = vperm.xlu0 %1200, %v630
      %v1202 = vpop.permute.xlu0 %1201
      %1205 = vset.pattern.permute.xlu0 0
      %1206 = vperm.xlu0 %1205, %v631
      %v1207 = vpop.permute.xlu0 %1206
      %1210 = vset.pattern.permute.xlu0 0
      %1211 = vperm.xlu0 %1210, %v632
      %v1212 = vpop.permute.xlu0 %1211
      %1215 = vset.pattern.permute.xlu0 0
      %1216 = vperm.xlu0 %1215, %v633
      %v1217 = vpop.permute.xlu0 %1216
      %1220 = vset.pattern.permute.xlu0 0
      %1221 = vperm.xlu0 %1220, %v634
      %v1222 = vpop.permute.xlu0 %1221
      %1225 = vset.pattern.permute.xlu0 0
      %1226 = vperm.xlu0 %1225, %v635
      %v1227 = vpop.permute.xlu0 %1226
      %1230 = vset.pattern.permute.xlu0 0
      %1231 = vperm.xlu0 %1230, %v636
      %v1232 = vpop.permute.xlu0 %1231
      %1235 = vset.pattern.permute.xlu0 0
      %1236 = vperm.xlu0 %1235, %v637
      %v1237 = vpop.permute.xlu0 %1236
      %1240 = vset.pattern.permute.xlu0 0
      %1241 = vperm.xlu0 %1240, %v638
      %v1242 = vpop.permute.xlu0 %1241
      %1245 = vset.pattern.permute.xlu0 0
      %1246 = vperm.xlu0 %1245, %v639
      %v1247 = vpop.permute.xlu0 %1246
      %v1249 = vmul.f32 %v963, %v1092
      %v1250 = vmul.f32 %v966, %v1097
      %v1251 = vmul.f32 %v971, %v1102
      %v1252 = vmul.f32 %v974, %v1107
      %v1253 = vmul.f32 %v979, %v1112
      %v1254 = vmul.f32 %v982, %v1117
      %v1255 = vmul.f32 %v987, %v1122
      %v1256 = vmul.f32 %v990, %v1127
      %v1257 = vmul.f32 %v995, %v1132
      %v1258 = vmul.f32 %v998, %v1137
      %v1259 = vmul.f32 %v1003, %v1142
      %v1260 = vmul.f32 %v1006, %v1147
      %v1261 = vmul.f32 %v1011, %v1152
      %v1262 = vmul.f32 %v1014, %v1157
      %v1263 = vmul.f32 %v1019, %v1162
      %v1264 = vmul.f32 %v1022, %v1167
      %v1265 = vmul.f32 %v1027, %v1172
      %v1266 = vmul.f32 %v1030, %v1177
      %v1267 = vmul.f32 %v1035, %v1182
      %v1268 = vmul.f32 %v1038, %v1187
      %v1269 = vmul.f32 %v1043, %v1192
      %v1270 = vmul.f32 %v1046, %v1197
      %v1271 = vmul.f32 %v1051, %v1202
      %v1272 = vmul.f32 %v1054, %v1207
      %v1273 = vmul.f32 %v1059, %v1212
      %v1274 = vmul.f32 %v1062, %v1217
      %v1275 = vmul.f32 %v1067, %v1222
      %v1276 = vmul.f32 %v1070, %v1227
      %v1277 = vmul.f32 %v1075, %v1232
      %v1278 = vmul.f32 %v1078, %v1237
      %v1279 = vmul.f32 %v1083, %v1242
      %v1280 = vmul.f32 %v1086, %v1247
      %v1281 = vld [vmem:[%s564] sm:$0xff]
      %v1282 = vld [vmem:[%s564 + $0x8] sm:$0xff]
      %v1283 = vld [vmem:[%s564 + $0x10] sm:$0xff]
      %v1284 = vld [vmem:[%s564 + $0x18] sm:$0xff]
      %v1285 = vld [vmem:[%s564 + $0x20] sm:$0xff]
      %v1286 = vld [vmem:[%s564 + $0x28] sm:$0xff]
      %v1287 = vld [vmem:[%s564 + $0x30] sm:$0xff]
      %v1288 = vld [vmem:[%s564 + $0x38] sm:$0xff]
      %v1289 = vld [vmem:[%s564 + $0x40] sm:$0xff]
      %v1290 = vld [vmem:[%s564 + $0x48] sm:$0xff]
      %v1291 = vld [vmem:[%s564 + $0x50] sm:$0xff]
      %v1292 = vld [vmem:[%s564 + $0x58] sm:$0xff]
      %v1293 = vld [vmem:[%s564 + $0x60] sm:$0xff]
      %v1294 = vld [vmem:[%s564 + $0x68] sm:$0xff]
      %v1295 = vld [vmem:[%s564 + $0x70] sm:$0xff]
      %v1296 = vld [vmem:[%s564 + $0x78] sm:$0xff]
      %v1297 = vld [vmem:[%s564 + $0x80] sm:$0xff]
      %v1298 = vld [vmem:[%s564 + $0x88] sm:$0xff]
      %v1299 = vld [vmem:[%s564 + $0x90] sm:$0xff]
      %v1300 = vld [vmem:[%s564 + $0x98] sm:$0xff]
      %v1301 = vld [vmem:[%s564 + $0xa0] sm:$0xff]
      %v1302 = vld [vmem:[%s564 + $0xa8] sm:$0xff]
      %v1303 = vld [vmem:[%s564 + $0xb0] sm:$0xff]
      %v1304 = vld [vmem:[%s564 + $0xb8] sm:$0xff]
      %v1305 = vld [vmem:[%s564 + $0xc0] sm:$0xff]
      %v1306 = vld [vmem:[%s564 + $0xc8] sm:$0xff]
      %v1307 = vld [vmem:[%s564 + $0xd0] sm:$0xff]
      %v1308 = vld [vmem:[%s564 + $0xd8] sm:$0xff]
      %v1309 = vld [vmem:[%s564 + $0xe0] sm:$0xff]
      %v1310 = vld [vmem:[%s564 + $0xe8] sm:$0xff]
      %v1311 = vld [vmem:[%s564 + $0xf0] sm:$0xff]
      %v1312 = vld [vmem:[%s564 + $0xf8] sm:$0xff]
      %v1313 = vadd.f32 %v1249, %v1281
      %v1314 = vadd.f32 %v1250, %v1282
      %v1315 = vadd.f32 %v1251, %v1283
      %v1316 = vadd.f32 %v1252, %v1284
      %v1317 = vadd.f32 %v1253, %v1285
      %v1318 = vadd.f32 %v1254, %v1286
      %v1319 = vadd.f32 %v1255, %v1287
      %v1320 = vadd.f32 %v1256, %v1288
      %v1321 = vadd.f32 %v1257, %v1289
      %v1322 = vadd.f32 %v1258, %v1290
      %v1323 = vadd.f32 %v1259, %v1291
      %v1324 = vadd.f32 %v1260, %v1292
      %v1325 = vadd.f32 %v1261, %v1293
      %v1326 = vadd.f32 %v1262, %v1294
      %v1327 = vadd.f32 %v1263, %v1295
      %v1328 = vadd.f32 %v1264, %v1296
      %v1329 = vadd.f32 %v1265, %v1297
      %v1330 = vadd.f32 %v1266, %v1298
      %v1331 = vadd.f32 %v1267, %v1299
      %v1332 = vadd.f32 %v1268, %v1300
      %v1333 = vadd.f32 %v1269, %v1301
      %v1334 = vadd.f32 %v1270, %v1302
      %v1335 = vadd.f32 %v1271, %v1303
      %v1336 = vadd.f32 %v1272, %v1304
      %v1337 = vadd.f32 %v1273, %v1305
      %v1338 = vadd.f32 %v1274, %v1306
      %v1339 = vadd.f32 %v1275, %v1307
      %v1340 = vadd.f32 %v1276, %v1308
      %v1341 = vadd.f32 %v1277, %v1309
      %v1342 = vadd.f32 %v1278, %v1310
      %v1343 = vadd.f32 %v1279, %v1311
      %v1344 = vadd.f32 %v1280, %v1312
      %v1345 = vmax.f32 %v1313, 0.0
      %v1346 = vmax.f32 %v1314, 0.0
      %v1347 = vmax.f32 %v1315, 0.0
      %v1348 = vmax.f32 %v1316, 0.0
      %v1349 = vmax.f32 %v1317, 0.0
      %v1350 = vmax.f32 %v1318, 0.0
      %v1351 = vmax.f32 %v1319, 0.0
      %v1352 = vmax.f32 %v1320, 0.0
      %v1353 = vmax.f32 %v1321, 0.0
      %v1354 = vmax.f32 %v1322, 0.0
      %v1355 = vmax.f32 %v1323, 0.0
      %v1356 = vmax.f32 %v1324, 0.0
      %v1357 = vmax.f32 %v1325, 0.0
      %v1358 = vmax.f32 %v1326, 0.0
      %v1359 = vmax.f32 %v1327, 0.0
      %v1360 = vmax.f32 %v1328, 0.0
      %v1361 = vmax.f32 %v1329, 0.0
      %v1362 = vmax.f32 %v1330, 0.0
      %v1363 = vmax.f32 %v1331, 0.0
      %v1364 = vmax.f32 %v1332, 0.0
      %v1365 = vmax.f32 %v1333, 0.0
      %v1366 = vmax.f32 %v1334, 0.0
      %v1367 = vmax.f32 %v1335, 0.0
      %v1368 = vmax.f32 %v1336, 0.0
      %v1369 = vmax.f32 %v1337, 0.0
      %v1370 = vmax.f32 %v1338, 0.0
      %v1371 = vmax.f32 %v1339, 0.0
      %v1372 = vmax.f32 %v1340, 0.0
      %v1373 = vmax.f32 %v1341, 0.0
      %v1374 = vmax.f32 %v1342, 0.0
      %v1375 = vmax.f32 %v1343, 0.0
      %v1376 = vmax.f32 %v1344, 0.0
      %v1377 = vpack.c.bf16 %v1346, %v1345
      %v1378 = vpack.c.bf16 %v1348, %v1347
      %v1379 = vpack.c.bf16 %v1350, %v1349
      %v1380 = vpack.c.bf16 %v1352, %v1351
      %v1381 = vpack.c.bf16 %v1354, %v1353
      %v1382 = vpack.c.bf16 %v1356, %v1355
      %v1383 = vpack.c.bf16 %v1358, %v1357
      %v1384 = vpack.c.bf16 %v1360, %v1359
      %v1385 = vpack.c.bf16 %v1362, %v1361
      %v1386 = vpack.c.bf16 %v1364, %v1363
      %v1387 = vpack.c.bf16 %v1366, %v1365
      %v1388 = vpack.c.bf16 %v1368, %v1367
      %v1389 = vpack.c.bf16 %v1370, %v1369
      %v1390 = vpack.c.bf16 %v1372, %v1371
      %v1391 = vpack.c.bf16 %v1374, %v1373
      %v1392 = vpack.c.bf16 %v1376, %v1375
      %1393 = vmatprep.subr.bf16.mxu0 0
      %1394 = vmatpush1.bf16.msra.mxu0 %v1377
      %1395 = vmatprep.subr.bf16.mxu0 0
      %1396 = vmatpush1.bf16.msra.mxu0 %v1378
      %1397 = vmatprep.subr.bf16.mxu0 0
      %1398 = vmatpush1.bf16.msra.mxu0 %v1379
      %1399 = vmatprep.subr.bf16.mxu0 0
      %1400 = vmatpush1.bf16.msra.mxu0 %v1380
      %1401 = vmatprep.subr.bf16.mxu0 0
      %1402 = vmatpush1.bf16.msra.mxu0 %v1381
      %1403 = vmatprep.subr.bf16.mxu0 0
      %1404 = vmatpush1.bf16.msra.mxu0 %v1382
      %1405 = vmatprep.subr.bf16.mxu0 0
      %1406 = vmatpush1.bf16.msra.mxu0 %v1383
      %1407 = vmatprep.subr.bf16.mxu0 0
      %1408 = vmatpush1.bf16.msra.mxu0 %v1384
      %1409 = vmatprep.subr.bf16.mxu0 0
      %1410 = vmatpush1.bf16.msra.mxu0 %v1385
      %1411 = vmatprep.subr.bf16.mxu0 0
      %1412 = vmatpush1.bf16.msra.mxu0 %v1386
      %1413 = vmatprep.subr.bf16.mxu0 0
      %1414 = vmatpush1.bf16.msra.mxu0 %v1387
      %1415 = vmatprep.subr.bf16.mxu0 0
      %1416 = vmatpush1.bf16.msra.mxu0 %v1388
      %1417 = vmatprep.subr.bf16.mxu0 0
      %1418 = vmatpush1.bf16.msra.mxu0 %v1389
      %1419 = vmatprep.subr.bf16.mxu0 0
      %1420 = vmatpush1.bf16.msra.mxu0 %v1390
      %1421 = vmatprep.subr.bf16.mxu0 0
      %1422 = vmatpush1.bf16.msra.mxu0 %v1391
      %1423 = vmatprep.subr.bf16.mxu0 0
      %1424 = vmatpush1.bf16.msra.mxu0 %v1392
      %1425 = vmatprep.mubr.bf16.mxu0 %v769
      %1426 = vmatmul.mubr.bf16.gmra.mrb[0].mxu0 %v768
      %v1427 = vpop.f32.mrb[0].mxu0
      %v1428 = vadd.f32 0.0, %v1427
      %v1429 = vpop.f32.mrb[0].mxu0
      %v1430 = vpop.f32.mrb[0].mxu0
      %v1431 = vadd.f32 0.0, %v1430
      %v1432 = vpop.f32.mrb[0].mxu0
      %1433 = vmatprep.mubr.bf16.mxu0 %v771
      %1434 = vmatmul.mubr.bf16.gmra.mrb[0].mxu0 %v770
      %v1435 = vpop.f32.mrb[0].mxu0
      %v1436 = vadd.f32 0.0, %v1435
      %v1437 = vpop.f32.mrb[0].mxu0
      %v1438 = vpop.f32.mrb[0].mxu0
      %v1439 = vadd.f32 0.0, %v1438
      %v1440 = vpop.f32.mrb[0].mxu0
      %1441 = vmatprep.mubr.bf16.mxu0 %v773
      %1442 = vmatmul.mubr.bf16.gmra.mrb[0].mxu0 %v772
      %v1443 = vpop.f32.mrb[0].mxu0
      %v1444 = vadd.f32 0.0, %v1443
      %v1445 = vpop.f32.mrb[0].mxu0
      %v1446 = vpop.f32.mrb[0].mxu0
      %v1447 = vadd.f32 0.0, %v1446
      %v1448 = vpop.f32.mrb[0].mxu0
      %1449 = vmatprep.mubr.bf16.mxu0 %v775
      %1450 = vmatmul.mubr.bf16.gmra.mrb[0].mxu0 %v774
      %v1451 = vpop.f32.mrb[0].mxu0
      %v1452 = vadd.f32 0.0, %v1451
      %v1453 = vpop.f32.mrb[0].mxu0
      %v1454 = vpop.f32.mrb[0].mxu0
      %v1455 = vadd.f32 0.0, %v1454
      %v1456 = vpop.f32.mrb[0].mxu0
      %1457 = vmatprep.mubr.bf16.mxu0 %v777
      %1458 = vmatmul.mubr.bf16.gmra.mrb[0].mxu0 %v776
      %v1459 = vpop.f32.mrb[0].mxu0
      %v1460 = vadd.f32 0.0, %v1459
      %v1461 = vpop.f32.mrb[0].mxu0
      %v1462 = vpop.f32.mrb[0].mxu0
      %v1463 = vadd.f32 0.0, %v1462
      %v1464 = vpop.f32.mrb[0].mxu0
      %1465 = vmatprep.mubr.bf16.mxu0 %v779
      %1466 = vmatmul.mubr.bf16.gmra.mrb[0].mxu0 %v778
      %v1467 = vpop.f32.mrb[0].mxu0
      %v1468 = vadd.f32 0.0, %v1467
      %v1469 = vpop.f32.mrb[0].mxu0
      %v1470 = vpop.f32.mrb[0].mxu0
      %v1471 = vadd.f32 0.0, %v1470
      %v1472 = vpop.f32.mrb[0].mxu0
      %1473 = vmatprep.mubr.bf16.mxu0 %v781
      %1474 = vmatmul.mubr.bf16.gmra.mrb[0].mxu0 %v780
      %v1475 = vpop.f32.mrb[0].mxu0
      %v1476 = vadd.f32 0.0, %v1475
      %v1477 = vpop.f32.mrb[0].mxu0
      %v1478 = vpop.f32.mrb[0].mxu0
      %v1479 = vadd.f32 0.0, %v1478
      %v1480 = vpop.f32.mrb[0].mxu0
      %1481 = vmatprep.mubr.bf16.mxu0 %v783
      %1482 = vmatmul.mubr.bf16.gmra.mrb[0].mxu0 %v782
      %v1483 = vpop.f32.mrb[0].mxu0
      %v1484 = vadd.f32 0.0, %v1483
      %v1485 = vpop.f32.mrb[0].mxu0
      %v1486 = vpop.f32.mrb[0].mxu0
      %v1487 = vadd.f32 0.0, %v1486
      %v1488 = vpop.f32.mrb[0].mxu0
      %1489 = vmatprep.mubr.bf16.mxu0 %v785
      %1490 = vmatmul.mubr.bf16.gmra.mrb[0].mxu0 %v784
      %v1491 = vpop.f32.mrb[0].mxu0
      %v1492 = vadd.f32 0.0, %v1491
      %v1493 = vpop.f32.mrb[0].mxu0
      %v1494 = vpop.f32.mrb[0].mxu0
      %v1495 = vadd.f32 0.0, %v1494
      %v1496 = vpop.f32.mrb[0].mxu0
      %1497 = vmatprep.mubr.bf16.mxu0 %v787
      %1498 = vmatmul.mubr.bf16.gmra.mrb[0].mxu0 %v786
      %v1499 = vpop.f32.mrb[0].mxu0
      %v1500 = vadd.f32 0.0, %v1499
      %v1501 = vpop.f32.mrb[0].mxu0
      %v1502 = vpop.f32.mrb[0].mxu0
      %v1503 = vadd.f32 0.0, %v1502
      %v1504 = vpop.f32.mrb[0].mxu0
      %1505 = vmatprep.mubr.bf16.mxu0 %v789
      %1506 = vmatmul.mubr.bf16.gmra.mrb[0].mxu0 %v788
      %v1507 = vpop.f32.mrb[0].mxu0
      %v1508 = vadd.f32 0.0, %v1507
      %v1509 = vpop.f32.mrb[0].mxu0
      %v1510 = vpop.f32.mrb[0].mxu0
      %v1511 = vadd.f32 0.0, %v1510
      %v1512 = vpop.f32.mrb[0].mxu0
      %1513 = vmatprep.mubr.bf16.mxu0 %v791
      %1514 = vmatmul.mubr.bf16.gmra.mrb[0].mxu0 %v790
      %v1515 = vpop.f32.mrb[0].mxu0
      %v1516 = vadd.f32 0.0, %v1515
      %v1517 = vpop.f32.mrb[0].mxu0
      %v1518 = vpop.f32.mrb[0].mxu0
      %v1519 = vadd.f32 0.0, %v1518
      %v1520 = vpop.f32.mrb[0].mxu0
      %1521 = vmatprep.mubr.bf16.mxu0 %v793
      %1522 = vmatmul.mubr.bf16.gmra.mrb[0].mxu0 %v792
      %v1523 = vpop.f32.mrb[0].mxu0
      %v1524 = vadd.f32 0.0, %v1523
      %v1525 = vpop.f32.mrb[0].mxu0
      %v1526 = vpop.f32.mrb[0].mxu0
      %v1527 = vadd.f32 0.0, %v1526
      %v1528 = vpop.f32.mrb[0].mxu0
      %1529 = vmatprep.mubr.bf16.mxu0 %v795
      %1530 = vmatmul.mubr.bf16.gmra.mrb[0].mxu0 %v794
      %v1531 = vpop.f32.mrb[0].mxu0
      %v1532 = vadd.f32 0.0, %v1531
      %v1533 = vpop.f32.mrb[0].mxu0
      %v1534 = vpop.f32.mrb[0].mxu0
      %v1535 = vadd.f32 0.0, %v1534
      %v1536 = vpop.f32.mrb[0].mxu0
      %1537 = vmatprep.mubr.bf16.mxu0 %v797
      %1538 = vmatmul.mubr.bf16.gmra.mrb[0].mxu0 %v796
      %v1539 = vpop.f32.mrb[0].mxu0
      %v1540 = vadd.f32 0.0, %v1539
      %v1541 = vpop.f32.mrb[0].mxu0
      %v1542 = vpop.f32.mrb[0].mxu0
      %v1543 = vadd.f32 0.0, %v1542
      %v1544 = vpop.f32.mrb[0].mxu0
      %1545 = vmatprep.mubr.bf16.mxu0 %v799
      %1546 = vmatmul.mubr.bf16.gmra.mrb[0].mxu0 %v798
      %v1547 = vpop.f32.mrb[0].mxu0
      %v1548 = vadd.f32 0.0, %v1547
      %v1549 = vpop.f32.mrb[0].mxu0
      %v1550 = vpop.f32.mrb[0].mxu0
      %v1551 = vadd.f32 0.0, %v1550
      %v1552 = vpop.f32.mrb[0].mxu0
      %1553 = vdwg.mxu0
      %v1554 = vmul.f32 %v1428, %v1092
      %v1555 = vmul.f32 %v1431, %v1097
      %v1556 = vmul.f32 %v1436, %v1102
      %v1557 = vmul.f32 %v1439, %v1107
      %v1558 = vmul.f32 %v1444, %v1112
      %v1559 = vmul.f32 %v1447, %v1117
      %v1560 = vmul.f32 %v1452, %v1122
      %v1561 = vmul.f32 %v1455, %v1127
      %v1562 = vmul.f32 %v1460, %v1132
      %v1563 = vmul.f32 %v1463, %v1137
      %v1564 = vmul.f32 %v1468, %v1142
      %v1565 = vmul.f32 %v1471, %v1147
      %v1566 = vmul.f32 %v1476, %v1152
      %v1567 = vmul.f32 %v1479, %v1157
      %v1568 = vmul.f32 %v1484, %v1162
      %v1569 = vmul.f32 %v1487, %v1167
      %v1570 = vmul.f32 %v1492, %v1172
      %v1571 = vmul.f32 %v1495, %v1177
      %v1572 = vmul.f32 %v1500, %v1182
      %v1573 = vmul.f32 %v1503, %v1187
      %v1574 = vmul.f32 %v1508, %v1192
      %v1575 = vmul.f32 %v1511, %v1197
      %v1576 = vmul.f32 %v1516, %v1202
      %v1577 = vmul.f32 %v1519, %v1207
      %v1578 = vmul.f32 %v1524, %v1212
      %v1579 = vmul.f32 %v1527, %v1217
      %v1580 = vmul.f32 %v1532, %v1222
      %v1581 = vmul.f32 %v1535, %v1227
      %v1582 = vmul.f32 %v1540, %v1232
      %v1583 = vmul.f32 %v1543, %v1237
      %v1584 = vmul.f32 %v1548, %v1242
      %v1585 = vmul.f32 %v1551, %v1247
      %v1586 = vpack.c.bf16 %v1555, %v1554
      %v1587 = vpack.c.bf16 %v1557, %v1556
      %v1588 = vpack.c.bf16 %v1559, %v1558
      %v1589 = vpack.c.bf16 %v1561, %v1560
      %v1590 = vpack.c.bf16 %v1563, %v1562
      %v1591 = vpack.c.bf16 %v1565, %v1564
      %v1592 = vpack.c.bf16 %v1567, %v1566
      %v1593 = vpack.c.bf16 %v1569, %v1568
      %v1594 = vpack.c.bf16 %v1571, %v1570
      %v1595 = vpack.c.bf16 %v1573, %v1572
      %v1596 = vpack.c.bf16 %v1575, %v1574
      %v1597 = vpack.c.bf16 %v1577, %v1576
      %v1598 = vpack.c.bf16 %v1579, %v1578
      %v1599 = vpack.c.bf16 %v1581, %v1580
      %v1600 = vpack.c.bf16 %v1583, %v1582
      %v1601 = vpack.c.bf16 %v1585, %v1584
      %v1602 = vld [vmem:[%s5] sm:$0xf]
      %v1603 = vld [vmem:[%s5 + $0x4] sm:$0xf]
      %v1604 = vld [vmem:[%s5 + $0x8] sm:$0xf]
      %v1605 = vld [vmem:[%s5 + $0xc] sm:$0xf]
      %v1606 = vld [vmem:[%s5 + $0x10] sm:$0xf]
      %v1607 = vld [vmem:[%s5 + $0x14] sm:$0xf]
      %v1608 = vld [vmem:[%s5 + $0x18] sm:$0xf]
      %v1609 = vld [vmem:[%s5 + $0x1c] sm:$0xf]
      %v1610 = vld [vmem:[%s5 + $0x20] sm:$0xf]
      %v1611 = vld [vmem:[%s5 + $0x24] sm:$0xf]
      %v1612 = vld [vmem:[%s5 + $0x28] sm:$0xf]
      %v1613 = vld [vmem:[%s5 + $0x2c] sm:$0xf]
      %v1614 = vld [vmem:[%s5 + $0x30] sm:$0xf]
      %v1615 = vld [vmem:[%s5 + $0x34] sm:$0xf]
      %v1616 = vld [vmem:[%s5 + $0x38] sm:$0xf]
      %v1617 = vld [vmem:[%s5 + $0x3c] sm:$0xf]
      %v1618 = vld [vmem:[%s6] sm:$0x1]
      %v1620 = vlaneseq
      %v1621 = vshrl.u32 %v1620, 7
      %v1622 = vsub.s32 0, %v1621
      %v1623 = vrot.slane %v1618, %v1622
      %v1641 = vunpack.c.l.b16 %v1602
      %v1642 = vunpack.c.l.b16 %v1603
      %v1643 = vunpack.c.l.b16 %v1604
      %v1644 = vunpack.c.l.b16 %v1605
      %v1645 = vunpack.c.l.b16 %v1606
      %v1646 = vunpack.c.l.b16 %v1607
      %v1647 = vunpack.c.l.b16 %v1608
      %v1648 = vunpack.c.l.b16 %v1609
      %v1649 = vunpack.c.l.b16 %v1610
      %v1650 = vunpack.c.l.b16 %v1611
      %v1651 = vunpack.c.l.b16 %v1612
      %v1652 = vunpack.c.l.b16 %v1613
      %v1653 = vunpack.c.l.b16 %v1614
      %v1654 = vunpack.c.l.b16 %v1615
      %v1655 = vunpack.c.l.b16 %v1616
      %v1656 = vunpack.c.l.b16 %v1617
      %v1657 = vpack.c.b16 %v1642, %v1641
      %v1658 = vpack.c.b16 %v1644, %v1643
      %v1659 = vpack.c.b16 %v1646, %v1645
      %v1660 = vpack.c.b16 %v1648, %v1647
      %v1661 = vpack.c.b16 %v1650, %v1649
      %v1662 = vpack.c.b16 %v1652, %v1651
      %v1663 = vpack.c.b16 %v1654, %v1653
      %v1664 = vpack.c.b16 %v1656, %v1655
      %1673 = vmatprep.subr.bf16.mxu0 0
      %1674 = vmatpush1.bf16.msra.mxu0 %v1657
      %1675 = vmatprep.subr.bf16.mxu0 0
      %1676 = vmatpush1.bf16.msra.mxu0 %v1658
      %1677 = vmatprep.subr.bf16.mxu0 0
      %1678 = vmatpush1.bf16.msra.mxu0 %v1659
      %1679 = vmatprep.subr.bf16.mxu0 0
      %1680 = vmatpush1.bf16.msra.mxu0 %v1660
      %1681 = vmatprep.subr.bf16.mxu0 0
      %1682 = vmatpush1.bf16.msra.mxu0 %v1661
      %1683 = vmatprep.subr.bf16.mxu0 0
      %1684 = vmatpush1.bf16.msra.mxu0 %v1662
      %1685 = vmatprep.subr.bf16.mxu0 0
      %1686 = vmatpush1.bf16.msra.mxu0 %v1663
      %1687 = vmatprep.subr.bf16.mxu0 0
      %1688 = vmatpush1.bf16.msra.mxu0 %v1664
      %1689 = vmatprep.subr.bf16.mxu0 0
      %1690 = vmatpush1.bf16.msra.mxu0 0
      %1691 = vmatprep.subr.bf16.mxu0 0
      %1692 = vmatpush1.bf16.msra.mxu0 0
      %1693 = vmatprep.subr.bf16.mxu0 0
      %1694 = vmatpush1.bf16.msra.mxu0 0
      %1695 = vmatprep.subr.bf16.mxu0 0
      %1696 = vmatpush1.bf16.msra.mxu0 0
      %1697 = vmatprep.subr.bf16.mxu0 0
      %1698 = vmatpush1.bf16.msra.mxu0 0
      %1699 = vmatprep.subr.bf16.mxu0 0
      %1700 = vmatpush1.bf16.msra.mxu0 0
      %1701 = vmatprep.subr.bf16.mxu0 0
      %1702 = vmatpush1.bf16.msra.mxu0 0
      %1703 = vmatprep.subr.bf16.mxu0 0
      %1704 = vmatpush1.bf16.msra.mxu0 0
      %1705 = vmatprep.mubr.bf16.mxu0 0
      %1706 = vmatmul.mubr.bf16.gmra.mrb[0].mxu0 %v1586
      %v1707 = vpop.f32.mrb[0].mxu0
      %v1708 = vadd.f32 %v1623, %v1707
      %v1709 = vpop.f32.mrb[0].mxu0
      %v1710 = vpop.f32.mrb[0].mxu0
      %v1711 = vadd.f32 %v1623, %v1710
      %v1712 = vpop.f32.mrb[0].mxu0
      %1713 = vmatprep.mubr.bf16.mxu0 0
      %1714 = vmatmul.mubr.bf16.gmra.mrb[0].mxu0 %v1587
      %v1715 = vpop.f32.mrb[0].mxu0
      %v1716 = vadd.f32 %v1623, %v1715
      %v1717 = vpop.f32.mrb[0].mxu0
      %v1718 = vpop.f32.mrb[0].mxu0
      %v1719 = vadd.f32 %v1623, %v1718
      %v1720 = vpop.f32.mrb[0].mxu0
      %1721 = vmatprep.mubr.bf16.mxu0 0
      %1722 = vmatmul.mubr.bf16.gmra.mrb[0].mxu0 %v1588
      %v1723 = vpop.f32.mrb[0].mxu0
      %v1724 = vadd.f32 %v1623, %v1723
      %v1725 = vpop.f32.mrb[0].mxu0
      %v1726 = vpop.f32.mrb[0].mxu0
      %v1727 = vadd.f32 %v1623, %v1726
      %v1728 = vpop.f32.mrb[0].mxu0
      %1729 = vmatprep.mubr.bf16.mxu0 0
      %1730 = vmatmul.mubr.bf16.gmra.mrb[0].mxu0 %v1589
      %v1731 = vpop.f32.mrb[0].mxu0
      %v1732 = vadd.f32 %v1623, %v1731
      %v1733 = vpop.f32.mrb[0].mxu0
      %v1734 = vpop.f32.mrb[0].mxu0
      %v1735 = vadd.f32 %v1623, %v1734
      %v1736 = vpop.f32.mrb[0].mxu0
      %1737 = vmatprep.mubr.bf16.mxu0 0
      %1738 = vmatmul.mubr.bf16.gmra.mrb[0].mxu0 %v1590
      %v1739 = vpop.f32.mrb[0].mxu0
      %v1740 = vadd.f32 %v1623, %v1739
      %v1741 = vpop.f32.mrb[0].mxu0
      %v1742 = vpop.f32.mrb[0].mxu0
      %v1743 = vadd.f32 %v1623, %v1742
      %v1744 = vpop.f32.mrb[0].mxu0
      %1745 = vmatprep.mubr.bf16.mxu0 0
      %1746 = vmatmul.mubr.bf16.gmra.mrb[0].mxu0 %v1591
      %v1747 = vpop.f32.mrb[0].mxu0
      %v1748 = vadd.f32 %v1623, %v1747
      %v1749 = vpop.f32.mrb[0].mxu0
      %v1750 = vpop.f32.mrb[0].mxu0
      %v1751 = vadd.f32 %v1623, %v1750
      %v1752 = vpop.f32.mrb[0].mxu0
      %1753 = vmatprep.mubr.bf16.mxu0 0
      %1754 = vmatmul.mubr.bf16.gmra.mrb[0].mxu0 %v1592
      %v1755 = vpop.f32.mrb[0].mxu0
      %v1756 = vadd.f32 %v1623, %v1755
      %v1757 = vpop.f32.mrb[0].mxu0
      %v1758 = vpop.f32.mrb[0].mxu0
      %v1759 = vadd.f32 %v1623, %v1758
      %v1760 = vpop.f32.mrb[0].mxu0
      %1761 = vmatprep.mubr.bf16.mxu0 0
      %1762 = vmatmul.mubr.bf16.gmra.mrb[0].mxu0 %v1593
      %v1763 = vpop.f32.mrb[0].mxu0
      %v1764 = vadd.f32 %v1623, %v1763
      %v1765 = vpop.f32.mrb[0].mxu0
      %v1766 = vpop.f32.mrb[0].mxu0
      %v1767 = vadd.f32 %v1623, %v1766
      %v1768 = vpop.f32.mrb[0].mxu0
      %1769 = vmatprep.mubr.bf16.mxu0 0
      %1770 = vmatmul.mubr.bf16.gmra.mrb[0].mxu0 %v1594
      %v1771 = vpop.f32.mrb[0].mxu0
      %v1772 = vadd.f32 %v1623, %v1771
      %v1773 = vpop.f32.mrb[0].mxu0
      %v1774 = vpop.f32.mrb[0].mxu0
      %v1775 = vadd.f32 %v1623, %v1774
      %v1776 = vpop.f32.mrb[0].mxu0
      %1777 = vmatprep.mubr.bf16.mxu0 0
      %1778 = vmatmul.mubr.bf16.gmra.mrb[0].mxu0 %v1595
      %v1779 = vpop.f32.mrb[0].mxu0
      %v1780 = vadd.f32 %v1623, %v1779
      %v1781 = vpop.f32.mrb[0].mxu0
      %v1782 = vpop.f32.mrb[0].mxu0
      %v1783 = vadd.f32 %v1623, %v1782
      %v1784 = vpop.f32.mrb[0].mxu0
      %1785 = vmatprep.mubr.bf16.mxu0 0
      %1786 = vmatmul.mubr.bf16.gmra.mrb[0].mxu0 %v1596
      %v1787 = vpop.f32.mrb[0].mxu0
      %v1788 = vadd.f32 %v1623, %v1787
      %v1789 = vpop.f32.mrb[0].mxu0
      %v1790 = vpop.f32.mrb[0].mxu0
      %v1791 = vadd.f32 %v1623, %v1790
      %v1792 = vpop.f32.mrb[0].mxu0
      %1793 = vmatprep.mubr.bf16.mxu0 0
      %1794 = vmatmul.mubr.bf16.gmra.mrb[0].mxu0 %v1597
      %v1795 = vpop.f32.mrb[0].mxu0
      %v1796 = vadd.f32 %v1623, %v1795
      %v1797 = vpop.f32.mrb[0].mxu0
      %v1798 = vpop.f32.mrb[0].mxu0
      %v1799 = vadd.f32 %v1623, %v1798
      %v1800 = vpop.f32.mrb[0].mxu0
      %1801 = vmatprep.mubr.bf16.mxu0 0
      %1802 = vmatmul.mubr.bf16.gmra.mrb[0].mxu0 %v1598
      %v1803 = vpop.f32.mrb[0].mxu0
      %v1804 = vadd.f32 %v1623, %v1803
      %v1805 = vpop.f32.mrb[0].mxu0
      %v1806 = vpop.f32.mrb[0].mxu0
      %v1807 = vadd.f32 %v1623, %v1806
      %v1808 = vpop.f32.mrb[0].mxu0
      %1809 = vmatprep.mubr.bf16.mxu0 0
      %1810 = vmatmul.mubr.bf16.gmra.mrb[0].mxu0 %v1599
      %v1811 = vpop.f32.mrb[0].mxu0
      %v1812 = vadd.f32 %v1623, %v1811
      %v1813 = vpop.f32.mrb[0].mxu0
      %v1814 = vpop.f32.mrb[0].mxu0
      %v1815 = vadd.f32 %v1623, %v1814
      %v1816 = vpop.f32.mrb[0].mxu0
      %1817 = vmatprep.mubr.bf16.mxu0 0
      %1818 = vmatmul.mubr.bf16.gmra.mrb[0].mxu0 %v1600
      %v1819 = vpop.f32.mrb[0].mxu0
      %v1820 = vadd.f32 %v1623, %v1819
      %v1821 = vpop.f32.mrb[0].mxu0
      %v1822 = vpop.f32.mrb[0].mxu0
      %v1823 = vadd.f32 %v1623, %v1822
      %v1824 = vpop.f32.mrb[0].mxu0
      %1825 = vmatprep.mubr.bf16.mxu0 0
      %1826 = vmatmul.mubr.bf16.gmra.mrb[0].mxu0 %v1601
      %v1827 = vpop.f32.mrb[0].mxu0
      %v1828 = vadd.f32 %v1623, %v1827
      %v1829 = vpop.f32.mrb[0].mxu0
      %v1830 = vpop.f32.mrb[0].mxu0
      %v1831 = vadd.f32 %v1623, %v1830
      %v1832 = vpop.f32.mrb[0].mxu0
      %1833 = vdwg.mxu0
      %v1834 = vld [vmem:[%s7] sm:$0xf]
      %v1835 = vld [vmem:[%s7 + $0x4] sm:$0xf]
      %v1836 = vld [vmem:[%s7 + $0x8] sm:$0xf]
      %v1837 = vld [vmem:[%s7 + $0xc] sm:$0xf]
      %v1838 = vld [vmem:[%s7 + $0x10] sm:$0xf]
      %v1839 = vld [vmem:[%s7 + $0x14] sm:$0xf]
      %v1840 = vld [vmem:[%s7 + $0x18] sm:$0xf]
      %v1841 = vld [vmem:[%s7 + $0x1c] sm:$0xf]
      %v1842 = vld [vmem:[%s7 + $0x20] sm:$0xf]
      %v1843 = vld [vmem:[%s7 + $0x24] sm:$0xf]
      %v1844 = vld [vmem:[%s7 + $0x28] sm:$0xf]
      %v1845 = vld [vmem:[%s7 + $0x2c] sm:$0xf]
      %v1846 = vld [vmem:[%s7 + $0x30] sm:$0xf]
      %v1847 = vld [vmem:[%s7 + $0x34] sm:$0xf]
      %v1848 = vld [vmem:[%s7 + $0x38] sm:$0xf]
      %v1849 = vld [vmem:[%s7 + $0x3c] sm:$0xf]
      %v1866 = vunpack.c.l.b16 %v1834
      %v1867 = vunpack.c.l.b16 %v1835
      %v1868 = vunpack.c.l.b16 %v1836
      %v1869 = vunpack.c.l.b16 %v1837
      %v1870 = vunpack.c.l.b16 %v1838
      %v1871 = vunpack.c.l.b16 %v1839
      %v1872 = vunpack.c.l.b16 %v1840
      %v1873 = vunpack.c.l.b16 %v1841
      %v1874 = vunpack.c.l.b16 %v1842
      %v1875 = vunpack.c.l.b16 %v1843
      %v1876 = vunpack.c.l.b16 %v1844
      %v1877 = vunpack.c.l.b16 %v1845
      %v1878 = vunpack.c.l.b16 %v1846
      %v1879 = vunpack.c.l.b16 %v1847
      %v1880 = vunpack.c.l.b16 %v1848
      %v1881 = vunpack.c.l.b16 %v1849
      %v1882 = vpack.c.b16 %v1867, %v1866
      %v1883 = vpack.c.b16 %v1869, %v1868
      %v1884 = vpack.c.b16 %v1871, %v1870
      %v1885 = vpack.c.b16 %v1873, %v1872
      %v1886 = vpack.c.b16 %v1875, %v1874
      %v1887 = vpack.c.b16 %v1877, %v1876
      %v1888 = vpack.c.b16 %v1879, %v1878
      %v1889 = vpack.c.b16 %v1881, %v1880
      %1898 = vmatprep.subr.bf16.mxu0 0
      %1899 = vmatpush1.bf16.msra.mxu0 %v1882
      %1900 = vmatprep.subr.bf16.mxu0 0
      %1901 = vmatpush1.bf16.msra.mxu0 %v1883
      %1902 = vmatprep.subr.bf16.mxu0 0
      %1903 = vmatpush1.bf16.msra.mxu0 %v1884
      %1904 = vmatprep.subr.bf16.mxu0 0
      %1905 = vmatpush1.bf16.msra.mxu0 %v1885
      %1906 = vmatprep.subr.bf16.mxu0 0
      %1907 = vmatpush1.bf16.msra.mxu0 %v1886
      %1908 = vmatprep.subr.bf16.mxu0 0
      %1909 = vmatpush1.bf16.msra.mxu0 %v1887
      %1910 = vmatprep.subr.bf16.mxu0 0
      %1911 = vmatpush1.bf16.msra.mxu0 %v1888
      %1912 = vmatprep.subr.bf16.mxu0 0
      %1913 = vmatpush1.bf16.msra.mxu0 %v1889
      %1914 = vmatprep.subr.bf16.mxu0 0
      %1915 = vmatpush1.bf16.msra.mxu0 0
      %1916 = vmatprep.subr.bf16.mxu0 0
      %1917 = vmatpush1.bf16.msra.mxu0 0
      %1918 = vmatprep.subr.bf16.mxu0 0
      %1919 = vmatpush1.bf16.msra.mxu0 0
      %1920 = vmatprep.subr.bf16.mxu0 0
      %1921 = vmatpush1.bf16.msra.mxu0 0
      %1922 = vmatprep.subr.bf16.mxu0 0
      %1923 = vmatpush1.bf16.msra.mxu0 0
      %1924 = vmatprep.subr.bf16.mxu0 0
      %1925 = vmatpush1.bf16.msra.mxu0 0
      %1926 = vmatprep.subr.bf16.mxu0 0
      %1927 = vmatpush1.bf16.msra.mxu0 0
      %1928 = vmatprep.subr.bf16.mxu0 0
      %1929 = vmatpush1.bf16.msra.mxu0 0
      %1930 = vmatprep.mubr.bf16.mxu0 0
      %1931 = vmatmul.mubr.bf16.gmra.mrb[0].mxu0 %v1377
      %v1932 = vpop.f32.mrb[0].mxu0
      %v1933 = vadd.f32 0.0, %v1932
      %v1934 = vpop.f32.mrb[0].mxu0
      %v1935 = vpop.f32.mrb[0].mxu0
      %v1936 = vadd.f32 0.0, %v1935
      %v1937 = vpop.f32.mrb[0].mxu0
      %1938 = vmatprep.mubr.bf16.mxu0 0
      %1939 = vmatmul.mubr.bf16.gmra.mrb[0].mxu0 %v1378
      %v1940 = vpop.f32.mrb[0].mxu0
      %v1941 = vadd.f32 0.0, %v1940
      %v1942 = vpop.f32.mrb[0].mxu0
      %v1943 = vpop.f32.mrb[0].mxu0
      %v1944 = vadd.f32 0.0, %v1943
      %v1945 = vpop.f32.mrb[0].mxu0
      %1946 = vmatprep.mubr.bf16.mxu0 0
      %1947 = vmatmul.mubr.bf16.gmra.mrb[0].mxu0 %v1379
      %v1948 = vpop.f32.mrb[0].mxu0
      %v1949 = vadd.f32 0.0, %v1948
      %v1950 = vpop.f32.mrb[0].mxu0
      %v1951 = vpop.f32.mrb[0].mxu0
      %v1952 = vadd.f32 0.0, %v1951
      %v1953 = vpop.f32.mrb[0].mxu0
      %1954 = vmatprep.mubr.bf16.mxu0 0
      %1955 = vmatmul.mubr.bf16.gmra.mrb[0].mxu0 %v1380
      %v1956 = vpop.f32.mrb[0].mxu0
      %v1957 = vadd.f32 0.0, %v1956
      %v1958 = vpop.f32.mrb[0].mxu0
      %v1959 = vpop.f32.mrb[0].mxu0
      %v1960 = vadd.f32 0.0, %v1959
      %v1961 = vpop.f32.mrb[0].mxu0
      %1962 = vmatprep.mubr.bf16.mxu0 0
      %1963 = vmatmul.mubr.bf16.gmra.mrb[0].mxu0 %v1381
      %v1964 = vpop.f32.mrb[0].mxu0
      %v1965 = vadd.f32 0.0, %v1964
      %v1966 = vpop.f32.mrb[0].mxu0
      %v1967 = vpop.f32.mrb[0].mxu0
      %v1968 = vadd.f32 0.0, %v1967
      %v1969 = vpop.f32.mrb[0].mxu0
      %1970 = vmatprep.mubr.bf16.mxu0 0
      %1971 = vmatmul.mubr.bf16.gmra.mrb[0].mxu0 %v1382
      %v1972 = vpop.f32.mrb[0].mxu0
      %v1973 = vadd.f32 0.0, %v1972
      %v1974 = vpop.f32.mrb[0].mxu0
      %v1975 = vpop.f32.mrb[0].mxu0
      %v1976 = vadd.f32 0.0, %v1975
      %v1977 = vpop.f32.mrb[0].mxu0
      %1978 = vmatprep.mubr.bf16.mxu0 0
      %1979 = vmatmul.mubr.bf16.gmra.mrb[0].mxu0 %v1383
      %v1980 = vpop.f32.mrb[0].mxu0
      %v1981 = vadd.f32 0.0, %v1980
      %v1982 = vpop.f32.mrb[0].mxu0
      %v1983 = vpop.f32.mrb[0].mxu0
      %v1984 = vadd.f32 0.0, %v1983
      %v1985 = vpop.f32.mrb[0].mxu0
      %1986 = vmatprep.mubr.bf16.mxu0 0
      %1987 = vmatmul.mubr.bf16.gmra.mrb[0].mxu0 %v1384
      %v1988 = vpop.f32.mrb[0].mxu0
      %v1989 = vadd.f32 0.0, %v1988
      %v1990 = vpop.f32.mrb[0].mxu0
      %v1991 = vpop.f32.mrb[0].mxu0
      %v1992 = vadd.f32 0.0, %v1991
      %v1993 = vpop.f32.mrb[0].mxu0
      %1994 = vmatprep.mubr.bf16.mxu0 0
      %1995 = vmatmul.mubr.bf16.gmra.mrb[0].mxu0 %v1385
      %v1996 = vpop.f32.mrb[0].mxu0
      %v1997 = vadd.f32 0.0, %v1996
      %v1998 = vpop.f32.mrb[0].mxu0
      %v1999 = vpop.f32.mrb[0].mxu0
      %v2000 = vadd.f32 0.0, %v1999
      %v2001 = vpop.f32.mrb[0].mxu0
      %2002 = vmatprep.mubr.bf16.mxu0 0
      %2003 = vmatmul.mubr.bf16.gmra.mrb[0].mxu0 %v1386
      %v2004 = vpop.f32.mrb[0].mxu0
      %v2005 = vadd.f32 0.0, %v2004
      %v2006 = vpop.f32.mrb[0].mxu0
      %v2007 = vpop.f32.mrb[0].mxu0
      %v2008 = vadd.f32 0.0, %v2007
      %v2009 = vpop.f32.mrb[0].mxu0
      %2010 = vmatprep.mubr.bf16.mxu0 0
      %2011 = vmatmul.mubr.bf16.gmra.mrb[0].mxu0 %v1387
      %v2012 = vpop.f32.mrb[0].mxu0
      %v2013 = vadd.f32 0.0, %v2012
      %v2014 = vpop.f32.mrb[0].mxu0
      %v2015 = vpop.f32.mrb[0].mxu0
      %v2016 = vadd.f32 0.0, %v2015
      %v2017 = vpop.f32.mrb[0].mxu0
      %2018 = vmatprep.mubr.bf16.mxu0 0
      %2019 = vmatmul.mubr.bf16.gmra.mrb[0].mxu0 %v1388
      %v2020 = vpop.f32.mrb[0].mxu0
      %v2021 = vadd.f32 0.0, %v2020
      %v2022 = vpop.f32.mrb[0].mxu0
      %v2023 = vpop.f32.mrb[0].mxu0
      %v2024 = vadd.f32 0.0, %v2023
      %v2025 = vpop.f32.mrb[0].mxu0
      %2026 = vmatprep.mubr.bf16.mxu0 0
      %2027 = vmatmul.mubr.bf16.gmra.mrb[0].mxu0 %v1389
      %v2028 = vpop.f32.mrb[0].mxu0
      %v2029 = vadd.f32 0.0, %v2028
      %v2030 = vpop.f32.mrb[0].mxu0
      %v2031 = vpop.f32.mrb[0].mxu0
      %v2032 = vadd.f32 0.0, %v2031
      %v2033 = vpop.f32.mrb[0].mxu0
      %2034 = vmatprep.mubr.bf16.mxu0 0
      %2035 = vmatmul.mubr.bf16.gmra.mrb[0].mxu0 %v1390
      %v2036 = vpop.f32.mrb[0].mxu0
      %v2037 = vadd.f32 0.0, %v2036
      %v2038 = vpop.f32.mrb[0].mxu0
      %v2039 = vpop.f32.mrb[0].mxu0
      %v2040 = vadd.f32 0.0, %v2039
      %v2041 = vpop.f32.mrb[0].mxu0
      %2042 = vmatprep.mubr.bf16.mxu0 0
      %2043 = vmatmul.mubr.bf16.gmra.mrb[0].mxu0 %v1391
      %v2044 = vpop.f32.mrb[0].mxu0
      %v2045 = vadd.f32 0.0, %v2044
      %v2046 = vpop.f32.mrb[0].mxu0
      %v2047 = vpop.f32.mrb[0].mxu0
      %v2048 = vadd.f32 0.0, %v2047
      %v2049 = vpop.f32.mrb[0].mxu0
      %2050 = vmatprep.mubr.bf16.mxu0 0
      %2051 = vmatmul.mubr.bf16.gmra.mrb[0].mxu0 %v1392
      %v2052 = vpop.f32.mrb[0].mxu0
      %v2053 = vadd.f32 0.0, %v2052
      %v2054 = vpop.f32.mrb[0].mxu0
      %v2055 = vpop.f32.mrb[0].mxu0
      %v2056 = vadd.f32 0.0, %v2055
      %v2057 = vpop.f32.mrb[0].mxu0
      %2058 = vdwg.mxu0
      %v2059 = vadd.f32 %v1708, %v1933
      %v2060 = vadd.f32 %v1711, %v1936
      %v2061 = vadd.f32 %v1716, %v1941
      %v2062 = vadd.f32 %v1719, %v1944
      %v2063 = vadd.f32 %v1724, %v1949
      %v2064 = vadd.f32 %v1727, %v1952
      %v2065 = vadd.f32 %v1732, %v1957
      %v2066 = vadd.f32 %v1735, %v1960
      %v2067 = vadd.f32 %v1740, %v1965
      %v2068 = vadd.f32 %v1743, %v1968
      %v2069 = vadd.f32 %v1748, %v1973
      %v2070 = vadd.f32 %v1751, %v1976
      %v2071 = vadd.f32 %v1756, %v1981
      %v2072 = vadd.f32 %v1759, %v1984
      %v2073 = vadd.f32 %v1764, %v1989
      %v2074 = vadd.f32 %v1767, %v1992
      %v2075 = vadd.f32 %v1772, %v1997
      %v2076 = vadd.f32 %v1775, %v2000
      %v2077 = vadd.f32 %v1780, %v2005
      %v2078 = vadd.f32 %v1783, %v2008
      %v2079 = vadd.f32 %v1788, %v2013
      %v2080 = vadd.f32 %v1791, %v2016
      %v2081 = vadd.f32 %v1796, %v2021
      %v2082 = vadd.f32 %v1799, %v2024
      %v2083 = vadd.f32 %v1804, %v2029
      %v2084 = vadd.f32 %v1807, %v2032
      %v2085 = vadd.f32 %v1812, %v2037
      %v2086 = vadd.f32 %v1815, %v2040
      %v2087 = vadd.f32 %v1820, %v2045
      %v2088 = vadd.f32 %v1823, %v2048
      %v2089 = vadd.f32 %v1828, %v2053
      %v2090 = vadd.f32 %v1831, %v2056
      %v2091 = vmax.f32 %v2059, 0.0
      %v2092 = vmax.f32 %v2060, 0.0
      %v2093 = vmax.f32 %v2061, 0.0
      %v2094 = vmax.f32 %v2062, 0.0
      %v2095 = vmax.f32 %v2063, 0.0
      %v2096 = vmax.f32 %v2064, 0.0
      %v2097 = vmax.f32 %v2065, 0.0
      %v2098 = vmax.f32 %v2066, 0.0
      %v2099 = vmax.f32 %v2067, 0.0
      %v2100 = vmax.f32 %v2068, 0.0
      %v2101 = vmax.f32 %v2069, 0.0
      %v2102 = vmax.f32 %v2070, 0.0
      %v2103 = vmax.f32 %v2071, 0.0
      %v2104 = vmax.f32 %v2072, 0.0
      %v2105 = vmax.f32 %v2073, 0.0
      %v2106 = vmax.f32 %v2074, 0.0
      %v2107 = vmax.f32 %v2075, 0.0
      %v2108 = vmax.f32 %v2076, 0.0
      %v2109 = vmax.f32 %v2077, 0.0
      %v2110 = vmax.f32 %v2078, 0.0
      %v2111 = vmax.f32 %v2079, 0.0
      %v2112 = vmax.f32 %v2080, 0.0
      %v2113 = vmax.f32 %v2081, 0.0
      %v2114 = vmax.f32 %v2082, 0.0
      %v2115 = vmax.f32 %v2083, 0.0
      %v2116 = vmax.f32 %v2084, 0.0
      %v2117 = vmax.f32 %v2085, 0.0
      %v2118 = vmax.f32 %v2086, 0.0
      %v2119 = vmax.f32 %v2087, 0.0
      %v2120 = vmax.f32 %v2088, 0.0
      %v2121 = vmax.f32 %v2089, 0.0
      %v2122 = vmax.f32 %v2090, 0.0
      %v2123 = vpack.c.bf16 %v2092, %v2091
      %v2124 = vpack.c.bf16 %v2094, %v2093
      %v2125 = vpack.c.bf16 %v2096, %v2095
      %v2126 = vpack.c.bf16 %v2098, %v2097
      %v2127 = vpack.c.bf16 %v2100, %v2099
      %v2128 = vpack.c.bf16 %v2102, %v2101
      %v2129 = vpack.c.bf16 %v2104, %v2103
      %v2130 = vpack.c.bf16 %v2106, %v2105
      %v2131 = vpack.c.bf16 %v2108, %v2107
      %v2132 = vpack.c.bf16 %v2110, %v2109
      %v2133 = vpack.c.bf16 %v2112, %v2111
      %v2134 = vpack.c.bf16 %v2114, %v2113
      %v2135 = vpack.c.bf16 %v2116, %v2115
      %v2136 = vpack.c.bf16 %v2118, %v2117
      %v2137 = vpack.c.bf16 %v2120, %v2119
      %v2138 = vpack.c.bf16 %v2122, %v2121
      %v2139 = vld [vmem:[%s569] sm:$0xff]
      %v2140 = vld [vmem:[%s569 + $0x8] sm:$0xff]
      %v2141 = vld [vmem:[%s569 + $0x10] sm:$0xff]
      %v2142 = vld [vmem:[%s569 + $0x18] sm:$0xff]
      %v2143 = vld [vmem:[%s569 + $0x20] sm:$0xff]
      %v2144 = vld [vmem:[%s569 + $0x28] sm:$0xff]
      %v2145 = vld [vmem:[%s569 + $0x30] sm:$0xff]
      %v2146 = vld [vmem:[%s569 + $0x38] sm:$0xff]
      %v2147 = vld [vmem:[%s569 + $0x40] sm:$0xff]
      %v2148 = vld [vmem:[%s569 + $0x48] sm:$0xff]
      %v2149 = vld [vmem:[%s569 + $0x50] sm:$0xff]
      %v2150 = vld [vmem:[%s569 + $0x58] sm:$0xff]
      %v2151 = vld [vmem:[%s569 + $0x60] sm:$0xff]
      %v2152 = vld [vmem:[%s569 + $0x68] sm:$0xff]
      %v2153 = vld [vmem:[%s569 + $0x70] sm:$0xff]
      %v2154 = vld [vmem:[%s569 + $0x78] sm:$0xff]
      %v2155 = vld [vmem:[%s569 + $0x80] sm:$0xff]
      %v2156 = vld [vmem:[%s569 + $0x88] sm:$0xff]
      %v2157 = vld [vmem:[%s569 + $0x90] sm:$0xff]
      %v2158 = vld [vmem:[%s569 + $0x98] sm:$0xff]
      %v2159 = vld [vmem:[%s569 + $0xa0] sm:$0xff]
      %v2160 = vld [vmem:[%s569 + $0xa8] sm:$0xff]
      %v2161 = vld [vmem:[%s569 + $0xb0] sm:$0xff]
      %v2162 = vld [vmem:[%s569 + $0xb8] sm:$0xff]
      %v2163 = vld [vmem:[%s569 + $0xc0] sm:$0xff]
      %v2164 = vld [vmem:[%s569 + $0xc8] sm:$0xff]
      %v2165 = vld [vmem:[%s569 + $0xd0] sm:$0xff]
      %v2166 = vld [vmem:[%s569 + $0xd8] sm:$0xff]
      %v2167 = vld [vmem:[%s569 + $0xe0] sm:$0xff]
      %v2168 = vld [vmem:[%s569 + $0xe8] sm:$0xff]
      %v2169 = vld [vmem:[%s569 + $0xf0] sm:$0xff]
      %v2170 = vld [vmem:[%s569 + $0xf8] sm:$0xff]
      %v2171 = vld [vmem:[%s8] sm:$0xf]
      %v2172 = vld [vmem:[%s8 + $0x4] sm:$0xf]
      %v2173 = vld [vmem:[%s8 + $0x8] sm:$0xf]
      %v2174 = vld [vmem:[%s8 + $0xc] sm:$0xf]
      %v2175 = vld [vmem:[%s8 + $0x10] sm:$0xf]
      %v2176 = vld [vmem:[%s8 + $0x14] sm:$0xf]
      %v2177 = vld [vmem:[%s8 + $0x18] sm:$0xf]
      %v2178 = vld [vmem:[%s8 + $0x1c] sm:$0xf]
      %v2179 = vld [vmem:[%s8 + $0x20] sm:$0xf]
      %v2180 = vld [vmem:[%s8 + $0x24] sm:$0xf]
      %v2181 = vld [vmem:[%s8 + $0x28] sm:$0xf]
      %v2182 = vld [vmem:[%s8 + $0x2c] sm:$0xf]
      %v2183 = vld [vmem:[%s8 + $0x30] sm:$0xf]
      %v2184 = vld [vmem:[%s8 + $0x34] sm:$0xf]
      %v2185 = vld [vmem:[%s8 + $0x38] sm:$0xf]
      %v2186 = vld [vmem:[%s8 + $0x3c] sm:$0xf]
      %v2203 = vunpack.c.l.b16 %v2171
      %v2204 = vunpack.c.l.b16 %v2172
      %v2205 = vunpack.c.l.b16 %v2173
      %v2206 = vunpack.c.l.b16 %v2174
      %v2207 = vunpack.c.l.b16 %v2175
      %v2208 = vunpack.c.l.b16 %v2176
      %v2209 = vunpack.c.l.b16 %v2177
      %v2210 = vunpack.c.l.b16 %v2178
      %v2211 = vunpack.c.l.b16 %v2179
      %v2212 = vunpack.c.l.b16 %v2180
      %v2213 = vunpack.c.l.b16 %v2181
      %v2214 = vunpack.c.l.b16 %v2182
      %v2215 = vunpack.c.l.b16 %v2183
      %v2216 = vunpack.c.l.b16 %v2184
      %v2217 = vunpack.c.l.b16 %v2185
      %v2218 = vunpack.c.l.b16 %v2186
      %v2219 = vpack.c.b16 %v2204, %v2203
      %v2220 = vpack.c.b16 %v2206, %v2205
      %v2221 = vpack.c.b16 %v2208, %v2207
      %v2222 = vpack.c.b16 %v2210, %v2209
      %v2223 = vpack.c.b16 %v2212, %v2211
      %v2224 = vpack.c.b16 %v2214, %v2213
      %v2225 = vpack.c.b16 %v2216, %v2215
      %v2226 = vpack.c.b16 %v2218, %v2217
      %2235 = vmatprep.subr.bf16.mxu0 0
      %2236 = vmatpush1.bf16.msra.mxu0 %v2219
      %2237 = vmatprep.subr.bf16.mxu0 0
      %2238 = vmatpush1.bf16.msra.mxu0 %v2220
      %2239 = vmatprep.subr.bf16.mxu0 0
      %2240 = vmatpush1.bf16.msra.mxu0 %v2221
      %2241 = vmatprep.subr.bf16.mxu0 0
      %2242 = vmatpush1.bf16.msra.mxu0 %v2222
      %2243 = vmatprep.subr.bf16.mxu0 0
      %2244 = vmatpush1.bf16.msra.mxu0 %v2223
      %2245 = vmatprep.subr.bf16.mxu0 0
      %2246 = vmatpush1.bf16.msra.mxu0 %v2224
      %2247 = vmatprep.subr.bf16.mxu0 0
      %2248 = vmatpush1.bf16.msra.mxu0 %v2225
      %2249 = vmatprep.subr.bf16.mxu0 0
      %2250 = vmatpush1.bf16.msra.mxu0 %v2226
      %2251 = vmatprep.subr.bf16.mxu0 0
      %2252 = vmatpush1.bf16.msra.mxu0 0
      %2253 = vmatprep.subr.bf16.mxu0 0
      %2254 = vmatpush1.bf16.msra.mxu0 0
      %2255 = vmatprep.subr.bf16.mxu0 0
      %2256 = vmatpush1.bf16.msra.mxu0 0
      %2257 = vmatprep.subr.bf16.mxu0 0
      %2258 = vmatpush1.bf16.msra.mxu0 0
      %2259 = vmatprep.subr.bf16.mxu0 0
      %2260 = vmatpush1.bf16.msra.mxu0 0
      %2261 = vmatprep.subr.bf16.mxu0 0
      %2262 = vmatpush1.bf16.msra.mxu0 0
      %2263 = vmatprep.subr.bf16.mxu0 0
      %2264 = vmatpush1.bf16.msra.mxu0 0
      %2265 = vmatprep.subr.bf16.mxu0 0
      %2266 = vmatpush1.bf16.msra.mxu0 0
      %2267 = vmatprep.mubr.bf16.mxu0 0
      %2268 = vmatmul.mubr.bf16.gmra.mrb[0].mxu0 %v1377
      %v2269 = vpop.f32.mrb[0].mxu0
      %v2270 = vadd.f32 0.0, %v2269
      %v2271 = vpop.f32.mrb[0].mxu0
      %v2272 = vpop.f32.mrb[0].mxu0
      %v2273 = vadd.f32 0.0, %v2272
      %v2274 = vpop.f32.mrb[0].mxu0
      %2275 = vmatprep.mubr.bf16.mxu0 0
      %2276 = vmatmul.mubr.bf16.gmra.mrb[0].mxu0 %v1378
      %v2277 = vpop.f32.mrb[0].mxu0
      %v2278 = vadd.f32 0.0, %v2277
      %v2279 = vpop.f32.mrb[0].mxu0
      %v2280 = vpop.f32.mrb[0].mxu0
      %v2281 = vadd.f32 0.0, %v2280
      %v2282 = vpop.f32.mrb[0].mxu0
      %2283 = vmatprep.mubr.bf16.mxu0 0
      %2284 = vmatmul.mubr.bf16.gmra.mrb[0].mxu0 %v1379
      %v2285 = vpop.f32.mrb[0].mxu0
      %v2286 = vadd.f32 0.0, %v2285
      %v2287 = vpop.f32.mrb[0].mxu0
      %v2288 = vpop.f32.mrb[0].mxu0
      %v2289 = vadd.f32 0.0, %v2288
      %v2290 = vpop.f32.mrb[0].mxu0
      %2291 = vmatprep.mubr.bf16.mxu0 0
      %2292 = vmatmul.mubr.bf16.gmra.mrb[0].mxu0 %v1380
      %v2293 = vpop.f32.mrb[0].mxu0
      %v2294 = vadd.f32 0.0, %v2293
      %v2295 = vpop.f32.mrb[0].mxu0
      %v2296 = vpop.f32.mrb[0].mxu0
      %v2297 = vadd.f32 0.0, %v2296
      %v2298 = vpop.f32.mrb[0].mxu0
      %2299 = vmatprep.mubr.bf16.mxu0 0
      %2300 = vmatmul.mubr.bf16.gmra.mrb[0].mxu0 %v1381
      %v2301 = vpop.f32.mrb[0].mxu0
      %v2302 = vadd.f32 0.0, %v2301
      %v2303 = vpop.f32.mrb[0].mxu0
      %v2304 = vpop.f32.mrb[0].mxu0
      %v2305 = vadd.f32 0.0, %v2304
      %v2306 = vpop.f32.mrb[0].mxu0
      %2307 = vmatprep.mubr.bf16.mxu0 0
      %2308 = vmatmul.mubr.bf16.gmra.mrb[0].mxu0 %v1382
      %v2309 = vpop.f32.mrb[0].mxu0
      %v2310 = vadd.f32 0.0, %v2309
      %v2311 = vpop.f32.mrb[0].mxu0
      %v2312 = vpop.f32.mrb[0].mxu0
      %v2313 = vadd.f32 0.0, %v2312
      %v2314 = vpop.f32.mrb[0].mxu0
      %2315 = vmatprep.mubr.bf16.mxu0 0
      %2316 = vmatmul.mubr.bf16.gmra.mrb[0].mxu0 %v1383
      %v2317 = vpop.f32.mrb[0].mxu0
      %v2318 = vadd.f32 0.0, %v2317
      %v2319 = vpop.f32.mrb[0].mxu0
      %v2320 = vpop.f32.mrb[0].mxu0
      %v2321 = vadd.f32 0.0, %v2320
      %v2322 = vpop.f32.mrb[0].mxu0
      %2323 = vmatprep.mubr.bf16.mxu0 0
      %2324 = vmatmul.mubr.bf16.gmra.mrb[0].mxu0 %v1384
      %v2325 = vpop.f32.mrb[0].mxu0
      %v2326 = vadd.f32 0.0, %v2325
      %v2327 = vpop.f32.mrb[0].mxu0
      %v2328 = vpop.f32.mrb[0].mxu0
      %v2329 = vadd.f32 0.0, %v2328
      %v2330 = vpop.f32.mrb[0].mxu0
      %2331 = vmatprep.mubr.bf16.mxu0 0
      %2332 = vmatmul.mubr.bf16.gmra.mrb[0].mxu0 %v1385
      %v2333 = vpop.f32.mrb[0].mxu0
      %v2334 = vadd.f32 0.0, %v2333
      %v2335 = vpop.f32.mrb[0].mxu0
      %v2336 = vpop.f32.mrb[0].mxu0
      %v2337 = vadd.f32 0.0, %v2336
      %v2338 = vpop.f32.mrb[0].mxu0
      %2339 = vmatprep.mubr.bf16.mxu0 0
      %2340 = vmatmul.mubr.bf16.gmra.mrb[0].mxu0 %v1386
      %v2341 = vpop.f32.mrb[0].mxu0
      %v2342 = vadd.f32 0.0, %v2341
      %v2343 = vpop.f32.mrb[0].mxu0
      %v2344 = vpop.f32.mrb[0].mxu0
      %v2345 = vadd.f32 0.0, %v2344
      %v2346 = vpop.f32.mrb[0].mxu0
      %2347 = vmatprep.mubr.bf16.mxu0 0
      %2348 = vmatmul.mubr.bf16.gmra.mrb[0].mxu0 %v1387
      %v2349 = vpop.f32.mrb[0].mxu0
      %v2350 = vadd.f32 0.0, %v2349
      %v2351 = vpop.f32.mrb[0].mxu0
      %v2352 = vpop.f32.mrb[0].mxu0
      %v2353 = vadd.f32 0.0, %v2352
      %v2354 = vpop.f32.mrb[0].mxu0
      %2355 = vmatprep.mubr.bf16.mxu0 0
      %2356 = vmatmul.mubr.bf16.gmra.mrb[0].mxu0 %v1388
      %v2357 = vpop.f32.mrb[0].mxu0
      %v2358 = vadd.f32 0.0, %v2357
      %v2359 = vpop.f32.mrb[0].mxu0
      %v2360 = vpop.f32.mrb[0].mxu0
      %v2361 = vadd.f32 0.0, %v2360
      %v2362 = vpop.f32.mrb[0].mxu0
      %2363 = vmatprep.mubr.bf16.mxu0 0
      %2364 = vmatmul.mubr.bf16.gmra.mrb[0].mxu0 %v1389
      %v2365 = vpop.f32.mrb[0].mxu0
      %v2366 = vadd.f32 0.0, %v2365
      %v2367 = vpop.f32.mrb[0].mxu0
      %v2368 = vpop.f32.mrb[0].mxu0
      %v2369 = vadd.f32 0.0, %v2368
      %v2370 = vpop.f32.mrb[0].mxu0
      %2371 = vmatprep.mubr.bf16.mxu0 0
      %2372 = vmatmul.mubr.bf16.gmra.mrb[0].mxu0 %v1390
      %v2373 = vpop.f32.mrb[0].mxu0
      %v2374 = vadd.f32 0.0, %v2373
      %v2375 = vpop.f32.mrb[0].mxu0
      %v2376 = vpop.f32.mrb[0].mxu0
      %v2377 = vadd.f32 0.0, %v2376
      %v2378 = vpop.f32.mrb[0].mxu0
      %2379 = vmatprep.mubr.bf16.mxu0 0
      %2380 = vmatmul.mubr.bf16.gmra.mrb[0].mxu0 %v1391
      %v2381 = vpop.f32.mrb[0].mxu0
      %v2382 = vadd.f32 0.0, %v2381
      %v2383 = vpop.f32.mrb[0].mxu0
      %v2384 = vpop.f32.mrb[0].mxu0
      %v2385 = vadd.f32 0.0, %v2384
      %v2386 = vpop.f32.mrb[0].mxu0
      %2387 = vmatprep.mubr.bf16.mxu0 0
      %2388 = vmatmul.mubr.bf16.gmra.mrb[0].mxu0 %v1392
      %v2389 = vpop.f32.mrb[0].mxu0
      %v2390 = vadd.f32 0.0, %v2389
      %v2391 = vpop.f32.mrb[0].mxu0
      %v2392 = vpop.f32.mrb[0].mxu0
      %v2393 = vadd.f32 0.0, %v2392
      %v2394 = vpop.f32.mrb[0].mxu0
      %2395 = vdwg.mxu0
      %v2396 = vadd.f32 %v2139, %v2270
      %v2397 = vadd.f32 %v2140, %v2273
      %v2398 = vadd.f32 %v2141, %v2278
      %v2399 = vadd.f32 %v2142, %v2281
      %v2400 = vadd.f32 %v2143, %v2286
      %v2401 = vadd.f32 %v2144, %v2289
      %v2402 = vadd.f32 %v2145, %v2294
      %v2403 = vadd.f32 %v2146, %v2297
      %v2404 = vadd.f32 %v2147, %v2302
      %v2405 = vadd.f32 %v2148, %v2305
      %v2406 = vadd.f32 %v2149, %v2310
      %v2407 = vadd.f32 %v2150, %v2313
      %v2408 = vadd.f32 %v2151, %v2318
      %v2409 = vadd.f32 %v2152, %v2321
      %v2410 = vadd.f32 %v2153, %v2326
      %v2411 = vadd.f32 %v2154, %v2329
      %v2412 = vadd.f32 %v2155, %v2334
      %v2413 = vadd.f32 %v2156, %v2337
      %v2414 = vadd.f32 %v2157, %v2342
      %v2415 = vadd.f32 %v2158, %v2345
      %v2416 = vadd.f32 %v2159, %v2350
      %v2417 = vadd.f32 %v2160, %v2353
      %v2418 = vadd.f32 %v2161, %v2358
      %v2419 = vadd.f32 %v2162, %v2361
      %v2420 = vadd.f32 %v2163, %v2366
      %v2421 = vadd.f32 %v2164, %v2369
      %v2422 = vadd.f32 %v2165, %v2374
      %v2423 = vadd.f32 %v2166, %v2377
      %v2424 = vadd.f32 %v2167, %v2382
      %v2425 = vadd.f32 %v2168, %v2385
      %v2426 = vadd.f32 %v2169, %v2390
      %v2427 = vadd.f32 %v2170, %v2393
      %v2428 = vld [vmem:[%s9] sm:$0xf]
      %v2429 = vld [vmem:[%s9 + $0x4] sm:$0xf]
      %v2430 = vld [vmem:[%s9 + $0x8] sm:$0xf]
      %v2431 = vld [vmem:[%s9 + $0xc] sm:$0xf]
      %v2432 = vld [vmem:[%s9 + $0x10] sm:$0xf]
      %v2433 = vld [vmem:[%s9 + $0x14] sm:$0xf]
      %v2434 = vld [vmem:[%s9 + $0x18] sm:$0xf]
      %v2435 = vld [vmem:[%s9 + $0x1c] sm:$0xf]
      %v2436 = vld [vmem:[%s9 + $0x20] sm:$0xf]
      %v2437 = vld [vmem:[%s9 + $0x24] sm:$0xf]
      %v2438 = vld [vmem:[%s9 + $0x28] sm:$0xf]
      %v2439 = vld [vmem:[%s9 + $0x2c] sm:$0xf]
      %v2440 = vld [vmem:[%s9 + $0x30] sm:$0xf]
      %v2441 = vld [vmem:[%s9 + $0x34] sm:$0xf]
      %v2442 = vld [vmem:[%s9 + $0x38] sm:$0xf]
      %v2443 = vld [vmem:[%s9 + $0x3c] sm:$0xf]
      %v2460 = vunpack.c.l.b16 %v2428
      %v2461 = vunpack.c.l.b16 %v2429
      %v2462 = vunpack.c.l.b16 %v2430
      %v2463 = vunpack.c.l.b16 %v2431
      %v2464 = vunpack.c.l.b16 %v2432
      %v2465 = vunpack.c.l.b16 %v2433
      %v2466 = vunpack.c.l.b16 %v2434
      %v2467 = vunpack.c.l.b16 %v2435
      %v2468 = vunpack.c.l.b16 %v2436
      %v2469 = vunpack.c.l.b16 %v2437
      %v2470 = vunpack.c.l.b16 %v2438
      %v2471 = vunpack.c.l.b16 %v2439
      %v2472 = vunpack.c.l.b16 %v2440
      %v2473 = vunpack.c.l.b16 %v2441
      %v2474 = vunpack.c.l.b16 %v2442
      %v2475 = vunpack.c.l.b16 %v2443
      %v2476 = vpack.c.b16 %v2461, %v2460
      %v2477 = vpack.c.b16 %v2463, %v2462
      %v2478 = vpack.c.b16 %v2465, %v2464
      %v2479 = vpack.c.b16 %v2467, %v2466
      %v2480 = vpack.c.b16 %v2469, %v2468
      %v2481 = vpack.c.b16 %v2471, %v2470
      %v2482 = vpack.c.b16 %v2473, %v2472
      %v2483 = vpack.c.b16 %v2475, %v2474
      %2492 = vmatprep.subr.bf16.mxu0 0
      %2493 = vmatpush1.bf16.msra.mxu0 %v2476
      %2494 = vmatprep.subr.bf16.mxu0 0
      %2495 = vmatpush1.bf16.msra.mxu0 %v2477
      %2496 = vmatprep.subr.bf16.mxu0 0
      %2497 = vmatpush1.bf16.msra.mxu0 %v2478
      %2498 = vmatprep.subr.bf16.mxu0 0
      %2499 = vmatpush1.bf16.msra.mxu0 %v2479
      %2500 = vmatprep.subr.bf16.mxu0 0
      %2501 = vmatpush1.bf16.msra.mxu0 %v2480
      %2502 = vmatprep.subr.bf16.mxu0 0
      %2503 = vmatpush1.bf16.msra.mxu0 %v2481
      %2504 = vmatprep.subr.bf16.mxu0 0
      %2505 = vmatpush1.bf16.msra.mxu0 %v2482
      %2506 = vmatprep.subr.bf16.mxu0 0
      %2507 = vmatpush1.bf16.msra.mxu0 %v2483
      %2508 = vmatprep.subr.bf16.mxu0 0
      %2509 = vmatpush1.bf16.msra.mxu0 0
      %2510 = vmatprep.subr.bf16.mxu0 0
      %2511 = vmatpush1.bf16.msra.mxu0 0
      %2512 = vmatprep.subr.bf16.mxu0 0
      %2513 = vmatpush1.bf16.msra.mxu0 0
      %2514 = vmatprep.subr.bf16.mxu0 0
      %2515 = vmatpush1.bf16.msra.mxu0 0
      %2516 = vmatprep.subr.bf16.mxu0 0
      %2517 = vmatpush1.bf16.msra.mxu0 0
      %2518 = vmatprep.subr.bf16.mxu0 0
      %2519 = vmatpush1.bf16.msra.mxu0 0
      %2520 = vmatprep.subr.bf16.mxu0 0
      %2521 = vmatpush1.bf16.msra.mxu0 0
      %2522 = vmatprep.subr.bf16.mxu0 0
      %2523 = vmatpush1.bf16.msra.mxu0 0
      %2524 = vmatprep.mubr.bf16.mxu0 0
      %2525 = vmatmul.mubr.bf16.gmra.mrb[0].mxu0 %v2123
      %v2526 = vpop.f32.mrb[0].mxu0
      %v2527 = vadd.f32 0.0, %v2526
      %v2528 = vpop.f32.mrb[0].mxu0
      %v2529 = vpop.f32.mrb[0].mxu0
      %v2530 = vadd.f32 0.0, %v2529
      %v2531 = vpop.f32.mrb[0].mxu0
      %2532 = vmatprep.mubr.bf16.mxu0 0
      %2533 = vmatmul.mubr.bf16.gmra.mrb[0].mxu0 %v2124
      %v2534 = vpop.f32.mrb[0].mxu0
      %v2535 = vadd.f32 0.0, %v2534
      %v2536 = vpop.f32.mrb[0].mxu0
      %v2537 = vpop.f32.mrb[0].mxu0
      %v2538 = vadd.f32 0.0, %v2537
      %v2539 = vpop.f32.mrb[0].mxu0
      %2540 = vmatprep.mubr.bf16.mxu0 0
      %2541 = vmatmul.mubr.bf16.gmra.mrb[0].mxu0 %v2125
      %v2542 = vpop.f32.mrb[0].mxu0
      %v2543 = vadd.f32 0.0, %v2542
      %v2544 = vpop.f32.mrb[0].mxu0
      %v2545 = vpop.f32.mrb[0].mxu0
      %v2546 = vadd.f32 0.0, %v2545
      %v2547 = vpop.f32.mrb[0].mxu0
      %2548 = vmatprep.mubr.bf16.mxu0 0
      %2549 = vmatmul.mubr.bf16.gmra.mrb[0].mxu0 %v2126
      %v2550 = vpop.f32.mrb[0].mxu0
      %v2551 = vadd.f32 0.0, %v2550
      %v2552 = vpop.f32.mrb[0].mxu0
      %v2553 = vpop.f32.mrb[0].mxu0
      %v2554 = vadd.f32 0.0, %v2553
      %v2555 = vpop.f32.mrb[0].mxu0
      %2556 = vmatprep.mubr.bf16.mxu0 0
      %2557 = vmatmul.mubr.bf16.gmra.mrb[0].mxu0 %v2127
      %v2558 = vpop.f32.mrb[0].mxu0
      %v2559 = vadd.f32 0.0, %v2558
      %v2560 = vpop.f32.mrb[0].mxu0
      %v2561 = vpop.f32.mrb[0].mxu0
      %v2562 = vadd.f32 0.0, %v2561
      %v2563 = vpop.f32.mrb[0].mxu0
      %2564 = vmatprep.mubr.bf16.mxu0 0
      %2565 = vmatmul.mubr.bf16.gmra.mrb[0].mxu0 %v2128
      %v2566 = vpop.f32.mrb[0].mxu0
      %v2567 = vadd.f32 0.0, %v2566
      %v2568 = vpop.f32.mrb[0].mxu0
      %v2569 = vpop.f32.mrb[0].mxu0
      %v2570 = vadd.f32 0.0, %v2569
      %v2571 = vpop.f32.mrb[0].mxu0
      %2572 = vmatprep.mubr.bf16.mxu0 0
      %2573 = vmatmul.mubr.bf16.gmra.mrb[0].mxu0 %v2129
      %v2574 = vpop.f32.mrb[0].mxu0
      %v2575 = vadd.f32 0.0, %v2574
      %v2576 = vpop.f32.mrb[0].mxu0
      %v2577 = vpop.f32.mrb[0].mxu0
      %v2578 = vadd.f32 0.0, %v2577
      %v2579 = vpop.f32.mrb[0].mxu0
      %2580 = vmatprep.mubr.bf16.mxu0 0
      %2581 = vmatmul.mubr.bf16.gmra.mrb[0].mxu0 %v2130
      %v2582 = vpop.f32.mrb[0].mxu0
      %v2583 = vadd.f32 0.0, %v2582
      %v2584 = vpop.f32.mrb[0].mxu0
      %v2585 = vpop.f32.mrb[0].mxu0
      %v2586 = vadd.f32 0.0, %v2585
      %v2587 = vpop.f32.mrb[0].mxu0
      %2588 = vmatprep.mubr.bf16.mxu0 0
      %2589 = vmatmul.mubr.bf16.gmra.mrb[0].mxu0 %v2131
      %v2590 = vpop.f32.mrb[0].mxu0
      %v2591 = vadd.f32 0.0, %v2590
      %v2592 = vpop.f32.mrb[0].mxu0
      %v2593 = vpop.f32.mrb[0].mxu0
      %v2594 = vadd.f32 0.0, %v2593
      %v2595 = vpop.f32.mrb[0].mxu0
      %2596 = vmatprep.mubr.bf16.mxu0 0
      %2597 = vmatmul.mubr.bf16.gmra.mrb[0].mxu0 %v2132
      %v2598 = vpop.f32.mrb[0].mxu0
      %v2599 = vadd.f32 0.0, %v2598
      %v2600 = vpop.f32.mrb[0].mxu0
      %v2601 = vpop.f32.mrb[0].mxu0
      %v2602 = vadd.f32 0.0, %v2601
      %v2603 = vpop.f32.mrb[0].mxu0
      %2604 = vmatprep.mubr.bf16.mxu0 0
      %2605 = vmatmul.mubr.bf16.gmra.mrb[0].mxu0 %v2133
      %v2606 = vpop.f32.mrb[0].mxu0
      %v2607 = vadd.f32 0.0, %v2606
      %v2608 = vpop.f32.mrb[0].mxu0
      %v2609 = vpop.f32.mrb[0].mxu0
      %v2610 = vadd.f32 0.0, %v2609
      %v2611 = vpop.f32.mrb[0].mxu0
      %2612 = vmatprep.mubr.bf16.mxu0 0
      %2613 = vmatmul.mubr.bf16.gmra.mrb[0].mxu0 %v2134
      %v2614 = vpop.f32.mrb[0].mxu0
      %v2615 = vadd.f32 0.0, %v2614
      %v2616 = vpop.f32.mrb[0].mxu0
      %v2617 = vpop.f32.mrb[0].mxu0
      %v2618 = vadd.f32 0.0, %v2617
      %v2619 = vpop.f32.mrb[0].mxu0
      %2620 = vmatprep.mubr.bf16.mxu0 0
      %2621 = vmatmul.mubr.bf16.gmra.mrb[0].mxu0 %v2135
      %v2622 = vpop.f32.mrb[0].mxu0
      %v2623 = vadd.f32 0.0, %v2622
      %v2624 = vpop.f32.mrb[0].mxu0
      %v2625 = vpop.f32.mrb[0].mxu0
      %v2626 = vadd.f32 0.0, %v2625
      %v2627 = vpop.f32.mrb[0].mxu0
      %2628 = vmatprep.mubr.bf16.mxu0 0
      %2629 = vmatmul.mubr.bf16.gmra.mrb[0].mxu0 %v2136
      %v2630 = vpop.f32.mrb[0].mxu0
      %v2631 = vadd.f32 0.0, %v2630
      %v2632 = vpop.f32.mrb[0].mxu0
      %v2633 = vpop.f32.mrb[0].mxu0
      %v2634 = vadd.f32 0.0, %v2633
      %v2635 = vpop.f32.mrb[0].mxu0
      %2636 = vmatprep.mubr.bf16.mxu0 0
      %2637 = vmatmul.mubr.bf16.gmra.mrb[0].mxu0 %v2137
      %v2638 = vpop.f32.mrb[0].mxu0
      %v2639 = vadd.f32 0.0, %v2638
      %v2640 = vpop.f32.mrb[0].mxu0
      %v2641 = vpop.f32.mrb[0].mxu0
      %v2642 = vadd.f32 0.0, %v2641
      %v2643 = vpop.f32.mrb[0].mxu0
      %2644 = vmatprep.mubr.bf16.mxu0 0
      %2645 = vmatmul.mubr.bf16.gmra.mrb[0].mxu0 %v2138
      %v2646 = vpop.f32.mrb[0].mxu0
      %v2647 = vadd.f32 0.0, %v2646
      %v2648 = vpop.f32.mrb[0].mxu0
      %v2649 = vpop.f32.mrb[0].mxu0
      %v2650 = vadd.f32 0.0, %v2649
      %v2651 = vpop.f32.mrb[0].mxu0
      %2652 = vdwg.mxu0
      %v2653 = vadd.f32 %v2396, %v2527
      %v2654 = vadd.f32 %v2397, %v2530
      %v2655 = vadd.f32 %v2398, %v2535
      %v2656 = vadd.f32 %v2399, %v2538
      %v2657 = vadd.f32 %v2400, %v2543
      %v2658 = vadd.f32 %v2401, %v2546
      %v2659 = vadd.f32 %v2402, %v2551
      %v2660 = vadd.f32 %v2403, %v2554
      %v2661 = vadd.f32 %v2404, %v2559
      %v2662 = vadd.f32 %v2405, %v2562
      %v2663 = vadd.f32 %v2406, %v2567
      %v2664 = vadd.f32 %v2407, %v2570
      %v2665 = vadd.f32 %v2408, %v2575
      %v2666 = vadd.f32 %v2409, %v2578
      %v2667 = vadd.f32 %v2410, %v2583
      %v2668 = vadd.f32 %v2411, %v2586
      %v2669 = vadd.f32 %v2412, %v2591
      %v2670 = vadd.f32 %v2413, %v2594
      %v2671 = vadd.f32 %v2414, %v2599
      %v2672 = vadd.f32 %v2415, %v2602
      %v2673 = vadd.f32 %v2416, %v2607
      %v2674 = vadd.f32 %v2417, %v2610
      %v2675 = vadd.f32 %v2418, %v2615
      %v2676 = vadd.f32 %v2419, %v2618
      %v2677 = vadd.f32 %v2420, %v2623
      %v2678 = vadd.f32 %v2421, %v2626
      %v2679 = vadd.f32 %v2422, %v2631
      %v2680 = vadd.f32 %v2423, %v2634
      %v2681 = vadd.f32 %v2424, %v2639
      %v2682 = vadd.f32 %v2425, %v2642
      %v2683 = vadd.f32 %v2426, %v2647
      %v2684 = vadd.f32 %v2427, %v2650
      %v2685 = vld [vmem:[%s10] sm:$0x1]
      %v2687 = vlaneseq
      %v2688 = vshrl.u32 %v2687, 7
      %v2689 = vsub.s32 0, %v2688
      %v2690 = vrot.slane %v2685, %v2689
      %v2692 = vadd.f32 %v2653, %v2690
      %v2693 = vadd.f32 %v2654, %v2690
      %v2694 = vadd.f32 %v2655, %v2690
      %v2695 = vadd.f32 %v2656, %v2690
      %v2696 = vadd.f32 %v2657, %v2690
      %v2697 = vadd.f32 %v2658, %v2690
      %v2698 = vadd.f32 %v2659, %v2690
      %v2699 = vadd.f32 %v2660, %v2690
      %v2700 = vadd.f32 %v2661, %v2690
      %v2701 = vadd.f32 %v2662, %v2690
      %v2702 = vadd.f32 %v2663, %v2690
      %v2703 = vadd.f32 %v2664, %v2690
      %v2704 = vadd.f32 %v2665, %v2690
      %v2705 = vadd.f32 %v2666, %v2690
      %v2706 = vadd.f32 %v2667, %v2690
      %v2707 = vadd.f32 %v2668, %v2690
      %v2708 = vadd.f32 %v2669, %v2690
      %v2709 = vadd.f32 %v2670, %v2690
      %v2710 = vadd.f32 %v2671, %v2690
      %v2711 = vadd.f32 %v2672, %v2690
      %v2712 = vadd.f32 %v2673, %v2690
      %v2713 = vadd.f32 %v2674, %v2690
      %v2714 = vadd.f32 %v2675, %v2690
      %v2715 = vadd.f32 %v2676, %v2690
      %v2716 = vadd.f32 %v2677, %v2690
      %v2717 = vadd.f32 %v2678, %v2690
      %v2718 = vadd.f32 %v2679, %v2690
      %v2719 = vadd.f32 %v2680, %v2690
      %v2720 = vadd.f32 %v2681, %v2690
      %v2721 = vadd.f32 %v2682, %v2690
      %v2722 = vadd.f32 %v2683, %v2690
      %v2723 = vadd.f32 %v2684, %v2690
      %v2724 = vmax.f32 %v2692, 0.0
      %v2725 = vmax.f32 %v2693, 0.0
      %v2726 = vmax.f32 %v2694, 0.0
      %v2727 = vmax.f32 %v2695, 0.0
      %v2728 = vmax.f32 %v2696, 0.0
      %v2729 = vmax.f32 %v2697, 0.0
      %v2730 = vmax.f32 %v2698, 0.0
      %v2731 = vmax.f32 %v2699, 0.0
      %v2732 = vmax.f32 %v2700, 0.0
      %v2733 = vmax.f32 %v2701, 0.0
      %v2734 = vmax.f32 %v2702, 0.0
      %v2735 = vmax.f32 %v2703, 0.0
      %v2736 = vmax.f32 %v2704, 0.0
      %v2737 = vmax.f32 %v2705, 0.0
      %v2738 = vmax.f32 %v2706, 0.0
      %v2739 = vmax.f32 %v2707, 0.0
      %v2740 = vmax.f32 %v2708, 0.0
      %v2741 = vmax.f32 %v2709, 0.0
      %v2742 = vmax.f32 %v2710, 0.0
      %v2743 = vmax.f32 %v2711, 0.0
      %v2744 = vmax.f32 %v2712, 0.0
      %v2745 = vmax.f32 %v2713, 0.0
      %v2746 = vmax.f32 %v2714, 0.0
      %v2747 = vmax.f32 %v2715, 0.0
      %v2748 = vmax.f32 %v2716, 0.0
      %v2749 = vmax.f32 %v2717, 0.0
      %v2750 = vmax.f32 %v2718, 0.0
      %v2751 = vmax.f32 %v2719, 0.0
      %v2752 = vmax.f32 %v2720, 0.0
      %v2753 = vmax.f32 %v2721, 0.0
      %v2754 = vmax.f32 %v2722, 0.0
      %v2755 = vmax.f32 %v2723, 0.0
      %2756 = vadd.xlane.f32.xlu0 %v2724
      %v2757 = vpop.xlane.xlu0 %2756
      %2758 = vadd.xlane.f32.xlu0 %v2725
      %v2759 = vpop.xlane.xlu0 %2758
      %2760 = vadd.xlane.f32.xlu0 %v2726
      %v2761 = vpop.xlane.xlu0 %2760
      %2762 = vadd.xlane.f32.xlu0 %v2727
      %v2763 = vpop.xlane.xlu0 %2762
      %2764 = vadd.xlane.f32.xlu0 %v2728
      %v2765 = vpop.xlane.xlu0 %2764
      %2766 = vadd.xlane.f32.xlu0 %v2729
      %v2767 = vpop.xlane.xlu0 %2766
      %2768 = vadd.xlane.f32.xlu0 %v2730
      %v2769 = vpop.xlane.xlu0 %2768
      %2770 = vadd.xlane.f32.xlu0 %v2731
      %v2771 = vpop.xlane.xlu0 %2770
      %2772 = vadd.xlane.f32.xlu0 %v2732
      %v2773 = vpop.xlane.xlu0 %2772
      %2774 = vadd.xlane.f32.xlu0 %v2733
      %v2775 = vpop.xlane.xlu0 %2774
      %2776 = vadd.xlane.f32.xlu0 %v2734
      %v2777 = vpop.xlane.xlu0 %2776
      %2778 = vadd.xlane.f32.xlu0 %v2735
      %v2779 = vpop.xlane.xlu0 %2778
      %2780 = vadd.xlane.f32.xlu0 %v2736
      %v2781 = vpop.xlane.xlu0 %2780
      %2782 = vadd.xlane.f32.xlu0 %v2737
      %v2783 = vpop.xlane.xlu0 %2782
      %2784 = vadd.xlane.f32.xlu0 %v2738
      %v2785 = vpop.xlane.xlu0 %2784
      %2786 = vadd.xlane.f32.xlu0 %v2739
      %v2787 = vpop.xlane.xlu0 %2786
      %2788 = vadd.xlane.f32.xlu0 %v2740
      %v2789 = vpop.xlane.xlu0 %2788
      %2790 = vadd.xlane.f32.xlu0 %v2741
      %v2791 = vpop.xlane.xlu0 %2790
      %2792 = vadd.xlane.f32.xlu0 %v2742
      %v2793 = vpop.xlane.xlu0 %2792
      %2794 = vadd.xlane.f32.xlu0 %v2743
      %v2795 = vpop.xlane.xlu0 %2794
      %2796 = vadd.xlane.f32.xlu0 %v2744
      %v2797 = vpop.xlane.xlu0 %2796
      %2798 = vadd.xlane.f32.xlu0 %v2745
      %v2799 = vpop.xlane.xlu0 %2798
      %2800 = vadd.xlane.f32.xlu0 %v2746
      %v2801 = vpop.xlane.xlu0 %2800
      %2802 = vadd.xlane.f32.xlu0 %v2747
      %v2803 = vpop.xlane.xlu0 %2802
      %2804 = vadd.xlane.f32.xlu0 %v2748
      %v2805 = vpop.xlane.xlu0 %2804
      %2806 = vadd.xlane.f32.xlu0 %v2749
      %v2807 = vpop.xlane.xlu0 %2806
      %2808 = vadd.xlane.f32.xlu0 %v2750
      %v2809 = vpop.xlane.xlu0 %2808
      %2810 = vadd.xlane.f32.xlu0 %v2751
      %v2811 = vpop.xlane.xlu0 %2810
      %2812 = vadd.xlane.f32.xlu0 %v2752
      %v2813 = vpop.xlane.xlu0 %2812
      %2814 = vadd.xlane.f32.xlu0 %v2753
      %v2815 = vpop.xlane.xlu0 %2814
      %2816 = vadd.xlane.f32.xlu0 %v2754
      %v2817 = vpop.xlane.xlu0 %2816
      %2818 = vadd.xlane.f32.xlu0 %v2755
      %v2819 = vpop.xlane.xlu0 %2818
      %v2820 = vrcp.pop 128.0
      %v2821 = vmul.f32 %v2757, %v2820
      %v2822 = vmul.f32 %v2759, %v2820
      %v2823 = vmul.f32 %v2761, %v2820
      %v2824 = vmul.f32 %v2763, %v2820
      %v2825 = vmul.f32 %v2765, %v2820
      %v2826 = vmul.f32 %v2767, %v2820
      %v2827 = vmul.f32 %v2769, %v2820
      %v2828 = vmul.f32 %v2771, %v2820
      %v2829 = vmul.f32 %v2773, %v2820
      %v2830 = vmul.f32 %v2775, %v2820
      %v2831 = vmul.f32 %v2777, %v2820
      %v2832 = vmul.f32 %v2779, %v2820
      %v2833 = vmul.f32 %v2781, %v2820
      %v2834 = vmul.f32 %v2783, %v2820
      %v2835 = vmul.f32 %v2785, %v2820
      %v2836 = vmul.f32 %v2787, %v2820
      %v2837 = vmul.f32 %v2789, %v2820
      %v2838 = vmul.f32 %v2791, %v2820
      %v2839 = vmul.f32 %v2793, %v2820
      %v2840 = vmul.f32 %v2795, %v2820
      %v2841 = vmul.f32 %v2797, %v2820
      %v2842 = vmul.f32 %v2799, %v2820
      %v2843 = vmul.f32 %v2801, %v2820
      %v2844 = vmul.f32 %v2803, %v2820
      %v2845 = vmul.f32 %v2805, %v2820
      %v2846 = vmul.f32 %v2807, %v2820
      %v2847 = vmul.f32 %v2809, %v2820
      %v2848 = vmul.f32 %v2811, %v2820
      %v2849 = vmul.f32 %v2813, %v2820
      %v2850 = vmul.f32 %v2815, %v2820
      %v2851 = vmul.f32 %v2817, %v2820
      %v2852 = vmul.f32 %v2819, %v2820
      %v2853 = vsub.f32 %v2724, %v2821
      %v2854 = vsub.f32 %v2725, %v2822
      %v2855 = vsub.f32 %v2726, %v2823
      %v2856 = vsub.f32 %v2727, %v2824
      %v2857 = vsub.f32 %v2728, %v2825
      %v2858 = vsub.f32 %v2729, %v2826
      %v2859 = vsub.f32 %v2730, %v2827
      %v2860 = vsub.f32 %v2731, %v2828
      %v2861 = vsub.f32 %v2732, %v2829
      %v2862 = vsub.f32 %v2733, %v2830
      %v2863 = vsub.f32 %v2734, %v2831
      %v2864 = vsub.f32 %v2735, %v2832
      %v2865 = vsub.f32 %v2736, %v2833
      %v2866 = vsub.f32 %v2737, %v2834
      %v2867 = vsub.f32 %v2738, %v2835
      %v2868 = vsub.f32 %v2739, %v2836
      %v2869 = vsub.f32 %v2740, %v2837
      %v2870 = vsub.f32 %v2741, %v2838
      %v2871 = vsub.f32 %v2742, %v2839
      %v2872 = vsub.f32 %v2743, %v2840
      %v2873 = vsub.f32 %v2744, %v2841
      %v2874 = vsub.f32 %v2745, %v2842
      %v2875 = vsub.f32 %v2746, %v2843
      %v2876 = vsub.f32 %v2747, %v2844
      %v2877 = vsub.f32 %v2748, %v2845
      %v2878 = vsub.f32 %v2749, %v2846
      %v2879 = vsub.f32 %v2750, %v2847
      %v2880 = vsub.f32 %v2751, %v2848
      %v2881 = vsub.f32 %v2752, %v2849
      %v2882 = vsub.f32 %v2753, %v2850
      %v2883 = vsub.f32 %v2754, %v2851
      %v2884 = vsub.f32 %v2755, %v2852
      %v2885 = vmul.f32 %v2853, %v2853
      %v2886 = vmul.f32 %v2854, %v2854
      %v2887 = vmul.f32 %v2855, %v2855
      %v2888 = vmul.f32 %v2856, %v2856
      %v2889 = vmul.f32 %v2857, %v2857
      %v2890 = vmul.f32 %v2858, %v2858
      %v2891 = vmul.f32 %v2859, %v2859
      %v2892 = vmul.f32 %v2860, %v2860
      %v2893 = vmul.f32 %v2861, %v2861
      %v2894 = vmul.f32 %v2862, %v2862
      %v2895 = vmul.f32 %v2863, %v2863
      %v2896 = vmul.f32 %v2864, %v2864
      %v2897 = vmul.f32 %v2865, %v2865
      %v2898 = vmul.f32 %v2866, %v2866
      %v2899 = vmul.f32 %v2867, %v2867
      %v2900 = vmul.f32 %v2868, %v2868
      %v2901 = vmul.f32 %v2869, %v2869
      %v2902 = vmul.f32 %v2870, %v2870
      %v2903 = vmul.f32 %v2871, %v2871
      %v2904 = vmul.f32 %v2872, %v2872
      %v2905 = vmul.f32 %v2873, %v2873
      %v2906 = vmul.f32 %v2874, %v2874
      %v2907 = vmul.f32 %v2875, %v2875
      %v2908 = vmul.f32 %v2876, %v2876
      %v2909 = vmul.f32 %v2877, %v2877
      %v2910 = vmul.f32 %v2878, %v2878
      %v2911 = vmul.f32 %v2879, %v2879
      %v2912 = vmul.f32 %v2880, %v2880
      %v2913 = vmul.f32 %v2881, %v2881
      %v2914 = vmul.f32 %v2882, %v2882
      %v2915 = vmul.f32 %v2883, %v2883
      %v2916 = vmul.f32 %v2884, %v2884
      %2917 = vadd.xlane.f32.xlu0 %v2885
      %v2918 = vpop.xlane.xlu0 %2917
      %2919 = vadd.xlane.f32.xlu0 %v2886
      %v2920 = vpop.xlane.xlu0 %2919
      %2921 = vadd.xlane.f32.xlu0 %v2887
      %v2922 = vpop.xlane.xlu0 %2921
      %2923 = vadd.xlane.f32.xlu0 %v2888
      %v2924 = vpop.xlane.xlu0 %2923
      %2925 = vadd.xlane.f32.xlu0 %v2889
      %v2926 = vpop.xlane.xlu0 %2925
      %2927 = vadd.xlane.f32.xlu0 %v2890
      %v2928 = vpop.xlane.xlu0 %2927
      %2929 = vadd.xlane.f32.xlu0 %v2891
      %v2930 = vpop.xlane.xlu0 %2929
      %2931 = vadd.xlane.f32.xlu0 %v2892
      %v2932 = vpop.xlane.xlu0 %2931
      %2933 = vadd.xlane.f32.xlu0 %v2893
      %v2934 = vpop.xlane.xlu0 %2933
      %2935 = vadd.xlane.f32.xlu0 %v2894
      %v2936 = vpop.xlane.xlu0 %2935
      %2937 = vadd.xlane.f32.xlu0 %v2895
      %v2938 = vpop.xlane.xlu0 %2937
      %2939 = vadd.xlane.f32.xlu0 %v2896
      %v2940 = vpop.xlane.xlu0 %2939
      %2941 = vadd.xlane.f32.xlu0 %v2897
      %v2942 = vpop.xlane.xlu0 %2941
      %2943 = vadd.xlane.f32.xlu0 %v2898
      %v2944 = vpop.xlane.xlu0 %2943
      %2945 = vadd.xlane.f32.xlu0 %v2899
      %v2946 = vpop.xlane.xlu0 %2945
      %2947 = vadd.xlane.f32.xlu0 %v2900
      %v2948 = vpop.xlane.xlu0 %2947
      %2949 = vadd.xlane.f32.xlu0 %v2901
      %v2950 = vpop.xlane.xlu0 %2949
      %2951 = vadd.xlane.f32.xlu0 %v2902
      %v2952 = vpop.xlane.xlu0 %2951
      %2953 = vadd.xlane.f32.xlu0 %v2903
      %v2954 = vpop.xlane.xlu0 %2953
      %2955 = vadd.xlane.f32.xlu0 %v2904
      %v2956 = vpop.xlane.xlu0 %2955
      %2957 = vadd.xlane.f32.xlu0 %v2905
      %v2958 = vpop.xlane.xlu0 %2957
      %2959 = vadd.xlane.f32.xlu0 %v2906
      %v2960 = vpop.xlane.xlu0 %2959
      %2961 = vadd.xlane.f32.xlu0 %v2907
      %v2962 = vpop.xlane.xlu0 %2961
      %2963 = vadd.xlane.f32.xlu0 %v2908
      %v2964 = vpop.xlane.xlu0 %2963
      %2965 = vadd.xlane.f32.xlu0 %v2909
      %v2966 = vpop.xlane.xlu0 %2965
      %2967 = vadd.xlane.f32.xlu0 %v2910
      %v2968 = vpop.xlane.xlu0 %2967
      %2969 = vadd.xlane.f32.xlu0 %v2911
      %v2970 = vpop.xlane.xlu0 %2969
      %2971 = vadd.xlane.f32.xlu0 %v2912
      %v2972 = vpop.xlane.xlu0 %2971
      %2973 = vadd.xlane.f32.xlu0 %v2913
      %v2974 = vpop.xlane.xlu0 %2973
      %2975 = vadd.xlane.f32.xlu0 %v2914
      %v2976 = vpop.xlane.xlu0 %2975
      %2977 = vadd.xlane.f32.xlu0 %v2915
      %v2978 = vpop.xlane.xlu0 %2977
      %2979 = vadd.xlane.f32.xlu0 %v2916
      %v2980 = vpop.xlane.xlu0 %2979
      %v2981 = vmul.f32 %v2918, %v2820
      %v2982 = vmul.f32 %v2920, %v2820
      %v2983 = vmul.f32 %v2922, %v2820
      %v2984 = vmul.f32 %v2924, %v2820
      %v2985 = vmul.f32 %v2926, %v2820
      %v2986 = vmul.f32 %v2928, %v2820
      %v2987 = vmul.f32 %v2930, %v2820
      %v2988 = vmul.f32 %v2932, %v2820
      %v2989 = vmul.f32 %v2934, %v2820
      %v2990 = vmul.f32 %v2936, %v2820
      %v2991 = vmul.f32 %v2938, %v2820
      %v2992 = vmul.f32 %v2940, %v2820
      %v2993 = vmul.f32 %v2942, %v2820
      %v2994 = vmul.f32 %v2944, %v2820
      %v2995 = vmul.f32 %v2946, %v2820
      %v2996 = vmul.f32 %v2948, %v2820
      %v2997 = vmul.f32 %v2950, %v2820
      %v2998 = vmul.f32 %v2952, %v2820
      %v2999 = vmul.f32 %v2954, %v2820
      %v3000 = vmul.f32 %v2956, %v2820
      %v3001 = vmul.f32 %v2958, %v2820
      %v3002 = vmul.f32 %v2960, %v2820
      %v3003 = vmul.f32 %v2962, %v2820
      %v3004 = vmul.f32 %v2964, %v2820
      %v3005 = vmul.f32 %v2966, %v2820
      %v3006 = vmul.f32 %v2968, %v2820
      %v3007 = vmul.f32 %v2970, %v2820
      %v3008 = vmul.f32 %v2972, %v2820
      %v3009 = vmul.f32 %v2974, %v2820
      %v3010 = vmul.f32 %v2976, %v2820
      %v3011 = vmul.f32 %v2978, %v2820
      %v3012 = vmul.f32 %v2980, %v2820
      %v3013 = vadd.f32 %v2981, 1e-05
      %v3014 = vadd.f32 %v2982, 1e-05
      %v3015 = vadd.f32 %v2983, 1e-05
      %v3016 = vadd.f32 %v2984, 1e-05
      %v3017 = vadd.f32 %v2985, 1e-05
      %v3018 = vadd.f32 %v2986, 1e-05
      %v3019 = vadd.f32 %v2987, 1e-05
      %v3020 = vadd.f32 %v2988, 1e-05
      %v3021 = vadd.f32 %v2989, 1e-05
      %v3022 = vadd.f32 %v2990, 1e-05
      %v3023 = vadd.f32 %v2991, 1e-05
      %v3024 = vadd.f32 %v2992, 1e-05
      %v3025 = vadd.f32 %v2993, 1e-05
      %v3026 = vadd.f32 %v2994, 1e-05
      %v3027 = vadd.f32 %v2995, 1e-05
      %v3028 = vadd.f32 %v2996, 1e-05
      %v3029 = vadd.f32 %v2997, 1e-05
      %v3030 = vadd.f32 %v2998, 1e-05
      %v3031 = vadd.f32 %v2999, 1e-05
      %v3032 = vadd.f32 %v3000, 1e-05
      %v3033 = vadd.f32 %v3001, 1e-05
      %v3034 = vadd.f32 %v3002, 1e-05
      %v3035 = vadd.f32 %v3003, 1e-05
      %v3036 = vadd.f32 %v3004, 1e-05
      %v3037 = vadd.f32 %v3005, 1e-05
      %v3038 = vadd.f32 %v3006, 1e-05
      %v3039 = vadd.f32 %v3007, 1e-05
      %v3040 = vadd.f32 %v3008, 1e-05
      %v3041 = vadd.f32 %v3009, 1e-05
      %v3042 = vadd.f32 %v3010, 1e-05
      %v3043 = vadd.f32 %v3011, 1e-05
      %v3044 = vadd.f32 %v3012, 1e-05
      %v3045 = vrsqrt.pop %v3013
      %v3046 = vrsqrt.pop %v3014
      %v3047 = vrsqrt.pop %v3015
      %v3048 = vrsqrt.pop %v3016
      %v3049 = vrsqrt.pop %v3017
      %v3050 = vrsqrt.pop %v3018
      %v3051 = vrsqrt.pop %v3019
      %v3052 = vrsqrt.pop %v3020
      %v3053 = vrsqrt.pop %v3021
      %v3054 = vrsqrt.pop %v3022
      %v3055 = vrsqrt.pop %v3023
      %v3056 = vrsqrt.pop %v3024
      %v3057 = vrsqrt.pop %v3025
      %v3058 = vrsqrt.pop %v3026
      %v3059 = vrsqrt.pop %v3027
      %v3060 = vrsqrt.pop %v3028
      %v3061 = vrsqrt.pop %v3029
      %v3062 = vrsqrt.pop %v3030
      %v3063 = vrsqrt.pop %v3031
      %v3064 = vrsqrt.pop %v3032
      %v3065 = vrsqrt.pop %v3033
      %v3066 = vrsqrt.pop %v3034
      %v3067 = vrsqrt.pop %v3035
      %v3068 = vrsqrt.pop %v3036
      %v3069 = vrsqrt.pop %v3037
      %v3070 = vrsqrt.pop %v3038
      %v3071 = vrsqrt.pop %v3039
      %v3072 = vrsqrt.pop %v3040
      %v3073 = vrsqrt.pop %v3041
      %v3074 = vrsqrt.pop %v3042
      %v3075 = vrsqrt.pop %v3043
      %v3076 = vrsqrt.pop %v3044
      %v3077 = vmul.f32 %v2853, %v3045
      %v3078 = vmul.f32 %v2854, %v3046
      %v3079 = vmul.f32 %v2855, %v3047
      %v3080 = vmul.f32 %v2856, %v3048
      %v3081 = vmul.f32 %v2857, %v3049
      %v3082 = vmul.f32 %v2858, %v3050
      %v3083 = vmul.f32 %v2859, %v3051
      %v3084 = vmul.f32 %v2860, %v3052
      %v3085 = vmul.f32 %v2861, %v3053
      %v3086 = vmul.f32 %v2862, %v3054
      %v3087 = vmul.f32 %v2863, %v3055
      %v3088 = vmul.f32 %v2864, %v3056
      %v3089 = vmul.f32 %v2865, %v3057
      %v3090 = vmul.f32 %v2866, %v3058
      %v3091 = vmul.f32 %v2867, %v3059
      %v3092 = vmul.f32 %v2868, %v3060
      %v3093 = vmul.f32 %v2869, %v3061
      %v3094 = vmul.f32 %v2870, %v3062
      %v3095 = vmul.f32 %v2871, %v3063
      %v3096 = vmul.f32 %v2872, %v3064
      %v3097 = vmul.f32 %v2873, %v3065
      %v3098 = vmul.f32 %v2874, %v3066
      %v3099 = vmul.f32 %v2875, %v3067
      %v3100 = vmul.f32 %v2876, %v3068
      %v3101 = vmul.f32 %v2877, %v3069
      %v3102 = vmul.f32 %v2878, %v3070
      %v3103 = vmul.f32 %v2879, %v3071
      %v3104 = vmul.f32 %v2880, %v3072
      %v3105 = vmul.f32 %v2881, %v3073
      %v3106 = vmul.f32 %v2882, %v3074
      %v3107 = vmul.f32 %v2883, %v3075
      %v3108 = vmul.f32 %v2884, %v3076
      %v3109 = vld [vmem:[%s11] sm:$0x1]
      %v3111 = vlaneseq
      %v3112 = vshrl.u32 %v3111, 7
      %v3113 = vsub.s32 0, %v3112
      %v3114 = vrot.slane %v3109, %v3113
      %v3116 = vmul.f32 %v3077, %v3114
      %v3117 = vmul.f32 %v3078, %v3114
      %v3118 = vmul.f32 %v3079, %v3114
      %v3119 = vmul.f32 %v3080, %v3114
      %v3120 = vmul.f32 %v3081, %v3114
      %v3121 = vmul.f32 %v3082, %v3114
      %v3122 = vmul.f32 %v3083, %v3114
      %v3123 = vmul.f32 %v3084, %v3114
      %v3124 = vmul.f32 %v3085, %v3114
      %v3125 = vmul.f32 %v3086, %v3114
      %v3126 = vmul.f32 %v3087, %v3114
      %v3127 = vmul.f32 %v3088, %v3114
      %v3128 = vmul.f32 %v3089, %v3114
      %v3129 = vmul.f32 %v3090, %v3114
      %v3130 = vmul.f32 %v3091, %v3114
      %v3131 = vmul.f32 %v3092, %v3114
      %v3132 = vmul.f32 %v3093, %v3114
      %v3133 = vmul.f32 %v3094, %v3114
      %v3134 = vmul.f32 %v3095, %v3114
      %v3135 = vmul.f32 %v3096, %v3114
      %v3136 = vmul.f32 %v3097, %v3114
      %v3137 = vmul.f32 %v3098, %v3114
      %v3138 = vmul.f32 %v3099, %v3114
      %v3139 = vmul.f32 %v3100, %v3114
      %v3140 = vmul.f32 %v3101, %v3114
      %v3141 = vmul.f32 %v3102, %v3114
      %v3142 = vmul.f32 %v3103, %v3114
      %v3143 = vmul.f32 %v3104, %v3114
      %v3144 = vmul.f32 %v3105, %v3114
      %v3145 = vmul.f32 %v3106, %v3114
      %v3146 = vmul.f32 %v3107, %v3114
      %v3147 = vmul.f32 %v3108, %v3114
      %v3148 = vld [vmem:[%s12] sm:$0x1]
      %v3150 = vlaneseq
      %v3151 = vshrl.u32 %v3150, 7
      %v3152 = vsub.s32 0, %v3151
      %v3153 = vrot.slane %v3148, %v3152
      %v3155 = vadd.f32 %v3116, %v3153
      %v3156 = vadd.f32 %v3117, %v3153
      %v3157 = vadd.f32 %v3118, %v3153
      %v3158 = vadd.f32 %v3119, %v3153
      %v3159 = vadd.f32 %v3120, %v3153
      %v3160 = vadd.f32 %v3121, %v3153
      %v3161 = vadd.f32 %v3122, %v3153
      %v3162 = vadd.f32 %v3123, %v3153
      %v3163 = vadd.f32 %v3124, %v3153
      %v3164 = vadd.f32 %v3125, %v3153
      %v3165 = vadd.f32 %v3126, %v3153
      %v3166 = vadd.f32 %v3127, %v3153
      %v3167 = vadd.f32 %v3128, %v3153
      %v3168 = vadd.f32 %v3129, %v3153
      %v3169 = vadd.f32 %v3130, %v3153
      %v3170 = vadd.f32 %v3131, %v3153
      %v3171 = vadd.f32 %v3132, %v3153
      %v3172 = vadd.f32 %v3133, %v3153
      %v3173 = vadd.f32 %v3134, %v3153
      %v3174 = vadd.f32 %v3135, %v3153
      %v3175 = vadd.f32 %v3136, %v3153
      %v3176 = vadd.f32 %v3137, %v3153
      %v3177 = vadd.f32 %v3138, %v3153
      %v3178 = vadd.f32 %v3139, %v3153
      %v3179 = vadd.f32 %v3140, %v3153
      %v3180 = vadd.f32 %v3141, %v3153
      %v3181 = vadd.f32 %v3142, %v3153
      %v3182 = vadd.f32 %v3143, %v3153
      %v3183 = vadd.f32 %v3144, %v3153
      %v3184 = vadd.f32 %v3145, %v3153
      %v3185 = vadd.f32 %v3146, %v3153
      %v3186 = vadd.f32 %v3147, %v3153
      %v3187 = vpack.c.bf16 %v3156, %v3155
      %v3188 = vpack.c.bf16 %v3158, %v3157
      %v3189 = vpack.c.bf16 %v3160, %v3159
      %v3190 = vpack.c.bf16 %v3162, %v3161
      %v3191 = vpack.c.bf16 %v3164, %v3163
      %v3192 = vpack.c.bf16 %v3166, %v3165
      %v3193 = vpack.c.bf16 %v3168, %v3167
      %v3194 = vpack.c.bf16 %v3170, %v3169
      %v3195 = vpack.c.bf16 %v3172, %v3171
      %v3196 = vpack.c.bf16 %v3174, %v3173
      %v3197 = vpack.c.bf16 %v3176, %v3175
      %v3198 = vpack.c.bf16 %v3178, %v3177
      %v3199 = vpack.c.bf16 %v3180, %v3179
      %v3200 = vpack.c.bf16 %v3182, %v3181
      %v3201 = vpack.c.bf16 %v3184, %v3183
      %v3202 = vpack.c.bf16 %v3186, %v3185
      %v3203 = vld [vmem:[%s13] sm:$0xf]
      %v3204 = vld [vmem:[%s14] sm:$0xff]
      %3206 = vset.pattern.permute.xlu0 0
      %3207 = vperm.xlu0 %3206, %v3204
      %v3208 = vpop.permute.xlu0 %3207
      %3210 = vmatprep.subr.bf16.mxu0 0
      %3211 = vmatpush1.bf16.xpose.msra.mxu0 %v3187
      %3212 = vmatprep.subr.bf16.mxu0 0
      %3213 = vmatpush1.bf16.xpose.msra.mxu0 %v3188
      %3214 = vmatprep.subr.bf16.mxu0 0
      %3215 = vmatpush1.bf16.xpose.msra.mxu0 %v3189
      %3216 = vmatprep.subr.bf16.mxu0 0
      %3217 = vmatpush1.bf16.xpose.msra.mxu0 %v3190
      %3218 = vmatprep.subr.bf16.mxu0 0
      %3219 = vmatpush1.bf16.xpose.msra.mxu0 %v3191
      %3220 = vmatprep.subr.bf16.mxu0 0
      %3221 = vmatpush1.bf16.xpose.msra.mxu0 %v3192
      %3222 = vmatprep.subr.bf16.mxu0 0
      %3223 = vmatpush1.bf16.xpose.msra.mxu0 %v3193
      %3224 = vmatprep.subr.bf16.mxu0 0
      %3225 = vmatpush1.bf16.xpose.msra.mxu0 %v3194
      %3226 = vmatprep.subr.bf16.mxu0 0
      %3227 = vmatpush1.bf16.xpose.msra.mxu0 %v3195
      %3228 = vmatprep.subr.bf16.mxu0 0
      %3229 = vmatpush1.bf16.xpose.msra.mxu0 %v3196
      %3230 = vmatprep.subr.bf16.mxu0 0
      %3231 = vmatpush1.bf16.xpose.msra.mxu0 %v3197
      %3232 = vmatprep.subr.bf16.mxu0 0
      %3233 = vmatpush1.bf16.xpose.msra.mxu0 %v3198
      %3234 = vmatprep.subr.bf16.mxu0 0
      %3235 = vmatpush1.bf16.xpose.msra.mxu0 %v3199
      %3236 = vmatprep.subr.bf16.mxu0 0
      %3237 = vmatpush1.bf16.xpose.msra.mxu0 %v3200
      %3238 = vmatprep.subr.bf16.mxu0 0
      %3239 = vmatpush1.bf16.xpose.msra.mxu0 %v3201
      %3240 = vmatprep.subr.bf16.mxu0 0
      %3241 = vmatpush1.bf16.xpose.msra.mxu0 %v3202
      %3242 = vmatprep.mubr.bf16.mxu0 0
      %3243 = vmatmul.mubr.bf16.gmra.mrb[0].mxu0 %v3203
      %v3244 = vpop.f32.mrb[0].mxu0
      %v3245 = vadd.f32 %v3208, %v3244
      %v3246 = vpop.f32.mrb[0].mxu0
      %v3247 = vadd.f32 %v3208, %v3246
      %v3248 = vpop.f32.mrb[0].mxu0
      %v3249 = vpop.f32.mrb[0].mxu0
      %3250 = vdwg.mxu0
      %3251 = vst [vmem:[%s574] sm:$0xff] %v3245
      %3252 = vst [vmem:[%s574 + $0x8] sm:$0xff] %v3247
      %p3253 = scmp.lt.s32.totalorder %s26, 1
      %s3254 = scalar_select %p3253, %s26, 1
      %s3255 = smul.addr %s3254, 2
      %s3256 = smul.addr %s3255, 8
      %s3257 = scalar_lea.vmem %s15, %s3256
      // Predicated region
      $region81: #{sage_graph_conv_net.1} parent=79 // pred_check
        %p3258 = pneg %p384
      $region82: #{sage_graph_conv_net.1} parent=79 // pred_check_branch
        %3260 = sbr.rel (%p3258) target = $region84
      $region83: #{sage_graph_conv_net.1} parent=79 // pred_region
        _
      $region84: #{sage_graph_conv_net.1} parent=79 // pred_fallthru
        _
    $region80: #{sage_graph_conv_net.1} parent=5 // pred_fallthru
      _
    %p3261 = scmp.le.s32.totalorder 2, %s21
    // Predicated region
    $region85: #{sage_graph_conv_net.1} parent=5 // pred_check
      %p3262 = pneg %p3261
    $region86: #{sage_graph_conv_net.1} parent=5 // pred_check_branch
      %3264 = sbr.rel (%p3262) target = $region88
    $region87: #{sage_graph_conv_net.1} parent=5 // pred_region
      %s3265 = ssub.s32 %s21, 2
      // Predicated region
      $region89: #{sage_graph_conv_net.1} parent=87 // pred_check
        %p3266 = pneg %p390
      $region90: #{sage_graph_conv_net.1} parent=87 // pred_check_branch
        %3268 = sbr.rel (%p3266) target = $region92
      $region91: #{sage_graph_conv_net.1} parent=87 // pred_region
        %p3269 = scmp.lt.s32.totalorder %s27, 1
        %s3270 = scalar_select %p3269, %s27, 1
        %s3271 = smul.addr %s3270, 2
        %s3272 = smul.addr %s3271, 8
        %s3273 = scalar_lea.vmem %s15, %s3272
      $region92: #{sage_graph_conv_net.1} parent=87 // pred_fallthru
        _
    $region88: #{sage_graph_conv_net.1} parent=5 // pred_fallthru
      _
  $region6: #{sage_graph_conv_net.1} parent=0 // loop_footer
    %s25 = sadd.s32 1, %s21
  $region7: #{sage_graph_conv_net.1} parent=0 // loop_footer_branch
    %20 = sbr.rel target = $region3
  $region8: #{sage_graph_conv_net.1} parent=0 // loop_exit
    _

</llo_original>
